<compile_context>
chip_gen: v5e
topology: v5e:2x2
jax: 0.10.0
libtpu: 0.0.40
codegen_flags: <defaults>
</compile_context>

<pallas_src>
import jax
import jax.numpy as jnp
from jax import lax
from jax.experimental import pallas as pl
from jax.experimental.pallas import tpu as pltpu

_BN_EPS = 1e-5
_VMEM_LIMIT = 48 * 1024 * 1024          # fits under v7x 64 MiB / v6e+v5e 128 MiB physical


def _round_up(v, m):
    return (v + m - 1) // m * m


def _pick_th(H, W, Cin, Cp):
    """H rows per pass-1 tile, sized from a ~9 MiB per-buffer VMEM budget."""
    budget = 9 * 1024 * 1024
    # bf16 y-out + bf16 skip (4 phases each) + bf16 halo'd x rows, per H row:
    per_row = 16 * W * Cp + 2 * (W + 2) * max(Cin, 128)
    th = max(1, min(H, budget // per_row, 8192 // max(W, 1)))
    return int(th)


def _make_pass1_kernel(H, W, Cin, Cp, TH):
    def kernel(x_ref, w_ref, b_ref, skip_ref, y_ref, sum_ref, m2_ref):
        # x_ref   : (TH+2, W+2, Cin)  bf16   halo'd 1-padded input rows
        # w_ref   : (16, Cin, Cp)     bf16   taps ordered (ph, pw, dh, dw)
        # b_ref   : (1, Cp)           f32
        # skip_ref: (TH, 2, W, 2*Cp)  bf16   layout (h, ph, w, pw*Cp + c)
        # y_ref   : (TH, 2, W, 2*Cp)  bf16   pre-BN activations, same layout
        # sum_ref : (4, Cp)  f32      per-phase masked channel sums
        # m2_ref  : (4, Cp)  f32      per-phase centered sums of squares
        t = pl.program_id(1)
        valid_rows = jnp.minimum(TH, H - t * TH)          # rows of this tile inside H
        cnt = (valid_rows * W).astype(jnp.float32)        # valid pixels per phase
        row_mask = lax.broadcasted_iota(jnp.int32, (TH, 1, 1), 0) < valid_rows

        bias = b_ref[...].reshape(1, 1, Cp)
        sums, m2s = [], []
        for ph in range(2):
            for pw in range(2):
                acc = None
                for dh in range(2):
                    for dw in range(2):
                        k = ((ph * 2 + pw) * 2 + dh) * 2 + dw
                        lhs = x_ref[ph + dh:ph + dh + TH,
                                    pw + dw:pw + dw + W, :].reshape(TH * W, Cin)
                        d = jnp.dot(lhs, w_ref[k],
                                    preferred_element_type=jnp.float32)
                        acc = d if acc is None else acc + d
                skip = skip_ref[:, ph, :, pw * Cp:(pw + 1) * Cp].astype(jnp.float32)
                y = jnp.maximum(acc.reshape(TH, W, Cp) + bias + skip, 0.0)
                y_ref[:, ph, :, pw * Cp:(pw + 1) * Cp] = y.astype(jnp.bfloat16)
                # Centered per-(tile, phase) BatchNorm partials (padded rows masked).
                ym = jnp.where(row_mask, y, 0.0)
                s = jnp.sum(ym, axis=(0, 1), keepdims=True)          # (1, 1, Cp)
                mu = s / cnt
                dev = jnp.where(row_mask, y - mu, 0.0)
                m2 = jnp.sum(dev * dev, axis=(0, 1), keepdims=True)
                sums.append(s.reshape(1, Cp))
                m2s.append(m2.reshape(1, Cp))
        sum_ref[...] = jnp.concatenate(sums, axis=0)
        m2_ref[...] = jnp.concatenate(m2s, axis=0)
    return kernel


def _pass2_kernel(y_ref, scale_ref, shift_ref, o_ref):
    # Folded BatchNorm: a single FMA per element over lane-dense tiles (bf16 in, f32 out).
    o_ref[...] = y_ref[...].astype(jnp.float32) * scale_ref[...] + shift_ref[...]


@jax.jit
def decoder_block_forward(x, skip_in, weight_t, bias, gamma, beta):
    """x: (N, Cin, H, W); skip_in: (N, Cout, 2H, 2W)  -- NCHW, like PyTorch."""
    N, Cin, H, W = x.shape
    Cout = weight_t.shape[1]
    Cp = _round_up(Cout, 128)          # lane-dense channel dimension
    # TODO(synk): for Cout < 128 one could pack several output positions per
    # 128-lane row instead of zero-padding Cout -> Cp (small-channel stages).

    TH = _pick_th(H, W, Cin, Cp)
    HT = -(-H // TH)                   # ceil(H / TH)
    HP = HT * TH

    # ---- glue: exact phase decomposition of ConvTranspose2d(k=4, s=2, p=1) ----
    # Output (2h'+ph, 2w'+pw) sums the 2x2 neighborhood x_pad[h'+ph+dh, w'+pw+dw]
    # (1-padded coords) against weight[:, :, 3-ph-2dh, 3-pw-2dw].
    x_pad = jnp.pad(jnp.transpose(x, (0, 2, 3, 1)).astype(jnp.bfloat16),
                    ((0, 0), (1, 1 + HP - H), (1, 1), (0, 0)))        # (N, HP+2, W+2, Cin)
    row_idx = jnp.arange(HT)[:, None] * TH + jnp.arange(TH + 2)[None, :]
    x_blk = x_pad[:, row_idx]                                          # (N, HT, TH+2, W+2, Cin)

    w_list = [weight_t[:, :, 3 - ph - 2 * dh, 3 - pw - 2 * dw]
              for ph in range(2) for pw in range(2)
              for dh in range(2) for dw in range(2)]
    w_all = jnp.stack(w_list, axis=0)                                  # (16, Cin, Cout)
    w_all = jnp.pad(w_all, ((0, 0), (0, 0), (0, Cp - Cout))).astype(jnp.bfloat16)

    skip_nhwc = jnp.transpose(skip_in, (0, 2, 3, 1))                   # (N, 2H, 2W, Cout)
    skip_r = jnp.pad(skip_nhwc,
                     ((0, 0), (0, 2 * (HP - H)), (0, 0), (0, Cp - Cout)))
    skip_r = skip_r.astype(jnp.bfloat16).reshape(N, HP, 2, W, 2 * Cp)  # (h,ph,w,pw*Cp+c)

    bias_p = jnp.pad(bias, (0, Cp - Cout)).reshape(1, Cp).astype(jnp.float32)

    # ---- pass 1: upconv (4 phases) + bias + skip + ReLU + centered BN partials ----
    y, sums, m2s = pl.pallas_call(
        _make_pass1_kernel(H, W, Cin, Cp, TH),
        out_shape=(
            jax.ShapeDtypeStruct((N, HP, 2, W, 2 * Cp), jnp.bfloat16),   # pre-BN y
            jax.ShapeDtypeStruct((N, HT, 4, Cp), jnp.float32),           # partial sums
            jax.ShapeDtypeStruct((N, HT, 4, Cp), jnp.float32),           # centered sq sums
        ),
        grid=(N, HT),
        in_specs=[
            pl.BlockSpec((None, None, TH + 2, W + 2, Cin), lambda n, t: (n, t, 0, 0, 0)),
            pl.BlockSpec((16, Cin, Cp), lambda n, t: (0, 0, 0)),         # grid-invariant
            pl.BlockSpec((1, Cp), lambda n, t: (0, 0)),
            pl.BlockSpec((None, TH, 2, W, 2 * Cp), lambda n, t: (n, t, 0, 0, 0)),
        ],
        out_specs=(
            pl.BlockSpec((None, TH, 2, W, 2 * Cp), lambda n, t: (n, t, 0, 0, 0)),
            pl.BlockSpec((None, None, 4, Cp), lambda n, t: (n, t, 0, 0)),
            pl.BlockSpec((None, None, 4, Cp), lambda n, t: (n, t, 0, 0)),
        ),
        compiler_params=pltpu.CompilerParams(
            dimension_semantics=("parallel", "parallel"),
            vmem_limit_bytes=_VMEM_LIMIT),
    )(x_blk, w_all, bias_p, skip_r)

    # ---- tiny JAX glue: combine centered partials (Chan), fold BN to scale/shift ----
    # TODO(synk): BatchNorm running_mean/running_var buffer updates (PyTorch training
    # side effect) are not materialized; the forward output does not depend on them.
    cnt_t = (W * jnp.minimum(TH, H - jnp.arange(HT) * TH)).astype(jnp.float32)
    cnt_t = cnt_t.reshape(1, HT, 1, 1)
    total_cnt = jnp.float32(N * 4 * H * W)
    grand_sum = jnp.sum(sums, axis=(0, 1, 2))
    mean = grand_sum / total_cnt
    mu_grp = sums / cnt_t
    m2_tot = jnp.sum(m2s, axis=(0, 1, 2)) \
        + jnp.sum(cnt_t * (mu_grp - mean) ** 2, axis=(0, 1, 2))
    var = m2_tot / total_cnt

    gamma_p = jnp.pad(gamma, (0, Cp - Cout)).astype(jnp.float32)
    beta_p = jnp.pad(beta, (0, Cp - Cout)).astype(jnp.float32)
    scale = gamma_p * lax.rsqrt(var + _BN_EPS)
    shift = beta_p - mean * scale
    scale2 = jnp.concatenate([scale, scale]).reshape(1, 2 * Cp)     # lanes are (pw, c)
    shift2 = jnp.concatenate([shift, shift]).reshape(1, 2 * Cp)

    # ---- pass 2: apply folded BatchNorm over the de-interleaved bf16 y ----
    out5 = pl.pallas_call(
        _pass2_kernel,
        out_shape=jax.ShapeDtypeStruct((N, HP, 2, W, 2 * Cp), jnp.float32),
        grid=(N, HT),
        in_specs=[
            pl.BlockSpec((None, TH, 2, W, 2 * Cp), lambda n, t: (n, t, 0, 0, 0)),
            pl.BlockSpec((1, 2 * Cp), lambda n, t: (0, 0)),
            pl.BlockSpec((1, 2 * Cp), lambda n, t: (0, 0)),
        ],
        out_specs=pl.BlockSpec((None, TH, 2, W, 2 * Cp), lambda n, t: (n, t, 0, 0, 0)),
        compiler_params=pltpu.CompilerParams(
            dimension_semantics=("parallel", "parallel"),
            vmem_limit_bytes=_VMEM_LIMIT),
    )(y, scale2, shift2)

    # ---- glue: already de-interleaved NHWC -> NCHW, drop padding ----
    out_nhwc = out5.reshape(N, 2 * HP, 2 * W, Cp)[:, :2 * H, :, :Cout]
    return jnp.transpose(out_nhwc, (0, 3, 1, 2))


def _reference(x, skip_in, weight_t, bias, gamma, beta):
    """Independent pure-JAX reference (XLA dilated conv).  Conv operands are cast to
    bf16 to match the kernel's MXU numerics; accumulation and all other math is f32."""
    N, Cin, H, W = x.shape
    Cout = weight_t.shape[1]
    x_nhwc = jnp.transpose(x, (0, 2, 3, 1)).astype(jnp.bfloat16)
    w_conv = jnp.transpose(weight_t[:, :, ::-1, ::-1], (2, 3, 0, 1)).astype(jnp.bfloat16)
    y = lax.conv_general_dilated(
        x_nhwc, w_conv, window_strides=(1, 1), padding=((2, 2), (2, 2)),
        lhs_dilation=(2, 2), dimension_numbers=("NHWC", "HWIO", "NHWC"),
        preferred_element_type=jnp.float32)
    y = y + bias.reshape(1, 1, 1, Cout)
    y = y + jnp.transpose(skip_in, (0, 2, 3, 1))
    y = jnp.maximum(y, 0.0)
    mean = jnp.mean(y, axis=(0, 1, 2), keepdims=True)
    var = jnp.mean((y - mean) ** 2, axis=(0, 1, 2), keepdims=True)
    out = gamma.reshape(1, 1, 1, Cout) * (y - mean) * lax.rsqrt(var + _BN_EPS) \
        + beta.reshape(1, 1, 1, Cout)
    return jnp.transpose(out, (0, 3, 1, 2))


if __name__ == "__main__":
    key = jax.random.PRNGKey(0)
    k1, k2, k3, k4, k5, k6 = jax.random.split(key, 6)

    N, Cin, Cout, H, W = 2, 8, 4, 8, 8            # output spatial = 16x16
    x = jax.random.normal(k1, (N, Cin, H, W), jnp.float32)
    skip = jax.random.normal(k2, (N, Cout, 2 * H, 2 * W), jnp.float32)

    # ConvTranspose2d params: weight (in, out, kH, kW), bias (out,)
    weight_t = 0.1 * jax.random.normal(k3, (Cin, Cout, 4, 4), jnp.float32)
    bias = 0.1 * jax.random.normal(k4, (Cout,), jnp.float32)
    # BatchNorm affine params
    gamma = 1.0 + 0.1 * jax.random.normal(k5, (Cout,), jnp.float32)
    beta = 0.1 * jax.random.normal(k6, (Cout,), jnp.float32)

    out = decoder_block_forward(x, skip, weight_t, bias, gamma, beta)
    out = jax.block_until_ready(out)
    assert out.shape == (N, Cout, 2 * H, 2 * W)

    ref = _reference(x, skip, weight_t, bias, gamma, beta)
    assert jnp.allclose(out, ref, rtol=1e-2, atol=1e-2), (
        "mismatch vs reference: max abs diff = "
        f"{jnp.max(jnp.abs(out - ref))}")

    print("KERNEL_OK")
</pallas_src>

<mosaic_0001>
module attributes {stable_mosaic.version = 11 : i64} {
  func.func @kernel(%arg0: i32, %arg1: i32, %arg2: memref<1x1x10x10x8xbf16, #tpu.memory_space<vmem>>, %arg3: memref<16x8x128xbf16, #tpu.memory_space<vmem>>, %arg4: memref<1x128xf32, #tpu.memory_space<vmem>>, %arg5: memref<1x8x2x8x256xbf16, #tpu.memory_space<vmem>>, %arg6: memref<1x8x2x8x256xbf16, #tpu.memory_space<vmem>>, %arg7: memref<1x1x4x128xf32, #tpu.memory_space<vmem>>, %arg8: memref<1x1x4x128xf32, #tpu.memory_space<vmem>>) attributes {dimension_semantics = [#tpu.dimension_semantics<parallel>, #tpu.dimension_semantics<parallel>], iteration_bounds = array<i64: 2, 1>, scalar_prefetch = 0 : i64, scratch_operands = 0 : i64, tpu.core_type = #tpu.core_type<tc>, window_params = [{transform_indices = @transform_0, window_bounds = array<i64: 1, 1, 10, 10, 8>}, {pipeline_mode = #tpu.pipeline_mode<synchronous>, transform_indices = @transform_1, window_bounds = array<i64: 16, 8, 128>}, {pipeline_mode = #tpu.pipeline_mode<synchronous>, transform_indices = @transform_2, window_bounds = array<i64: 1, 128>}, {transform_indices = @transform_3, window_bounds = array<i64: 1, 8, 2, 8, 256>}, {transform_indices = @transform_4, window_bounds = array<i64: 1, 8, 2, 8, 256>}, {transform_indices = @transform_5, window_bounds = array<i64: 1, 1, 4, 128>}, {transform_indices = @transform_6, window_bounds = array<i64: 1, 1, 4, 128>}]} {
    %c8_i32 = arith.constant 8 : i32
    %0 = arith.muli %arg1, %c8_i32 : i32
    %c8_i32_0 = arith.constant 8 : i32
    %1 = arith.subi %c8_i32_0, %0 : i32
    %c8_i32_1 = arith.constant 8 : i32
    %2 = arith.minsi %c8_i32_1, %1 : i32
    %c8_i32_2 = arith.constant 8 : i32
    %3 = arith.muli %2, %c8_i32_2 : i32
    %4 = arith.sitofp %3 : i32 to f32
    %5 = tpu.iota {dimensions = array<i32: 0>} : vector<8x1x1xi32>
    %6 = vector.broadcast %2 : i32 to vector<8x1x1xi32>
    %7 = arith.cmpi slt, %5, %6 : vector<8x1x1xi32>
    %c0 = arith.constant 0 : index
    %c0_3 = arith.constant 0 : index
    %8 = vector.load %arg4[%c0, %c0_3] : memref<1x128xf32, #tpu.memory_space<vmem>>, vector<1x128xf32>
    %9 = vector.shape_cast %8 : vector<1x128xf32> to vector<1x1x128xf32>
    %c0_4 = arith.constant 0 : index
    %c0_5 = arith.constant 0 : index
    %c0_6 = arith.constant 0 : index
    %c0_7 = arith.constant 0 : index
    %c0_8 = arith.constant 0 : index
    %10 = vector.load %arg2[%c0_4, %c0_5, %c0_6, %c0_7, %c0_8] : memref<1x1x10x10x8xbf16, #tpu.memory_space<vmem>>, vector<1x1x8x8x8xbf16>
    %11 = vector.shape_cast %10 : vector<1x1x8x8x8xbf16> to vector<8x8x8xbf16>
    %12 = vector.shape_cast %11 : vector<8x8x8xbf16> to vector<64x8xbf16>
    %c0_9 = arith.constant 0 : index
    %c0_10 = arith.constant 0 : index
    %c0_11 = arith.constant 0 : index
    %13 = vector.load %arg3[%c0_9, %c0_10, %c0_11] : memref<16x8x128xbf16, #tpu.memory_space<vmem>>, vector<1x8x128xbf16>
    %14 = vector.shape_cast %13 : vector<1x8x128xbf16> to vector<8x128xbf16>
    %cst = arith.constant dense<0.000000e+00> : vector<64x128xf32>
    %15 = tpu.matmul %12, %14, %cst {dimension_numbers = #tpu.dot_dimension_numbers<[1], [0], [0], [1], [0, 0, 1, 1], [], []>} : vector<64x8xbf16>, vector<8x128xbf16>, vector<64x128xf32> -> vector<64x128xf32>
    %c0_12 = arith.constant 0 : index
    %c0_13 = arith.constant 0 : index
    %c0_14 = arith.constant 0 : index
    %c1 = arith.constant 1 : index
    %c0_15 = arith.constant 0 : index
    %16 = vector.load %arg2[%c0_12, %c0_13, %c0_14, %c1, %c0_15] : memref<1x1x10x10x8xbf16, #tpu.memory_space<vmem>>, vector<1x1x8x8x8xbf16>
    %17 = vector.shape_cast %16 : vector<1x1x8x8x8xbf16> to vector<8x8x8xbf16>
    %18 = vector.shape_cast %17 : vector<8x8x8xbf16> to vector<64x8xbf16>
    %c1_16 = arith.constant 1 : index
    %c0_17 = arith.constant 0 : index
    %c0_18 = arith.constant 0 : index
    %19 = vector.load %arg3[%c1_16, %c0_17, %c0_18] : memref<16x8x128xbf16, #tpu.memory_space<vmem>>, vector<1x8x128xbf16>
    %20 = vector.shape_cast %19 : vector<1x8x128xbf16> to vector<8x128xbf16>
    %cst_19 = arith.constant dense<0.000000e+00> : vector<64x128xf32>
    %21 = tpu.matmul %18, %20, %cst_19 {dimension_numbers = #tpu.dot_dimension_numbers<[1], [0], [0], [1], [0, 0, 1, 1], [], []>} : vector<64x8xbf16>, vector<8x128xbf16>, vector<64x128xf32> -> vector<64x128xf32>
    %22 = arith.addf %15, %21 : vector<64x128xf32>
    %c0_20 = arith.constant 0 : index
    %c0_21 = arith.constant 0 : index
    %c1_22 = arith.constant 1 : index
    %c0_23 = arith.constant 0 : index
    %c0_24 = arith.constant 0 : index
    %23 = vector.load %arg2[%c0_20, %c0_21, %c1_22, %c0_23, %c0_24] : memref<1x1x10x10x8xbf16, #tpu.memory_space<vmem>>, vector<1x1x8x8x8xbf16>
    %24 = vector.shape_cast %23 : vector<1x1x8x8x8xbf16> to vector<8x8x8xbf16>
    %25 = vector.shape_cast %24 : vector<8x8x8xbf16> to vector<64x8xbf16>
    %c2 = arith.constant 2 : index
    %c0_25 = arith.constant 0 : index
    %c0_26 = arith.constant 0 : index
    %26 = vector.load %arg3[%c2, %c0_25, %c0_26] : memref<16x8x128xbf16, #tpu.memory_space<vmem>>, vector<1x8x128xbf16>
    %27 = vector.shape_cast %26 : vector<1x8x128xbf16> to vector<8x128xbf16>
    %cst_27 = arith.constant dense<0.000000e+00> : vector<64x128xf32>
    %28 = tpu.matmul %25, %27, %cst_27 {dimension_numbers = #tpu.dot_dimension_numbers<[1], [0], [0], [1], [0, 0, 1, 1], [], []>} : vector<64x8xbf16>, vector<8x128xbf16>, vector<64x128xf32> -> vector<64x128xf32>
    %29 = arith.addf %22, %28 : vector<64x128xf32>
    %c0_28 = arith.constant 0 : index
    %c0_29 = arith.constant 0 : index
    %c1_30 = arith.constant 1 : index
    %c1_31 = arith.constant 1 : index
    %c0_32 = arith.constant 0 : index
    %30 = vector.load %arg2[%c0_28, %c0_29, %c1_30, %c1_31, %c0_32] : memref<1x1x10x10x8xbf16, #tpu.memory_space<vmem>>, vector<1x1x8x8x8xbf16>
    %31 = vector.shape_cast %30 : vector<1x1x8x8x8xbf16> to vector<8x8x8xbf16>
    %32 = vector.shape_cast %31 : vector<8x8x8xbf16> to vector<64x8xbf16>
    %c3 = arith.constant 3 : index
    %c0_33 = arith.constant 0 : index
    %c0_34 = arith.constant 0 : index
    %33 = vector.load %arg3[%c3, %c0_33, %c0_34] : memref<16x8x128xbf16, #tpu.memory_space<vmem>>, vector<1x8x128xbf16>
    %34 = vector.shape_cast %33 : vector<1x8x128xbf16> to vector<8x128xbf16>
    %cst_35 = arith.constant dense<0.000000e+00> : vector<64x128xf32>
    %35 = tpu.matmul %32, %34, %cst_35 {dimension_numbers = #tpu.dot_dimension_numbers<[1], [0], [0], [1], [0, 0, 1, 1], [], []>} : vector<64x8xbf16>, vector<8x128xbf16>, vector<64x128xf32> -> vector<64x128xf32>
    %36 = arith.addf %29, %35 : vector<64x128xf32>
    %c0_36 = arith.constant 0 : index
    %c0_37 = arith.constant 0 : index
    %c0_38 = arith.constant 0 : index
    %c0_39 = arith.constant 0 : index
    %c0_40 = arith.constant 0 : index
    %37 = vector.load %arg5[%c0_36, %c0_37, %c0_38, %c0_39, %c0_40] : memref<1x8x2x8x256xbf16, #tpu.memory_space<vmem>>, vector<1x8x1x8x128xbf16>
    %38 = vector.shape_cast %37 : vector<1x8x1x8x128xbf16> to vector<8x8x128xbf16>
    %39 = arith.extf %38 : vector<8x8x128xbf16> to vector<8x8x128xf32>
    %40 = vector.shape_cast %36 : vector<64x128xf32> to vector<8x8x128xf32>
    %41 = vector.broadcast %9 : vector<1x1x128xf32> to vector<8x8x128xf32>
    %42 = arith.addf %40, %41 : vector<8x8x128xf32>
    %43 = arith.addf %42, %39 : vector<8x8x128xf32>
    %cst_41 = arith.constant 0.000000e+00 : f32
    %44 = vector.broadcast %cst_41 : f32 to vector<8x8x128xf32>
    %45 = arith.maximumf %43, %44 : vector<8x8x128xf32>
    %46 = arith.truncf %45 : vector<8x8x128xf32> to vector<8x8x128xbf16>
    %c0_42 = arith.constant 0 : index
    %c0_43 = arith.constant 0 : index
    %c0_44 = arith.constant 0 : index
    %c0_45 = arith.constant 0 : index
    %c0_46 = arith.constant 0 : index
    %47 = vector.load %arg6[%c0_42, %c0_43, %c0_44, %c0_45, %c0_46] : memref<1x8x2x8x256xbf16, #tpu.memory_space<vmem>>, vector<1x8x1x8x128xbf16>
    %48 = vector.shape_cast %47 : vector<1x8x1x8x128xbf16> to vector<8x8x128xbf16>
    %49 = vector.shape_cast %46 : vector<8x8x128xbf16> to vector<1x8x1x8x128xbf16>
    tpu.vector_store %arg6[%c0_42, %c0_43, %c0_44, %c0_45, %c0_46], %49 {strides = array<i32>} : memref<1x8x2x8x256xbf16, #tpu.memory_space<vmem>>, vector<1x8x1x8x128xbf16>,
    %cst_47 = arith.constant 0.000000e+00 : f32
    %50 = vector.shape_cast %7 : vector<8x1x1xi1> to vector<8x1x1xi1>
    %51 = vector.broadcast %50 : vector<8x1x1xi1> to vector<8x8x128xi1>
    %52 = vector.broadcast %cst_47 : f32 to vector<8x8x128xf32>
    %53 = arith.select %51, %45, %52 : vector<8x8x128xi1>, vector<8x8x128xf32>
    %cst_48 = arith.constant dense<0.000000e+00> : vector<128xf32>
    %54 = vector.multi_reduction <add>, %53, %cst_48 [0, 1] : vector<8x8x128xf32> to vector<128xf32>
    %55 = vector.shape_cast %54 : vector<128xf32> to vector<1x1x128xf32>
    %56 = vector.broadcast %4 : f32 to vector<1x1x128xf32>
    %57 = arith.divf %55, %56 : vector<1x1x128xf32>
    %58 = vector.broadcast %57 : vector<1x1x128xf32> to vector<8x8x128xf32>
    %59 = arith.subf %45, %58 : vector<8x8x128xf32>
    %cst_49 = arith.constant 0.000000e+00 : f32
    %60 = vector.shape_cast %7 : vector<8x1x1xi1> to vector<8x1x1xi1>
    %61 = vector.broadcast %60 : vector<8x1x1xi1> to vector<8x8x128xi1>
    %62 = vector.broadcast %cst_49 : f32 to vector<8x8x128xf32>
    %63 = arith.select %61, %59, %62 : vector<8x8x128xi1>, vector<8x8x128xf32>
    %64 = arith.mulf %63, %63 : vector<8x8x128xf32>
    %cst_50 = arith.constant dense<0.000000e+00> : vector<128xf32>
    %65 = vector.multi_reduction <add>, %64, %cst_50 [0, 1] : vector<8x8x128xf32> to vector<128xf32>
    %66 = vector.shape_cast %65 : vector<128xf32> to vector<1x1x128xf32>
    %67 = vector.shape_cast %55 : vector<1x1x128xf32> to vector<1x128xf32>
    %68 = vector.shape_cast %66 : vector<1x1x128xf32> to vector<1x128xf32>
    %c0_51 = arith.constant 0 : index
    %c0_52 = arith.constant 0 : index
    %c0_53 = arith.constant 0 : index
    %c1_54 = arith.constant 1 : index
    %c0_55 = arith.constant 0 : index
    %69 = vector.load %arg2[%c0_51, %c0_52, %c0_53, %c1_54, %c0_55] : memref<1x1x10x10x8xbf16, #tpu.memory_space<vmem>>, vector<1x1x8x8x8xbf16>
    %70 = vector.shape_cast %69 : vector<1x1x8x8x8xbf16> to vector<8x8x8xbf16>
    %71 = vector.shape_cast %70 : vector<8x8x8xbf16> to vector<64x8xbf16>
    %c4 = arith.constant 4 : index
    %c0_56 = arith.constant 0 : index
    %c0_57 = arith.constant 0 : index
    %72 = vector.load %arg3[%c4, %c0_56, %c0_57] : memref<16x8x128xbf16, #tpu.memory_space<vmem>>, vector<1x8x128xbf16>
    %73 = vector.shape_cast %72 : vector<1x8x128xbf16> to vector<8x128xbf16>
    %cst_58 = arith.constant dense<0.000000e+00> : vector<64x128xf32>
    %74 = tpu.matmul %71, %73, %cst_58 {dimension_numbers = #tpu.dot_dimension_numbers<[1], [0], [0], [1], [0, 0, 1, 1], [], []>} : vector<64x8xbf16>, vector<8x128xbf16>, vector<64x128xf32> -> vector<64x128xf32>
    %c0_59 = arith.constant 0 : index
    %c0_60 = arith.constant 0 : index
    %c0_61 = arith.constant 0 : index
    %c2_62 = arith.constant 2 : index
    %c0_63 = arith.constant 0 : index
    %75 = vector.load %arg2[%c0_59, %c0_60, %c0_61, %c2_62, %c0_63] : memref<1x1x10x10x8xbf16, #tpu.memory_space<vmem>>, vector<1x1x8x8x8xbf16>
    %76 = vector.shape_cast %75 : vector<1x1x8x8x8xbf16> to vector<8x8x8xbf16>
    %77 = vector.shape_cast %76 : vector<8x8x8xbf16> to vector<64x8xbf16>
    %c5 = arith.constant 5 : index
    %c0_64 = arith.constant 0 : index
    %c0_65 = arith.constant 0 : index
    %78 = vector.load %arg3[%c5, %c0_64, %c0_65] : memref<16x8x128xbf16, #tpu.memory_space<vmem>>, vector<1x8x128xbf16>
    %79 = vector.shape_cast %78 : vector<1x8x128xbf16> to vector<8x128xbf16>
    %cst_66 = arith.constant dense<0.000000e+00> : vector<64x128xf32>
    %80 = tpu.matmul %77, %79, %cst_66 {dimension_numbers = #tpu.dot_dimension_numbers<[1], [0], [0], [1], [0, 0, 1, 1], [], []>} : vector<64x8xbf16>, vector<8x128xbf16>, vector<64x128xf32> -> vector<64x128xf32>
    %81 = arith.addf %74, %80 : vector<64x128xf32>
    %c0_67 = arith.constant 0 : index
    %c0_68 = arith.constant 0 : index
    %c1_69 = arith.constant 1 : index
    %c1_70 = arith.constant 1 : index
    %c0_71 = arith.constant 0 : index
    %82 = vector.load %arg2[%c0_67, %c0_68, %c1_69, %c1_70, %c0_71] : memref<1x1x10x10x8xbf16, #tpu.memory_space<vmem>>, vector<1x1x8x8x8xbf16>
    %83 = vector.shape_cast %82 : vector<1x1x8x8x8xbf16> to vector<8x8x8xbf16>
    %84 = vector.shape_cast %83 : vector<8x8x8xbf16> to vector<64x8xbf16>
    %c6 = arith.constant 6 : index
    %c0_72 = arith.constant 0 : index
    %c0_73 = arith.constant 0 : index
    %85 = vector.load %arg3[%c6, %c0_72, %c0_73] : memref<16x8x128xbf16, #tpu.memory_space<vmem>>, vector<1x8x128xbf16>
    %86 = vector.shape_cast %85 : vector<1x8x128xbf16> to vector<8x128xbf16>
    %cst_74 = arith.constant dense<0.000000e+00> : vector<64x128xf32>
    %87 = tpu.matmul %84, %86, %cst_74 {dimension_numbers = #tpu.dot_dimension_numbers<[1], [0], [0], [1], [0, 0, 1, 1], [], []>} : vector<64x8xbf16>, vector<8x128xbf16>, vector<64x128xf32> -> vector<64x128xf32>
    %88 = arith.addf %81, %87 : vector<64x128xf32>
    %c0_75 = arith.constant 0 : index
    %c0_76 = arith.constant 0 : index
    %c1_77 = arith.constant 1 : index
    %c2_78 = arith.constant 2 : index
    %c0_79 = arith.constant 0 : index
    %89 = vector.load %arg2[%c0_75, %c0_76, %c1_77, %c2_78, %c0_79] : memref<1x1x10x10x8xbf16, #tpu.memory_space<vmem>>, vector<1x1x8x8x8xbf16>
    %90 = vector.shape_cast %89 : vector<1x1x8x8x8xbf16> to vector<8x8x8xbf16>
    %91 = vector.shape_cast %90 : vector<8x8x8xbf16> to vector<64x8xbf16>
    %c7 = arith.constant 7 : index
    %c0_80 = arith.constant 0 : index
    %c0_81 = arith.constant 0 : index
    %92 = vector.load %arg3[%c7, %c0_80, %c0_81] : memref<16x8x128xbf16, #tpu.memory_space<vmem>>, vector<1x8x128xbf16>
    %93 = vector.shape_cast %92 : vector<1x8x128xbf16> to vector<8x128xbf16>
    %cst_82 = arith.constant dense<0.000000e+00> : vector<64x128xf32>
    %94 = tpu.matmul %91, %93, %cst_82 {dimension_numbers = #tpu.dot_dimension_numbers<[1], [0], [0], [1], [0, 0, 1, 1], [], []>} : vector<64x8xbf16>, vector<8x128xbf16>, vector<64x128xf32> -> vector<64x128xf32>
    %95 = arith.addf %88, %94 : vector<64x128xf32>
    %c0_83 = arith.constant 0 : index
    %c0_84 = arith.constant 0 : index
    %c0_85 = arith.constant 0 : index
    %c0_86 = arith.constant 0 : index
    %c128 = arith.constant 128 : index
    %96 = vector.load %arg5[%c0_83, %c0_84, %c0_85, %c0_86, %c128] : memref<1x8x2x8x256xbf16, #tpu.memory_space<vmem>>, vector<1x8x1x8x128xbf16>
    %97 = vector.shape_cast %96 : vector<1x8x1x8x128xbf16> to vector<8x8x128xbf16>
    %98 = arith.extf %97 : vector<8x8x128xbf16> to vector<8x8x128xf32>
    %99 = vector.shape_cast %95 : vector<64x128xf32> to vector<8x8x128xf32>
    %100 = vector.broadcast %9 : vector<1x1x128xf32> to vector<8x8x128xf32>
    %101 = arith.addf %99, %100 : vector<8x8x128xf32>
    %102 = arith.addf %101, %98 : vector<8x8x128xf32>
    %cst_87 = arith.constant 0.000000e+00 : f32
    %103 = vector.broadcast %cst_87 : f32 to vector<8x8x128xf32>
    %104 = arith.maximumf %102, %103 : vector<8x8x128xf32>
    %105 = arith.truncf %104 : vector<8x8x128xf32> to vector<8x8x128xbf16>
    %c0_88 = arith.constant 0 : index
    %c0_89 = arith.constant 0 : index
    %c0_90 = arith.constant 0 : index
    %c0_91 = arith.constant 0 : index
    %c128_92 = arith.constant 128 : index
    %106 = vector.load %arg6[%c0_88, %c0_89, %c0_90, %c0_91, %c128_92] : memref<1x8x2x8x256xbf16, #tpu.memory_space<vmem>>, vector<1x8x1x8x128xbf16>
    %107 = vector.shape_cast %106 : vector<1x8x1x8x128xbf16> to vector<8x8x128xbf16>
    %108 = vector.shape_cast %105 : vector<8x8x128xbf16> to vector<1x8x1x8x128xbf16>
    tpu.vector_store %arg6[%c0_88, %c0_89, %c0_90, %c0_91, %c128_92], %108 {strides = array<i32>} : memref<1x8x2x8x256xbf16, #tpu.memory_space<vmem>>, vector<1x8x1x8x128xbf16>,
    %cst_93 = arith.constant 0.000000e+00 : f32
    %109 = vector.shape_cast %7 : vector<8x1x1xi1> to vector<8x1x1xi1>
    %110 = vector.broadcast %109 : vector<8x1x1xi1> to vector<8x8x128xi1>
    %111 = vector.broadcast %cst_93 : f32 to vector<8x8x128xf32>
    %112 = arith.select %110, %104, %111 : vector<8x8x128xi1>, vector<8x8x128xf32>
    %cst_94 = arith.constant dense<0.000000e+00> : vector<128xf32>
    %113 = vector.multi_reduction <add>, %112, %cst_94 [0, 1] : vector<8x8x128xf32> to vector<128xf32>
    %114 = vector.shape_cast %113 : vector<128xf32> to vector<1x1x128xf32>
    %115 = vector.broadcast %4 : f32 to vector<1x1x128xf32>
    %116 = arith.divf %114, %115 : vector<1x1x128xf32>
    %117 = vector.broadcast %116 : vector<1x1x128xf32> to vector<8x8x128xf32>
    %118 = arith.subf %104, %117 : vector<8x8x128xf32>
    %cst_95 = arith.constant 0.000000e+00 : f32
    %119 = vector.shape_cast %7 : vector<8x1x1xi1> to vector<8x1x1xi1>
    %120 = vector.broadcast %119 : vector<8x1x1xi1> to vector<8x8x128xi1>
    %121 = vector.broadcast %cst_95 : f32 to vector<8x8x128xf32>
    %122 = arith.select %120, %118, %121 : vector<8x8x128xi1>, vector<8x8x128xf32>
    %123 = arith.mulf %122, %122 : vector<8x8x128xf32>
    %cst_96 = arith.constant dense<0.000000e+00> : vector<128xf32>
    %124 = vector.multi_reduction <add>, %123, %cst_96 [0, 1] : vector<8x8x128xf32> to vector<128xf32>
    %125 = vector.shape_cast %124 : vector<128xf32> to vector<1x1x128xf32>
    %126 = vector.shape_cast %114 : vector<1x1x128xf32> to vector<1x128xf32>
    %127 = vector.shape_cast %125 : vector<1x1x128xf32> to vector<1x128xf32>
    %c0_97 = arith.constant 0 : index
    %c0_98 = arith.constant 0 : index
    %c1_99 = arith.constant 1 : index
    %c0_100 = arith.constant 0 : index
    %c0_101 = arith.constant 0 : index
    %128 = vector.load %arg2[%c0_97, %c0_98, %c1_99, %c0_100, %c0_101] : memref<1x1x10x10x8xbf16, #tpu.memory_space<vmem>>, vector<1x1x8x8x8xbf16>
    %129 = vector.shape_cast %128 : vector<1x1x8x8x8xbf16> to vector<8x8x8xbf16>
    %130 = vector.shape_cast %129 : vector<8x8x8xbf16> to vector<64x8xbf16>
    %c8 = arith.constant 8 : index
    %c0_102 = arith.constant 0 : index
    %c0_103 = arith.constant 0 : index
    %131 = vector.load %arg3[%c8, %c0_102, %c0_103] : memref<16x8x128xbf16, #tpu.memory_space<vmem>>, vector<1x8x128xbf16>
    %132 = vector.shape_cast %131 : vector<1x8x128xbf16> to vector<8x128xbf16>
    %cst_104 = arith.constant dense<0.000000e+00> : vector<64x128xf32>
    %133 = tpu.matmul %130, %132, %cst_104 {dimension_numbers = #tpu.dot_dimension_numbers<[1], [0], [0], [1], [0, 0, 1, 1], [], []>} : vector<64x8xbf16>, vector<8x128xbf16>, vector<64x128xf32> -> vector<64x128xf32>
    %c0_105 = arith.constant 0 : index
    %c0_106 = arith.constant 0 : index
    %c1_107 = arith.constant 1 : index
    %c1_108 = arith.constant 1 : index
    %c0_109 = arith.constant 0 : index
    %134 = vector.load %arg2[%c0_105, %c0_106, %c1_107, %c1_108, %c0_109] : memref<1x1x10x10x8xbf16, #tpu.memory_space<vmem>>, vector<1x1x8x8x8xbf16>
    %135 = vector.shape_cast %134 : vector<1x1x8x8x8xbf16> to vector<8x8x8xbf16>
    %136 = vector.shape_cast %135 : vector<8x8x8xbf16> to vector<64x8xbf16>
    %c9 = arith.constant 9 : index
    %c0_110 = arith.constant 0 : index
    %c0_111 = arith.constant 0 : index
    %137 = vector.load %arg3[%c9, %c0_110, %c0_111] : memref<16x8x128xbf16, #tpu.memory_space<vmem>>, vector<1x8x128xbf16>
    %138 = vector.shape_cast %137 : vector<1x8x128xbf16> to vector<8x128xbf16>
    %cst_112 = arith.constant dense<0.000000e+00> : vector<64x128xf32>
    %139 = tpu.matmul %136, %138, %cst_112 {dimension_numbers = #tpu.dot_dimension_numbers<[1], [0], [0], [1], [0, 0, 1, 1], [], []>} : vector<64x8xbf16>, vector<8x128xbf16>, vector<64x128xf32> -> vector<64x128xf32>
    %140 = arith.addf %133, %139 : vector<64x128xf32>
    %c0_113 = arith.constant 0 : index
    %c0_114 = arith.constant 0 : index
    %c2_115 = arith.constant 2 : index
    %c0_116 = arith.constant 0 : index
    %c0_117 = arith.constant 0 : index
    %141 = vector.load %arg2[%c0_113, %c0_114, %c2_115, %c0_116, %c0_117] : memref<1x1x10x10x8xbf16, #tpu.memory_space<vmem>>, vector<1x1x8x8x8xbf16>
    %142 = vector.shape_cast %141 : vector<1x1x8x8x8xbf16> to vector<8x8x8xbf16>
    %143 = vector.shape_cast %142 : vector<8x8x8xbf16> to vector<64x8xbf16>
    %c10 = arith.constant 10 : index
    %c0_118 = arith.constant 0 : index
    %c0_119 = arith.constant 0 : index
    %144 = vector.load %arg3[%c10, %c0_118, %c0_119] : memref<16x8x128xbf16, #tpu.memory_space<vmem>>, vector<1x8x128xbf16>
    %145 = vector.shape_cast %144 : vector<1x8x128xbf16> to vector<8x128xbf16>
    %cst_120 = arith.constant dense<0.000000e+00> : vector<64x128xf32>
    %146 = tpu.matmul %143, %145, %cst_120 {dimension_numbers = #tpu.dot_dimension_numbers<[1], [0], [0], [1], [0, 0, 1, 1], [], []>} : vector<64x8xbf16>, vector<8x128xbf16>, vector<64x128xf32> -> vector<64x128xf32>
    %147 = arith.addf %140, %146 : vector<64x128xf32>
    %c0_121 = arith.constant 0 : index
    %c0_122 = arith.constant 0 : index
    %c2_123 = arith.constant 2 : index
    %c1_124 = arith.constant 1 : index
    %c0_125 = arith.constant 0 : index
    %148 = vector.load %arg2[%c0_121, %c0_122, %c2_123, %c1_124, %c0_125] : memref<1x1x10x10x8xbf16, #tpu.memory_space<vmem>>, vector<1x1x8x8x8xbf16>
    %149 = vector.shape_cast %148 : vector<1x1x8x8x8xbf16> to vector<8x8x8xbf16>
    %150 = vector.shape_cast %149 : vector<8x8x8xbf16> to vector<64x8xbf16>
    %c11 = arith.constant 11 : index
    %c0_126 = arith.constant 0 : index
    %c0_127 = arith.constant 0 : index
    %151 = vector.load %arg3[%c11, %c0_126, %c0_127] : memref<16x8x128xbf16, #tpu.memory_space<vmem>>, vector<1x8x128xbf16>
    %152 = vector.shape_cast %151 : vector<1x8x128xbf16> to vector<8x128xbf16>
    %cst_128 = arith.constant dense<0.000000e+00> : vector<64x128xf32>
    %153 = tpu.matmul %150, %152, %cst_128 {dimension_numbers = #tpu.dot_dimension_numbers<[1], [0], [0], [1], [0, 0, 1, 1], [], []>} : vector<64x8xbf16>, vector<8x128xbf16>, vector<64x128xf32> -> vector<64x128xf32>
    %154 = arith.addf %147, %153 : vector<64x128xf32>
    %c0_129 = arith.constant 0 : index
    %c0_130 = arith.constant 0 : index
    %c1_131 = arith.constant 1 : index
    %c0_132 = arith.constant 0 : index
    %c0_133 = arith.constant 0 : index
    %155 = vector.load %arg5[%c0_129, %c0_130, %c1_131, %c0_132, %c0_133] : memref<1x8x2x8x256xbf16, #tpu.memory_space<vmem>>, vector<1x8x1x8x128xbf16>
    %156 = vector.shape_cast %155 : vector<1x8x1x8x128xbf16> to vector<8x8x128xbf16>
    %157 = arith.extf %156 : vector<8x8x128xbf16> to vector<8x8x128xf32>
    %158 = vector.shape_cast %154 : vector<64x128xf32> to vector<8x8x128xf32>
    %159 = vector.broadcast %9 : vector<1x1x128xf32> to vector<8x8x128xf32>
    %160 = arith.addf %158, %159 : vector<8x8x128xf32>
    %161 = arith.addf %160, %157 : vector<8x8x128xf32>
    %cst_134 = arith.constant 0.000000e+00 : f32
    %162 = vector.broadcast %cst_134 : f32 to vector<8x8x128xf32>
    %163 = arith.maximumf %161, %162 : vector<8x8x128xf32>
    %164 = arith.truncf %163 : vector<8x8x128xf32> to vector<8x8x128xbf16>
    %c0_135 = arith.constant 0 : index
    %c0_136 = arith.constant 0 : index
    %c1_137 = arith.constant 1 : index
    %c0_138 = arith.constant 0 : index
    %c0_139 = arith.constant 0 : index
    %165 = vector.load %arg6[%c0_135, %c0_136, %c1_137, %c0_138, %c0_139] : memref<1x8x2x8x256xbf16, #tpu.memory_space<vmem>>, vector<1x8x1x8x128xbf16>
    %166 = vector.shape_cast %165 : vector<1x8x1x8x128xbf16> to vector<8x8x128xbf16>
    %167 = vector.shape_cast %164 : vector<8x8x128xbf16> to vector<1x8x1x8x128xbf16>
    tpu.vector_store %arg6[%c0_135, %c0_136, %c1_137, %c0_138, %c0_139], %167 {strides = array<i32>} : memref<1x8x2x8x256xbf16, #tpu.memory_space<vmem>>, vector<1x8x1x8x128xbf16>,
    %cst_140 = arith.constant 0.000000e+00 : f32
    %168 = vector.shape_cast %7 : vector<8x1x1xi1> to vector<8x1x1xi1>
    %169 = vector.broadcast %168 : vector<8x1x1xi1> to vector<8x8x128xi1>
    %170 = vector.broadcast %cst_140 : f32 to vector<8x8x128xf32>
    %171 = arith.select %169, %163, %170 : vector<8x8x128xi1>, vector<8x8x128xf32>
    %cst_141 = arith.constant dense<0.000000e+00> : vector<128xf32>
    %172 = vector.multi_reduction <add>, %171, %cst_141 [0, 1] : vector<8x8x128xf32> to vector<128xf32>
    %173 = vector.shape_cast %172 : vector<128xf32> to vector<1x1x128xf32>
    %174 = vector.broadcast %4 : f32 to vector<1x1x128xf32>
    %175 = arith.divf %173, %174 : vector<1x1x128xf32>
    %176 = vector.broadcast %175 : vector<1x1x128xf32> to vector<8x8x128xf32>
    %177 = arith.subf %163, %176 : vector<8x8x128xf32>
    %cst_142 = arith.constant 0.000000e+00 : f32
    %178 = vector.shape_cast %7 : vector<8x1x1xi1> to vector<8x1x1xi1>
    %179 = vector.broadcast %178 : vector<8x1x1xi1> to vector<8x8x128xi1>
    %180 = vector.broadcast %cst_142 : f32 to vector<8x8x128xf32>
    %181 = arith.select %179, %177, %180 : vector<8x8x128xi1>, vector<8x8x128xf32>
    %182 = arith.mulf %181, %181 : vector<8x8x128xf32>
    %cst_143 = arith.constant dense<0.000000e+00> : vector<128xf32>
    %183 = vector.multi_reduction <add>, %182, %cst_143 [0, 1] : vector<8x8x128xf32> to vector<128xf32>
    %184 = vector.shape_cast %183 : vector<128xf32> to vector<1x1x128xf32>
    %185 = vector.shape_cast %173 : vector<1x1x128xf32> to vector<1x128xf32>
    %186 = vector.shape_cast %184 : vector<1x1x128xf32> to vector<1x128xf32>
    %c0_144 = arith.constant 0 : index
    %c0_145 = arith.constant 0 : index
    %c1_146 = arith.constant 1 : index
    %c1_147 = arith.constant 1 : index
    %c0_148 = arith.constant 0 : index
    %187 = vector.load %arg2[%c0_144, %c0_145, %c1_146, %c1_147, %c0_148] : memref<1x1x10x10x8xbf16, #tpu.memory_space<vmem>>, vector<1x1x8x8x8xbf16>
    %188 = vector.shape_cast %187 : vector<1x1x8x8x8xbf16> to vector<8x8x8xbf16>
    %189 = vector.shape_cast %188 : vector<8x8x8xbf16> to vector<64x8xbf16>
    %c12 = arith.constant 12 : index
    %c0_149 = arith.constant 0 : index
    %c0_150 = arith.constant 0 : index
    %190 = vector.load %arg3[%c12, %c0_149, %c0_150] : memref<16x8x128xbf16, #tpu.memory_space<vmem>>, vector<1x8x128xbf16>
    %191 = vector.shape_cast %190 : vector<1x8x128xbf16> to vector<8x128xbf16>
    %cst_151 = arith.constant dense<0.000000e+00> : vector<64x128xf32>
    %192 = tpu.matmul %189, %191, %cst_151 {dimension_numbers = #tpu.dot_dimension_numbers<[1], [0], [0], [1], [0, 0, 1, 1], [], []>} : vector<64x8xbf16>, vector<8x128xbf16>, vector<64x128xf32> -> vector<64x128xf32>
    %c0_152 = arith.constant 0 : index
    %c0_153 = arith.constant 0 : index
    %c1_154 = arith.constant 1 : index
    %c2_155 = arith.constant 2 : index
    %c0_156 = arith.constant 0 : index
    %193 = vector.load %arg2[%c0_152, %c0_153, %c1_154, %c2_155, %c0_156] : memref<1x1x10x10x8xbf16, #tpu.memory_space<vmem>>, vector<1x1x8x8x8xbf16>
    %194 = vector.shape_cast %193 : vector<1x1x8x8x8xbf16> to vector<8x8x8xbf16>
    %195 = vector.shape_cast %194 : vector<8x8x8xbf16> to vector<64x8xbf16>
    %c13 = arith.constant 13 : index
    %c0_157 = arith.constant 0 : index
    %c0_158 = arith.constant 0 : index
    %196 = vector.load %arg3[%c13, %c0_157, %c0_158] : memref<16x8x128xbf16, #tpu.memory_space<vmem>>, vector<1x8x128xbf16>
    %197 = vector.shape_cast %196 : vector<1x8x128xbf16> to vector<8x128xbf16>
    %cst_159 = arith.constant dense<0.000000e+00> : vector<64x128xf32>
    %198 = tpu.matmul %195, %197, %cst_159 {dimension_numbers = #tpu.dot_dimension_numbers<[1], [0], [0], [1], [0, 0, 1, 1], [], []>} : vector<64x8xbf16>, vector<8x128xbf16>, vector<64x128xf32> -> vector<64x128xf32>
    %199 = arith.addf %192, %198 : vector<64x128xf32>
    %c0_160 = arith.constant 0 : index
    %c0_161 = arith.constant 0 : index
    %c2_162 = arith.constant 2 : index
    %c1_163 = arith.constant 1 : index
    %c0_164 = arith.constant 0 : index
    %200 = vector.load %arg2[%c0_160, %c0_161, %c2_162, %c1_163, %c0_164] : memref<1x1x10x10x8xbf16, #tpu.memory_space<vmem>>, vector<1x1x8x8x8xbf16>
    %201 = vector.shape_cast %200 : vector<1x1x8x8x8xbf16> to vector<8x8x8xbf16>
    %202 = vector.shape_cast %201 : vector<8x8x8xbf16> to vector<64x8xbf16>
    %c14 = arith.constant 14 : index
    %c0_165 = arith.constant 0 : index
    %c0_166 = arith.constant 0 : index
    %203 = vector.load %arg3[%c14, %c0_165, %c0_166] : memref<16x8x128xbf16, #tpu.memory_space<vmem>>, vector<1x8x128xbf16>
    %204 = vector.shape_cast %203 : vector<1x8x128xbf16> to vector<8x128xbf16>
    %cst_167 = arith.constant dense<0.000000e+00> : vector<64x128xf32>
    %205 = tpu.matmul %202, %204, %cst_167 {dimension_numbers = #tpu.dot_dimension_numbers<[1], [0], [0], [1], [0, 0, 1, 1], [], []>} : vector<64x8xbf16>, vector<8x128xbf16>, vector<64x128xf32> -> vector<64x128xf32>
    %206 = arith.addf %199, %205 : vector<64x128xf32>
    %c0_168 = arith.constant 0 : index
    %c0_169 = arith.constant 0 : index
    %c2_170 = arith.constant 2 : index
    %c2_171 = arith.constant 2 : index
    %c0_172 = arith.constant 0 : index
    %207 = vector.load %arg2[%c0_168, %c0_169, %c2_170, %c2_171, %c0_172] : memref<1x1x10x10x8xbf16, #tpu.memory_space<vmem>>, vector<1x1x8x8x8xbf16>
    %208 = vector.shape_cast %207 : vector<1x1x8x8x8xbf16> to vector<8x8x8xbf16>
    %209 = vector.shape_cast %208 : vector<8x8x8xbf16> to vector<64x8xbf16>
    %c15 = arith.constant 15 : index
    %c0_173 = arith.constant 0 : index
    %c0_174 = arith.constant 0 : index
    %210 = vector.load %arg3[%c15, %c0_173, %c0_174] : memref<16x8x128xbf16, #tpu.memory_space<vmem>>, vector<1x8x128xbf16>
    %211 = vector.shape_cast %210 : vector<1x8x128xbf16> to vector<8x128xbf16>
    %cst_175 = arith.constant dense<0.000000e+00> : vector<64x128xf32>
    %212 = tpu.matmul %209, %211, %cst_175 {dimension_numbers = #tpu.dot_dimension_numbers<[1], [0], [0], [1], [0, 0, 1, 1], [], []>} : vector<64x8xbf16>, vector<8x128xbf16>, vector<64x128xf32> -> vector<64x128xf32>
    %213 = arith.addf %206, %212 : vector<64x128xf32>
    %c0_176 = arith.constant 0 : index
    %c0_177 = arith.constant 0 : index
    %c1_178 = arith.constant 1 : index
    %c0_179 = arith.constant 0 : index
    %c128_180 = arith.constant 128 : index
    %214 = vector.load %arg5[%c0_176, %c0_177, %c1_178, %c0_179, %c128_180] : memref<1x8x2x8x256xbf16, #tpu.memory_space<vmem>>, vector<1x8x1x8x128xbf16>
    %215 = vector.shape_cast %214 : vector<1x8x1x8x128xbf16> to vector<8x8x128xbf16>
    %216 = arith.extf %215 : vector<8x8x128xbf16> to vector<8x8x128xf32>
    %217 = vector.shape_cast %213 : vector<64x128xf32> to vector<8x8x128xf32>
    %218 = vector.broadcast %9 : vector<1x1x128xf32> to vector<8x8x128xf32>
    %219 = arith.addf %217, %218 : vector<8x8x128xf32>
    %220 = arith.addf %219, %216 : vector<8x8x128xf32>
    %cst_181 = arith.constant 0.000000e+00 : f32
    %221 = vector.broadcast %cst_181 : f32 to vector<8x8x128xf32>
    %222 = arith.maximumf %220, %221 : vector<8x8x128xf32>
    %223 = arith.truncf %222 : vector<8x8x128xf32> to vector<8x8x128xbf16>
    %c0_182 = arith.constant 0 : index
    %c0_183 = arith.constant 0 : index
    %c1_184 = arith.constant 1 : index
    %c0_185 = arith.constant 0 : index
    %c128_186 = arith.constant 128 : index
    %224 = vector.load %arg6[%c0_182, %c0_183, %c1_184, %c0_185, %c128_186] : memref<1x8x2x8x256xbf16, #tpu.memory_space<vmem>>, vector<1x8x1x8x128xbf16>
    %225 = vector.shape_cast %224 : vector<1x8x1x8x128xbf16> to vector<8x8x128xbf16>
    %226 = vector.shape_cast %223 : vector<8x8x128xbf16> to vector<1x8x1x8x128xbf16>
    tpu.vector_store %arg6[%c0_182, %c0_183, %c1_184, %c0_185, %c128_186], %226 {strides = array<i32>} : memref<1x8x2x8x256xbf16, #tpu.memory_space<vmem>>, vector<1x8x1x8x128xbf16>,
    %cst_187 = arith.constant 0.000000e+00 : f32
    %227 = vector.shape_cast %7 : vector<8x1x1xi1> to vector<8x1x1xi1>
    %228 = vector.broadcast %227 : vector<8x1x1xi1> to vector<8x8x128xi1>
    %229 = vector.broadcast %cst_187 : f32 to vector<8x8x128xf32>
    %230 = arith.select %228, %222, %229 : vector<8x8x128xi1>, vector<8x8x128xf32>
    %cst_188 = arith.constant dense<0.000000e+00> : vector<128xf32>
    %231 = vector.multi_reduction <add>, %230, %cst_188 [0, 1] : vector<8x8x128xf32> to vector<128xf32>
    %232 = vector.shape_cast %231 : vector<128xf32> to vector<1x1x128xf32>
    %233 = vector.broadcast %4 : f32 to vector<1x1x128xf32>
    %234 = arith.divf %232, %233 : vector<1x1x128xf32>
    %235 = vector.broadcast %234 : vector<1x1x128xf32> to vector<8x8x128xf32>
    %236 = arith.subf %222, %235 : vector<8x8x128xf32>
    %cst_189 = arith.constant 0.000000e+00 : f32
    %237 = vector.shape_cast %7 : vector<8x1x1xi1> to vector<8x1x1xi1>
    %238 = vector.broadcast %237 : vector<8x1x1xi1> to vector<8x8x128xi1>
    %239 = vector.broadcast %cst_189 : f32 to vector<8x8x128xf32>
    %240 = arith.select %238, %236, %239 : vector<8x8x128xi1>, vector<8x8x128xf32>
    %241 = arith.mulf %240, %240 : vector<8x8x128xf32>
    %cst_190 = arith.constant dense<0.000000e+00> : vector<128xf32>
    %242 = vector.multi_reduction <add>, %241, %cst_190 [0, 1] : vector<8x8x128xf32> to vector<128xf32>
    %243 = vector.shape_cast %242 : vector<128xf32> to vector<1x1x128xf32>
    %244 = vector.shape_cast %232 : vector<1x1x128xf32> to vector<1x128xf32>
    %245 = vector.shape_cast %243 : vector<1x1x128xf32> to vector<1x128xf32>
    %246 = tpu.concatenate %67, %126, %185, %244 in 0 : vector<1x128xf32>, vector<1x128xf32>, vector<1x128xf32>, vector<1x128xf32> -> vector<4x128xf32>
    %c0_191 = arith.constant 0 : index
    %c0_192 = arith.constant 0 : index
    %c0_193 = arith.constant 0 : index
    %c0_194 = arith.constant 0 : index
    %247 = vector.load %arg7[%c0_191, %c0_192, %c0_193, %c0_194] : memref<1x1x4x128xf32, #tpu.memory_space<vmem>>, vector<1x1x4x128xf32>
    %248 = vector.shape_cast %247 : vector<1x1x4x128xf32> to vector<4x128xf32>
    %249 = vector.shape_cast %246 : vector<4x128xf32> to vector<1x1x4x128xf32>
    tpu.vector_store %arg7[%c0_191, %c0_192, %c0_193, %c0_194], %249 {strides = array<i32>} : memref<1x1x4x128xf32, #tpu.memory_space<vmem>>, vector<1x1x4x128xf32>,
    %250 = tpu.concatenate %68, %127, %186, %245 in 0 : vector<1x128xf32>, vector<1x128xf32>, vector<1x128xf32>, vector<1x128xf32> -> vector<4x128xf32>
    %c0_195 = arith.constant 0 : index
    %c0_196 = arith.constant 0 : index
    %c0_197 = arith.constant 0 : index
    %c0_198 = arith.constant 0 : index
    %251 = vector.load %arg8[%c0_195, %c0_196, %c0_197, %c0_198] : memref<1x1x4x128xf32, #tpu.memory_space<vmem>>, vector<1x1x4x128xf32>
    %252 = vector.shape_cast %251 : vector<1x1x4x128xf32> to vector<4x128xf32>
    %253 = vector.shape_cast %250 : vector<4x128xf32> to vector<1x1x4x128xf32>
    tpu.vector_store %arg8[%c0_195, %c0_196, %c0_197, %c0_198], %253 {strides = array<i32>} : memref<1x1x4x128xf32, #tpu.memory_space<vmem>>, vector<1x1x4x128xf32>,
    return
  }
  func.func @transform_0(%arg0: i32, %arg1: i32) -> (i32, i32, i32, i32, i32) {
    %c0_i32 = arith.constant 0 : i32
    %c0_i32_0 = arith.constant 0 : i32
    %c0_i32_1 = arith.constant 0 : i32
    %c0_i32_2 = arith.constant 0 : i32
    return %arg0, %arg1, %c0_i32, %c0_i32_0, %c0_i32_1 : i32, i32, i32, i32, i32
  }
  func.func @transform_1(%arg0: i32, %arg1: i32) -> (i32, i32, i32) {
    %c0_i32 = arith.constant 0 : i32
    %c0_i32_0 = arith.constant 0 : i32
    %c0_i32_1 = arith.constant 0 : i32
    %c0_i32_2 = arith.constant 0 : i32
    return %c0_i32, %c0_i32_0, %c0_i32_1 : i32, i32, i32
  }
  func.func @transform_2(%arg0: i32, %arg1: i32) -> (i32, i32) {
    %c0_i32 = arith.constant 0 : i32
    %c0_i32_0 = arith.constant 0 : i32
    %c0_i32_1 = arith.constant 0 : i32
    return %c0_i32, %c0_i32_0 : i32, i32
  }
  func.func @transform_3(%arg0: i32, %arg1: i32) -> (i32, i32, i32, i32, i32) {
    %c0_i32 = arith.constant 0 : i32
    %c0_i32_0 = arith.constant 0 : i32
    %c0_i32_1 = arith.constant 0 : i32
    %c0_i32_2 = arith.constant 0 : i32
    return %arg0, %arg1, %c0_i32, %c0_i32_0, %c0_i32_1 : i32, i32, i32, i32, i32
  }
  func.func @transform_4(%arg0: i32, %arg1: i32) -> (i32, i32, i32, i32, i32) {
    %c0_i32 = arith.constant 0 : i32
    %c0_i32_0 = arith.constant 0 : i32
    %c0_i32_1 = arith.constant 0 : i32
    %c0_i32_2 = arith.constant 0 : i32
    return %arg0, %arg1, %c0_i32, %c0_i32_0, %c0_i32_1 : i32, i32, i32, i32, i32
  }
  func.func @transform_5(%arg0: i32, %arg1: i32) -> (i32, i32, i32, i32) {
    %c0_i32 = arith.constant 0 : i32
    %c0_i32_0 = arith.constant 0 : i32
    %c0_i32_1 = arith.constant 0 : i32
    return %arg0, %arg1, %c0_i32, %c0_i32_0 : i32, i32, i32, i32
  }
  func.func @transform_6(%arg0: i32, %arg1: i32) -> (i32, i32, i32, i32) {
    %c0_i32 = arith.constant 0 : i32
    %c0_i32_0 = arith.constant 0 : i32
    %c0_i32_1 = arith.constant 0 : i32
    return %arg0, %arg1, %c0_i32, %c0_i32_0 : i32, i32, i32, i32
  }
}

module attributes {stable_mosaic.version = 11 : i64} {
  func.func @_pass2_kernel(%arg0: i32, %arg1: i32, %arg2: memref<1x8x2x8x256xbf16, #tpu.memory_space<vmem>>, %arg3: memref<1x256xf32, #tpu.memory_space<vmem>>, %arg4: memref<1x256xf32, #tpu.memory_space<vmem>>, %arg5: memref<1x8x2x8x256xf32, #tpu.memory_space<vmem>>) attributes {dimension_semantics = [#tpu.dimension_semantics<parallel>, #tpu.dimension_semantics<parallel>], iteration_bounds = array<i64: 2, 1>, scalar_prefetch = 0 : i64, scratch_operands = 0 : i64, tpu.core_type = #tpu.core_type<tc>, window_params = [{transform_indices = @transform_0, window_bounds = array<i64: 1, 8, 2, 8, 256>}, {pipeline_mode = #tpu.pipeline_mode<synchronous>, transform_indices = @transform_1, window_bounds = array<i64: 1, 256>}, {pipeline_mode = #tpu.pipeline_mode<synchronous>, transform_indices = @transform_2, window_bounds = array<i64: 1, 256>}, {transform_indices = @transform_3, window_bounds = array<i64: 1, 8, 2, 8, 256>}]} {
    %c0 = arith.constant 0 : index
    %c0_0 = arith.constant 0 : index
    %c0_1 = arith.constant 0 : index
    %c0_2 = arith.constant 0 : index
    %c0_3 = arith.constant 0 : index
    %0 = vector.load %arg2[%c0, %c0_0, %c0_1, %c0_2, %c0_3] : memref<1x8x2x8x256xbf16, #tpu.memory_space<vmem>>, vector<1x8x2x8x256xbf16>
    %1 = vector.shape_cast %0 : vector<1x8x2x8x256xbf16> to vector<8x2x8x256xbf16>
    %2 = arith.extf %1 : vector<8x2x8x256xbf16> to vector<8x2x8x256xf32>
    %c0_4 = arith.constant 0 : index
    %c0_5 = arith.constant 0 : index
    %3 = vector.load %arg3[%c0_4, %c0_5] : memref<1x256xf32, #tpu.memory_space<vmem>>, vector<1x256xf32>
    %4 = vector.shape_cast %3 : vector<1x256xf32> to vector<1x1x1x256xf32>
    %5 = vector.broadcast %4 : vector<1x1x1x256xf32> to vector<8x2x8x256xf32>
    %6 = arith.mulf %2, %5 : vector<8x2x8x256xf32>
    %c0_6 = arith.constant 0 : index
    %c0_7 = arith.constant 0 : index
    %7 = vector.load %arg4[%c0_6, %c0_7] : memref<1x256xf32, #tpu.memory_space<vmem>>, vector<1x256xf32>
    %8 = vector.shape_cast %7 : vector<1x256xf32> to vector<1x1x1x256xf32>
    %9 = vector.broadcast %8 : vector<1x1x1x256xf32> to vector<8x2x8x256xf32>
    %10 = arith.addf %6, %9 : vector<8x2x8x256xf32>
    %c0_8 = arith.constant 0 : index
    %c0_9 = arith.constant 0 : index
    %c0_10 = arith.constant 0 : index
    %c0_11 = arith.constant 0 : index
    %c0_12 = arith.constant 0 : index
    %11 = vector.load %arg5[%c0_8, %c0_9, %c0_10, %c0_11, %c0_12] : memref<1x8x2x8x256xf32, #tpu.memory_space<vmem>>, vector<1x8x2x8x256xf32>
    %12 = vector.shape_cast %11 : vector<1x8x2x8x256xf32> to vector<8x2x8x256xf32>
    %13 = vector.shape_cast %10 : vector<8x2x8x256xf32> to vector<1x8x2x8x256xf32>
    tpu.vector_store %arg5[%c0_8, %c0_9, %c0_10, %c0_11, %c0_12], %13 {strides = array<i32>} : memref<1x8x2x8x256xf32, #tpu.memory_space<vmem>>, vector<1x8x2x8x256xf32>,
    return
  }
  func.func @transform_0(%arg0: i32, %arg1: i32) -> (i32, i32, i32, i32, i32) {
    %c0_i32 = arith.constant 0 : i32
    %c0_i32_0 = arith.constant 0 : i32
    %c0_i32_1 = arith.constant 0 : i32
    %c0_i32_2 = arith.constant 0 : i32
    return %arg0, %arg1, %c0_i32, %c0_i32_0, %c0_i32_1 : i32, i32, i32, i32, i32
  }
  func.func @transform_1(%arg0: i32, %arg1: i32) -> (i32, i32) {
    %c0_i32 = arith.constant 0 : i32
    %c0_i32_0 = arith.constant 0 : i32
    %c0_i32_1 = arith.constant 0 : i32
    return %c0_i32, %c0_i32_0 : i32, i32
  }
  func.func @transform_2(%arg0: i32, %arg1: i32) -> (i32, i32) {
    %c0_i32 = arith.constant 0 : i32
    %c0_i32_0 = arith.constant 0 : i32
    %c0_i32_1 = arith.constant 0 : i32
    return %c0_i32, %c0_i32_0 : i32, i32
  }
  func.func @transform_3(%arg0: i32, %arg1: i32) -> (i32, i32, i32, i32, i32) {
    %c0_i32 = arith.constant 0 : i32
    %c0_i32_0 = arith.constant 0 : i32
    %c0_i32_1 = arith.constant 0 : i32
    %c0_i32_2 = arith.constant 0 : i32
    return %arg0, %arg1, %c0_i32, %c0_i32_0, %c0_i32_1 : i32, i32, i32, i32, i32
  }
}

</mosaic_0001>

<llo_original>
// kernel: decoder_block_forward.3
$region0: #{decoder_block_forward.3}
  #allocation0 [shape = 'u32[]', space=smem, size = 0x4, offset = 0x4, fixed_abs, tag = 'smem constant byte address 0x4 - core index']
  #allocation1 [shape = 'u32[72,128]{1,0:T(1,128)}', space=vmem, size = 0x9000, scoped, tag = 'internal scratch']
  %s0 = inlined_call_operand.vmem [shape: bf16[2,8,2,8,256], index: 0, kind: input, shape index: {}]
  %s1 = inlined_call_operand.vmem [shape: f32[1,256], index: 1, kind: input, shape index: {}]
  %s2 = inlined_call_operand.vmem [shape: f32[1,256], index: 2, kind: input, shape index: {}]
  %s3 = inlined_call_operand.vmem [shape: f32[2,8,2,8,256], index: 3, kind: output, shape index: {}]
  %s4 = sld [smem:[#allocation0]]
  $region45: #{decoder_block_forward.3} parent=0
    _
  %s6 = ssub.s32 1, %s4
  %s7 = scalar_select 0, %s6, %s4
  loop: start=0, step=1, limit=4
  $region2: #{decoder_block_forward.3} parent=0 // loop_pre_header
    _
  $region3: #{decoder_block_forward.3} parent=0 // loop_header
    %s9 = sphi 0, %s13
    %p10 = scmp.ge.s32.totalorder %s9, 4
    %s16 = sphi 0, %s28
    %s17 = sphi 0, %s24
    %s18 = sphi 0, %s16
    %s19 = sphi 0, %s17
    %s20 = sphi 0, %s18
    %s21 = sphi 0, %s19
    %s33 = sphi 0, %s35
    %s36 = sphi 0, %s33
    %s37 = sphi 0, %s36
    %s53 = sphi 0, %s37
    %s57 = sphi 0, %s57
    %s59 = sphi 0, %s57
    %s60 = sphi 0, %s59
    %s74 = sphi 0, %s60
    %s78 = sphi 0, %s78
    %s80 = sphi 0, %s78
    %s81 = sphi 0, %s80
    %s95 = sphi 0, %s81
    %s103 = sphi 0, %s105
    %s106 = sphi 0, %s103
    %s107 = sphi 0, %s106
    %s123 = sphi 0, %s107
  $region4: #{decoder_block_forward.3} parent=0 // loop_header_branch
    %12 = sbr.rel (%p10) target = $region8
  $region5: #{decoder_block_forward.3} parent=0 // loop_body
    %s14 = ssub.s32 %s9, 1
    %s15 = ssub.s32 %s9, 2
    %s22 = sadd.s32 1, %s17
    %p23 = scmp.ge.s32.totalorder %s22, 1
    %s24 = scalar_select %p23, 0, %s22
    %s25 = sadd.s32 1, %s16
    %s26 = scalar_select %p23, %s25, %s16
    %p27 = scmp.ge.s32.totalorder %s26, 2
    %s28 = scalar_select %p27, 0, %s26
    %s29 = ssub.s32 %s16, %s28
    %s30 = ssub.s32 %s17, %s24
    %s31 = sor.u32 %s29, %s30
    %p32 = scmp.eq.s32.totalorder %s31, 0
    %s34 = sadd.s32 %s33, 1
    %s35 = scalar_select %p32, %s33, %s34
    %p38 = pneg %p32
    %p39 = scmp.eq.s32.totalorder %s9, 1
    %p40 = por %p38, %p39
    %p41 = scmp.ne.s32.totalorder %s33, %s36
    %p42 = scmp.eq.s32.totalorder %s9, 0
    %p43 = por %p41, %p42
    %p44 = scmp.ne.s32.totalorder %s33, %s36
    %p45 = scmp.eq.s32.totalorder %s14, 1
    %p46 = por %p44, %p45
    %p47 = scmp.ne.s32.totalorder %s36, %s37
    %p48 = scmp.eq.s32.totalorder %s14, 0
    %p49 = por %p47, %p48
    %p50 = scmp.ne.s32.totalorder %s36, %s37
    %p51 = scmp.eq.s32.totalorder %s15, 1
    %p52 = por %p50, %p51
    %p54 = scmp.ne.s32.totalorder %s37, %s53
    %p55 = scmp.eq.s32.totalorder %s15, 0
    %p56 = por %p54, %p55
    %s58 = sadd.s32 %s57, 1
    %p61 = scmp.eq.s32.totalorder %s9, 1
    %p62 = scmp.ne.s32.totalorder %s57, %s59
    %p63 = scmp.eq.s32.totalorder %s9, 0
    %p64 = por %p62, %p63
    %p65 = scmp.ne.s32.totalorder %s57, %s59
    %p66 = scmp.eq.s32.totalorder %s14, 1
    %p67 = por %p65, %p66
    %p68 = scmp.ne.s32.totalorder %s59, %s60
    %p69 = scmp.eq.s32.totalorder %s14, 0
    %p70 = por %p68, %p69
    %p71 = scmp.ne.s32.totalorder %s59, %s60
    %p72 = scmp.eq.s32.totalorder %s15, 1
    %p73 = por %p71, %p72
    %p75 = scmp.ne.s32.totalorder %s60, %s74
    %p76 = scmp.eq.s32.totalorder %s15, 0
    %p77 = por %p75, %p76
    %s79 = sadd.s32 %s78, 1
    %p82 = scmp.eq.s32.totalorder %s9, 1
    %p83 = scmp.ne.s32.totalorder %s78, %s80
    %p84 = scmp.eq.s32.totalorder %s9, 0
    %p85 = por %p83, %p84
    %p86 = scmp.ne.s32.totalorder %s78, %s80
    %p87 = scmp.eq.s32.totalorder %s14, 1
    %p88 = por %p86, %p87
    %p89 = scmp.ne.s32.totalorder %s80, %s81
    %p90 = scmp.eq.s32.totalorder %s14, 0
    %p91 = por %p89, %p90
    %p92 = scmp.ne.s32.totalorder %s80, %s81
    %p93 = scmp.eq.s32.totalorder %s15, 1
    %p94 = por %p92, %p93
    %p96 = scmp.ne.s32.totalorder %s81, %s95
    %p97 = scmp.eq.s32.totalorder %s15, 0
    %p98 = por %p96, %p97
    %s99 = ssub.s32 %s16, %s28
    %s100 = ssub.s32 %s17, %s24
    %s101 = sor.u32 %s99, %s100
    %p102 = scmp.eq.s32.totalorder %s101, 0
    %s104 = sadd.s32 %s103, 1
    %s105 = scalar_select %p102, %s103, %s104
    %p108 = pneg %p102
    %p109 = scmp.eq.s32.totalorder %s9, 1
    %p110 = por %p108, %p109
    %p111 = scmp.ne.s32.totalorder %s103, %s106
    %p112 = scmp.eq.s32.totalorder %s9, 0
    %p113 = por %p111, %p112
    %p114 = scmp.ne.s32.totalorder %s103, %s106
    %p115 = scmp.eq.s32.totalorder %s14, 1
    %p116 = por %p114, %p115
    %p117 = scmp.ne.s32.totalorder %s106, %s107
    %p118 = scmp.eq.s32.totalorder %s14, 0
    %p119 = por %p117, %p118
    %p120 = scmp.ne.s32.totalorder %s106, %s107
    %p121 = scmp.eq.s32.totalorder %s15, 1
    %p122 = por %p120, %p121
    %p124 = scmp.ne.s32.totalorder %s107, %s123
    %p125 = scmp.eq.s32.totalorder %s15, 0
    %p126 = por %p124, %p125
    %p127 = scmp.le.s32.totalorder 1, %s9
    %p128 = scmp.lt.s32.totalorder %s9, 3
    %p129 = pnand %p127, %p128
    %p130 = pneg %p129
    // Predicated region
    $region9: #{decoder_block_forward.3} parent=5 // pred_check
      _
    $region10: #{decoder_block_forward.3} parent=5 // pred_check_branch
      %132 = sbr.rel (%p129) target = $region12
    $region11: #{decoder_block_forward.3} parent=5 // pred_region
      %s133 = ssub.s32 %s9, 1
      // Predicated region
      $region13: #{decoder_block_forward.3} parent=11 // pred_check
        %p134 = pneg %p70
      $region14: #{decoder_block_forward.3} parent=11 // pred_check_branch
        %136 = sbr.rel (%p134) target = $region16
      $region15: #{decoder_block_forward.3} parent=11 // pred_region
        _
      $region16: #{decoder_block_forward.3} parent=11 // pred_fallthru
        _
      // Predicated region
      $region17: #{decoder_block_forward.3} parent=11 // pred_check
        %p137 = pneg %p91
      $region18: #{decoder_block_forward.3} parent=11 // pred_check_branch
        %139 = sbr.rel (%p137) target = $region20
      $region19: #{decoder_block_forward.3} parent=11 // pred_region
        _
      $region20: #{decoder_block_forward.3} parent=11 // pred_fallthru
        _
    $region12: #{decoder_block_forward.3} parent=5 // pred_fallthru
      _
    %p140 = scmp.lt.s32.totalorder %s9, 2
    // Predicated region
    $region21: #{decoder_block_forward.3} parent=5 // pred_check
      %p141 = pneg %p140
    $region22: #{decoder_block_forward.3} parent=5 // pred_check_branch
      %143 = sbr.rel (%p141) target = $region24
    $region23: #{decoder_block_forward.3} parent=5 // pred_region
      // Predicated region
      $region25: #{decoder_block_forward.3} parent=23 // pred_check
        %p144 = pneg %p43
      $region26: #{decoder_block_forward.3} parent=23 // pred_check_branch
        %146 = sbr.rel (%p144) target = $region28
      $region27: #{decoder_block_forward.3} parent=23 // pred_region
        %s147 = smul.u32 8, %s17
        %p148 = scmp.lt.s32.totalorder %s16, 1
        %s149 = scalar_select %p148, %s16, 1
        %p150 = scmp.lt.s32.totalorder %s147, 7
        %s151 = scalar_select %p150, %s147, 7
        %s152 = smul.addr %s151, 4
        %s153 = smul.addr %s149, 32
        %s154 = sadd.s32 %s152, %s153
        %s155 = smul.addr %s154, 4
        %s156 = scalar_lea.vmem %s0, %s155
        %s157 = smul.u32 8, %s17
      $region28: #{decoder_block_forward.3} parent=23 // pred_fallthru
        _
    $region24: #{decoder_block_forward.3} parent=5 // pred_fallthru
      _
    %p158 = scmp.le.s32.totalorder 1, %s9
    %p159 = scmp.lt.s32.totalorder %s9, 3
    %p160 = pnand %p158, %p159
    %p161 = pneg %p160
    // Predicated region
    $region29: #{decoder_block_forward.3} parent=5 // pred_check
      _
    $region30: #{decoder_block_forward.3} parent=5 // pred_check_branch
      %163 = sbr.rel (%p160) target = $region32
    $region31: #{decoder_block_forward.3} parent=5 // pred_region
      %s164 = ssub.s32 %s9, 1
      %s165 = smul.u32 8, %s19
      %p166 = scmp.lt.s32.totalorder %s18, 1
      %s167 = scalar_select %p166, %s18, 1
      %p168 = scmp.lt.s32.totalorder %s165, 7
      %s169 = scalar_select %p168, %s165, 7
      %s170 = smul.addr %s169, 4
      %s171 = smul.addr %s167, 32
      %s172 = sadd.s32 %s170, %s171
      %s173 = smul.addr %s172, 4
      %s174 = scalar_lea.vmem %s0, %s173
      %p175 = pneg %p49
      %p176 = pneg %p46
      %p177 = pneg %p70
      %p178 = pneg %p67
      %p179 = pneg %p91
      %p180 = pneg %p88
      %p181 = pneg %p119
      %p182 = pneg %p116
      %s183 = smul.u32 8, %s19
      %p184 = scmp.lt.s32.totalorder %s18, 1
      %s185 = scalar_select %p184, %s18, 1
      %p186 = scmp.lt.s32.totalorder %s183, 7
      %s187 = scalar_select %p186, %s183, 7
      %s188 = smul.addr %s187, 4
      %s189 = smul.addr %s185, 32
      %s190 = sadd.s32 %s188, %s189
      %s191 = smul.addr %s190, 8
      %s192 = scalar_lea.vmem %s3, %s191
      %s193 = smul.u32 8, %s19
      %p194 = scmp.lt.s32.totalorder %s18, 1
      %s195 = scalar_select %p194, %s18, 1
      %p196 = scmp.lt.s32.totalorder %s193, 7
      %s197 = scalar_select %p196, %s193, 7
      %s198 = smul.addr %s197, 4
      %s199 = smul.addr %s195, 32
      %s200 = sadd.s32 %s198, %s199
      %s201 = smul.addr %s200, 4
      %s202 = scalar_lea.vmem %s0, %s201
      %s203 = smul.u32 8, %s19
      %s204 = smul.u32 8, %s19
      %p205 = scmp.lt.s32.totalorder %s18, 1
      %s206 = scalar_select %p205, %s18, 1
      %p207 = scmp.lt.s32.totalorder %s204, 7
      %s208 = scalar_select %p207, %s204, 7
      %s209 = smul.addr %s208, 4
      %s210 = smul.addr %s206, 32
      %s211 = sadd.s32 %s209, %s210
      %s212 = smul.addr %s211, 8
      %s213 = scalar_lea.vmem %s3, %s212
      %s214 = smul.u32 8, %s19
      %v215 = vld [vmem:[%s202] sm:$0xff]
      %v216 = vld [vmem:[%s202 + $0x8] sm:$0xff]
      %v217 = vld [vmem:[%s202 + $0x10] sm:$0xff]
      %v218 = vld [vmem:[%s202 + $0x18] sm:$0xff]
      %v219 = vld [vmem:[%s202 + $0x20] sm:$0xff]
      %v220 = vld [vmem:[%s202 + $0x28] sm:$0xff]
      %v221 = vld [vmem:[%s202 + $0x30] sm:$0xff]
      %v222 = vld [vmem:[%s202 + $0x38] sm:$0xff]
      %v223 = vld [vmem:[%s202 + $0x40] sm:$0xff]
      %v224 = vld [vmem:[%s202 + $0x48] sm:$0xff]
      %v225 = vld [vmem:[%s202 + $0x50] sm:$0xff]
      %v226 = vld [vmem:[%s202 + $0x58] sm:$0xff]
      %v227 = vld [vmem:[%s202 + $0x60] sm:$0xff]
      %v228 = vld [vmem:[%s202 + $0x68] sm:$0xff]
      %v229 = vld [vmem:[%s202 + $0x70] sm:$0xff]
      %v230 = vld [vmem:[%s202 + $0x78] sm:$0xff]
      %v231 = vunpack.c.l.bf16 %v215
      %v232 = vunpack.c.h.bf16 %v215
      %v233 = vunpack.c.l.bf16 %v216
      %v234 = vunpack.c.h.bf16 %v216
      %v235 = vunpack.c.l.bf16 %v217
      %v236 = vunpack.c.h.bf16 %v217
      %v237 = vunpack.c.l.bf16 %v218
      %v238 = vunpack.c.h.bf16 %v218
      %v239 = vunpack.c.l.bf16 %v219
      %v240 = vunpack.c.h.bf16 %v219
      %v241 = vunpack.c.l.bf16 %v220
      %v242 = vunpack.c.h.bf16 %v220
      %v243 = vunpack.c.l.bf16 %v221
      %v244 = vunpack.c.h.bf16 %v221
      %v245 = vunpack.c.l.bf16 %v222
      %v246 = vunpack.c.h.bf16 %v222
      %v247 = vunpack.c.l.bf16 %v223
      %v248 = vunpack.c.h.bf16 %v223
      %v249 = vunpack.c.l.bf16 %v224
      %v250 = vunpack.c.h.bf16 %v224
      %v251 = vunpack.c.l.bf16 %v225
      %v252 = vunpack.c.h.bf16 %v225
      %v253 = vunpack.c.l.bf16 %v226
      %v254 = vunpack.c.h.bf16 %v226
      %v255 = vunpack.c.l.bf16 %v227
      %v256 = vunpack.c.h.bf16 %v227
      %v257 = vunpack.c.l.bf16 %v228
      %v258 = vunpack.c.h.bf16 %v228
      %v259 = vunpack.c.l.bf16 %v229
      %v260 = vunpack.c.h.bf16 %v229
      %v261 = vunpack.c.l.bf16 %v230
      %v262 = vunpack.c.h.bf16 %v230
      %v263 = vld [vmem:[%s1] sm:$0x3]
      %v265 = vperm.slane %v263, 0
      %v266 = vperm.slane %v263, 1
      %v269 = vmul.f32 %v231, %v265
      %v270 = vmul.f32 %v232, %v266
      %v271 = vmul.f32 %v233, %v265
      %v272 = vmul.f32 %v234, %v266
      %v273 = vmul.f32 %v235, %v265
      %v274 = vmul.f32 %v236, %v266
      %v275 = vmul.f32 %v237, %v265
      %v276 = vmul.f32 %v238, %v266
      %v277 = vmul.f32 %v239, %v265
      %v278 = vmul.f32 %v240, %v266
      %v279 = vmul.f32 %v241, %v265
      %v280 = vmul.f32 %v242, %v266
      %v281 = vmul.f32 %v243, %v265
      %v282 = vmul.f32 %v244, %v266
      %v283 = vmul.f32 %v245, %v265
      %v284 = vmul.f32 %v246, %v266
      %v285 = vmul.f32 %v247, %v265
      %v286 = vmul.f32 %v248, %v266
      %v287 = vmul.f32 %v249, %v265
      %v288 = vmul.f32 %v250, %v266
      %v289 = vmul.f32 %v251, %v265
      %v290 = vmul.f32 %v252, %v266
      %v291 = vmul.f32 %v253, %v265
      %v292 = vmul.f32 %v254, %v266
      %v293 = vmul.f32 %v255, %v265
      %v294 = vmul.f32 %v256, %v266
      %v295 = vmul.f32 %v257, %v265
      %v296 = vmul.f32 %v258, %v266
      %v297 = vmul.f32 %v259, %v265
      %v298 = vmul.f32 %v260, %v266
      %v299 = vmul.f32 %v261, %v265
      %v300 = vmul.f32 %v262, %v266
      %v301 = vld [vmem:[%s2] sm:$0x3]
      %v303 = vperm.slane %v301, 0
      %v304 = vperm.slane %v301, 1
      %v307 = vadd.f32 %v269, %v303
      %v308 = vadd.f32 %v270, %v304
      %v309 = vadd.f32 %v271, %v303
      %v310 = vadd.f32 %v272, %v304
      %v311 = vadd.f32 %v273, %v303
      %v312 = vadd.f32 %v274, %v304
      %v313 = vadd.f32 %v275, %v303
      %v314 = vadd.f32 %v276, %v304
      %v315 = vadd.f32 %v277, %v303
      %v316 = vadd.f32 %v278, %v304
      %v317 = vadd.f32 %v279, %v303
      %v318 = vadd.f32 %v280, %v304
      %v319 = vadd.f32 %v281, %v303
      %v320 = vadd.f32 %v282, %v304
      %v321 = vadd.f32 %v283, %v303
      %v322 = vadd.f32 %v284, %v304
      %v323 = vadd.f32 %v285, %v303
      %v324 = vadd.f32 %v286, %v304
      %v325 = vadd.f32 %v287, %v303
      %v326 = vadd.f32 %v288, %v304
      %v327 = vadd.f32 %v289, %v303
      %v328 = vadd.f32 %v290, %v304
      %v329 = vadd.f32 %v291, %v303
      %v330 = vadd.f32 %v292, %v304
      %v331 = vadd.f32 %v293, %v303
      %v332 = vadd.f32 %v294, %v304
      %v333 = vadd.f32 %v295, %v303
      %v334 = vadd.f32 %v296, %v304
      %v335 = vadd.f32 %v297, %v303
      %v336 = vadd.f32 %v298, %v304
      %v337 = vadd.f32 %v299, %v303
      %v338 = vadd.f32 %v300, %v304
      %339 = vst [vmem:[%s213] sm:$0xff] %v307
      %340 = vst [vmem:[%s213 + $0x8] sm:$0xff] %v308
      %341 = vst [vmem:[%s213 + $0x10] sm:$0xff] %v309
      %342 = vst [vmem:[%s213 + $0x18] sm:$0xff] %v310
      %343 = vst [vmem:[%s213 + $0x20] sm:$0xff] %v311
      %344 = vst [vmem:[%s213 + $0x28] sm:$0xff] %v312
      %345 = vst [vmem:[%s213 + $0x30] sm:$0xff] %v313
      %346 = vst [vmem:[%s213 + $0x38] sm:$0xff] %v314
      %347 = vst [vmem:[%s213 + $0x40] sm:$0xff] %v315
      %348 = vst [vmem:[%s213 + $0x48] sm:$0xff] %v316
      %349 = vst [vmem:[%s213 + $0x50] sm:$0xff] %v317
      %350 = vst [vmem:[%s213 + $0x58] sm:$0xff] %v318
      %351 = vst [vmem:[%s213 + $0x60] sm:$0xff] %v319
      %352 = vst [vmem:[%s213 + $0x68] sm:$0xff] %v320
      %353 = vst [vmem:[%s213 + $0x70] sm:$0xff] %v321
      %354 = vst [vmem:[%s213 + $0x78] sm:$0xff] %v322
      %355 = vst [vmem:[%s213 + $0x80] sm:$0xff] %v323
      %356 = vst [vmem:[%s213 + $0x88] sm:$0xff] %v324
      %357 = vst [vmem:[%s213 + $0x90] sm:$0xff] %v325
      %358 = vst [vmem:[%s213 + $0x98] sm:$0xff] %v326
      %359 = vst [vmem:[%s213 + $0xa0] sm:$0xff] %v327
      %360 = vst [vmem:[%s213 + $0xa8] sm:$0xff] %v328
      %361 = vst [vmem:[%s213 + $0xb0] sm:$0xff] %v329
      %362 = vst [vmem:[%s213 + $0xb8] sm:$0xff] %v330
      %363 = vst [vmem:[%s213 + $0xc0] sm:$0xff] %v331
      %364 = vst [vmem:[%s213 + $0xc8] sm:$0xff] %v332
      %365 = vst [vmem:[%s213 + $0xd0] sm:$0xff] %v333
      %366 = vst [vmem:[%s213 + $0xd8] sm:$0xff] %v334
      %367 = vst [vmem:[%s213 + $0xe0] sm:$0xff] %v335
      %368 = vst [vmem:[%s213 + $0xe8] sm:$0xff] %v336
      %369 = vst [vmem:[%s213 + $0xf0] sm:$0xff] %v337
      %370 = vst [vmem:[%s213 + $0xf8] sm:$0xff] %v338
      %s371 = smul.u32 8, %s19
      %p372 = scmp.lt.s32.totalorder %s18, 1
      %s373 = scalar_select %p372, %s18, 1
      %p374 = scmp.lt.s32.totalorder %s371, 7
      %s375 = scalar_select %p374, %s371, 7
      %s376 = smul.addr %s375, 4
      %s377 = smul.addr %s373, 32
      %s378 = sadd.s32 %s376, %s377
      %s379 = smul.addr %s378, 8
      %s380 = scalar_lea.vmem %s3, %s379
      // Predicated region
      $region33: #{decoder_block_forward.3} parent=31 // pred_check
        %p381 = pneg %p116
      $region34: #{decoder_block_forward.3} parent=31 // pred_check_branch
        %383 = sbr.rel (%p381) target = $region36
      $region35: #{decoder_block_forward.3} parent=31 // pred_region
        %s384 = smul.u32 8, %s19
      $region36: #{decoder_block_forward.3} parent=31 // pred_fallthru
        _
    $region32: #{decoder_block_forward.3} parent=5 // pred_fallthru
      _
    %p385 = scmp.le.s32.totalorder 2, %s9
    // Predicated region
    $region37: #{decoder_block_forward.3} parent=5 // pred_check
      %p386 = pneg %p385
    $region38: #{decoder_block_forward.3} parent=5 // pred_check_branch
      %388 = sbr.rel (%p386) target = $region40
    $region39: #{decoder_block_forward.3} parent=5 // pred_region
      %s389 = ssub.s32 %s9, 2
      // Predicated region
      $region41: #{decoder_block_forward.3} parent=39 // pred_check
        %p390 = pneg %p122
      $region42: #{decoder_block_forward.3} parent=39 // pred_check_branch
        %392 = sbr.rel (%p390) target = $region44
      $region43: #{decoder_block_forward.3} parent=39 // pred_region
        %s393 = smul.u32 8, %s21
        %p394 = scmp.lt.s32.totalorder %s20, 1
        %s395 = scalar_select %p394, %s20, 1
        %p396 = scmp.lt.s32.totalorder %s393, 7
        %s397 = scalar_select %p396, %s393, 7
        %s398 = smul.addr %s397, 4
        %s399 = smul.addr %s395, 32
        %s400 = sadd.s32 %s398, %s399
        %s401 = smul.addr %s400, 8
        %s402 = scalar_lea.vmem %s3, %s401
      $region44: #{decoder_block_forward.3} parent=39 // pred_fallthru
        _
    $region40: #{decoder_block_forward.3} parent=5 // pred_fallthru
      _
  $region6: #{decoder_block_forward.3} parent=0 // loop_footer
    %s13 = sadd.s32 1, %s9
  $region7: #{decoder_block_forward.3} parent=0 // loop_footer_branch
    %8 = sbr.rel target = $region3
  $region8: #{decoder_block_forward.3} parent=0 // loop_exit
    _

// kernel: decoder_block_forward.2
$region0: #{decoder_block_forward.2}
  #allocation0 [shape = 'u32[]', space=smem, size = 0x4, offset = 0x4, fixed_abs, tag = 'smem constant byte address 0x4 - core index']
  #allocation1 [shape = 'u32[72,128]{1,0:T(1,128)}', space=vmem, size = 0x9000, scoped, tag = 'internal scratch']
  %s0 = inlined_call_operand.vmem [shape: bf16[2,1,10,10,8], index: 0, kind: input, shape index: {}]
  %s1 = inlined_call_operand.vmem [shape: bf16[16,8,128], index: 1, kind: input, shape index: {}]
  %s2 = inlined_call_operand.vmem [shape: f32[1,128], index: 2, kind: input, shape index: {}]
  %s3 = inlined_call_operand.vmem [shape: bf16[2,8,2,8,256], index: 3, kind: input, shape index: {}]
  %s4 = inlined_call_operand.vmem [shape: bf16[2,8,2,8,256], index: 4, kind: output, shape index: {0}]
  %s5 = inlined_call_operand.vmem [shape: f32[2,1,4,128], index: 5, kind: output, shape index: {1}]
  %s6 = inlined_call_operand.vmem [shape: f32[2,1,4,128], index: 6, kind: output, shape index: {2}]
  %7 = xla_tuple %s4, %s5, %s6
  %s8 = sld [smem:[#allocation0]]
  $region65: #{decoder_block_forward.2} parent=0
    _
  %s10 = ssub.s32 1, %s8
  %s11 = scalar_select 0, %s10, %s8
  loop: start=0, step=1, limit=4
  $region2: #{decoder_block_forward.2} parent=0 // loop_pre_header
    _
  $region3: #{decoder_block_forward.2} parent=0 // loop_header
    %s13 = sphi 0, %s17
    %p14 = scmp.ge.s32.totalorder %s13, 4
    %s20 = sphi 0, %s32
    %s21 = sphi 0, %s28
    %s22 = sphi 0, %s20
    %s23 = sphi 0, %s21
    %s24 = sphi 0, %s22
    %s25 = sphi 0, %s23
    %s37 = sphi 0, %s39
    %s40 = sphi 0, %s37
    %s41 = sphi 0, %s40
    %s57 = sphi 0, %s41
    %s61 = sphi 0, %s61
    %s63 = sphi 0, %s61
    %s64 = sphi 0, %s63
    %s78 = sphi 0, %s64
    %s82 = sphi 0, %s82
    %s84 = sphi 0, %s82
    %s85 = sphi 0, %s84
    %s99 = sphi 0, %s85
    %s107 = sphi 0, %s109
    %s110 = sphi 0, %s107
    %s111 = sphi 0, %s110
    %s127 = sphi 0, %s111
    %s135 = sphi 0, %s137
    %s138 = sphi 0, %s135
    %s139 = sphi 0, %s138
    %s155 = sphi 0, %s139
    %s163 = sphi 0, %s165
    %s166 = sphi 0, %s163
    %s167 = sphi 0, %s166
    %s183 = sphi 0, %s167
    %s191 = sphi 0, %s193
    %s194 = sphi 0, %s191
    %s195 = sphi 0, %s194
    %s211 = sphi 0, %s195
  $region4: #{decoder_block_forward.2} parent=0 // loop_header_branch
    %16 = sbr.rel (%p14) target = $region8
  $region5: #{decoder_block_forward.2} parent=0 // loop_body
    %s18 = ssub.s32 %s13, 1
    %s19 = ssub.s32 %s13, 2
    %s26 = sadd.s32 1, %s21
    %p27 = scmp.ge.s32.totalorder %s26, 1
    %s28 = scalar_select %p27, 0, %s26
    %s29 = sadd.s32 1, %s20
    %s30 = scalar_select %p27, %s29, %s20
    %p31 = scmp.ge.s32.totalorder %s30, 2
    %s32 = scalar_select %p31, 0, %s30
    %s33 = ssub.s32 %s20, %s32
    %s34 = ssub.s32 %s21, %s28
    %s35 = sor.u32 %s33, %s34
    %p36 = scmp.eq.s32.totalorder %s35, 0
    %s38 = sadd.s32 %s37, 1
    %s39 = scalar_select %p36, %s37, %s38
    %p42 = pneg %p36
    %p43 = scmp.eq.s32.totalorder %s13, 1
    %p44 = por %p42, %p43
    %p45 = scmp.ne.s32.totalorder %s37, %s40
    %p46 = scmp.eq.s32.totalorder %s13, 0
    %p47 = por %p45, %p46
    %p48 = scmp.ne.s32.totalorder %s37, %s40
    %p49 = scmp.eq.s32.totalorder %s18, 1
    %p50 = por %p48, %p49
    %p51 = scmp.ne.s32.totalorder %s40, %s41
    %p52 = scmp.eq.s32.totalorder %s18, 0
    %p53 = por %p51, %p52
    %p54 = scmp.ne.s32.totalorder %s40, %s41
    %p55 = scmp.eq.s32.totalorder %s19, 1
    %p56 = por %p54, %p55
    %p58 = scmp.ne.s32.totalorder %s41, %s57
    %p59 = scmp.eq.s32.totalorder %s19, 0
    %p60 = por %p58, %p59
    %s62 = sadd.s32 %s61, 1
    %p65 = scmp.eq.s32.totalorder %s13, 1
    %p66 = scmp.ne.s32.totalorder %s61, %s63
    %p67 = scmp.eq.s32.totalorder %s13, 0
    %p68 = por %p66, %p67
    %p69 = scmp.ne.s32.totalorder %s61, %s63
    %p70 = scmp.eq.s32.totalorder %s18, 1
    %p71 = por %p69, %p70
    %p72 = scmp.ne.s32.totalorder %s63, %s64
    %p73 = scmp.eq.s32.totalorder %s18, 0
    %p74 = por %p72, %p73
    %p75 = scmp.ne.s32.totalorder %s63, %s64
    %p76 = scmp.eq.s32.totalorder %s19, 1
    %p77 = por %p75, %p76
    %p79 = scmp.ne.s32.totalorder %s64, %s78
    %p80 = scmp.eq.s32.totalorder %s19, 0
    %p81 = por %p79, %p80
    %s83 = sadd.s32 %s82, 1
    %p86 = scmp.eq.s32.totalorder %s13, 1
    %p87 = scmp.ne.s32.totalorder %s82, %s84
    %p88 = scmp.eq.s32.totalorder %s13, 0
    %p89 = por %p87, %p88
    %p90 = scmp.ne.s32.totalorder %s82, %s84
    %p91 = scmp.eq.s32.totalorder %s18, 1
    %p92 = por %p90, %p91
    %p93 = scmp.ne.s32.totalorder %s84, %s85
    %p94 = scmp.eq.s32.totalorder %s18, 0
    %p95 = por %p93, %p94
    %p96 = scmp.ne.s32.totalorder %s84, %s85
    %p97 = scmp.eq.s32.totalorder %s19, 1
    %p98 = por %p96, %p97
    %p100 = scmp.ne.s32.totalorder %s85, %s99
    %p101 = scmp.eq.s32.totalorder %s19, 0
    %p102 = por %p100, %p101
    %s103 = ssub.s32 %s20, %s32
    %s104 = ssub.s32 %s21, %s28
    %s105 = sor.u32 %s103, %s104
    %p106 = scmp.eq.s32.totalorder %s105, 0
    %s108 = sadd.s32 %s107, 1
    %s109 = scalar_select %p106, %s107, %s108
    %p112 = pneg %p106
    %p113 = scmp.eq.s32.totalorder %s13, 1
    %p114 = por %p112, %p113
    %p115 = scmp.ne.s32.totalorder %s107, %s110
    %p116 = scmp.eq.s32.totalorder %s13, 0
    %p117 = por %p115, %p116
    %p118 = scmp.ne.s32.totalorder %s107, %s110
    %p119 = scmp.eq.s32.totalorder %s18, 1
    %p120 = por %p118, %p119
    %p121 = scmp.ne.s32.totalorder %s110, %s111
    %p122 = scmp.eq.s32.totalorder %s18, 0
    %p123 = por %p121, %p122
    %p124 = scmp.ne.s32.totalorder %s110, %s111
    %p125 = scmp.eq.s32.totalorder %s19, 1
    %p126 = por %p124, %p125
    %p128 = scmp.ne.s32.totalorder %s111, %s127
    %p129 = scmp.eq.s32.totalorder %s19, 0
    %p130 = por %p128, %p129
    %s131 = ssub.s32 %s20, %s32
    %s132 = ssub.s32 %s21, %s28
    %s133 = sor.u32 %s131, %s132
    %p134 = scmp.eq.s32.totalorder %s133, 0
    %s136 = sadd.s32 %s135, 1
    %s137 = scalar_select %p134, %s135, %s136
    %p140 = pneg %p134
    %p141 = scmp.eq.s32.totalorder %s13, 1
    %p142 = por %p140, %p141
    %p143 = scmp.ne.s32.totalorder %s135, %s138
    %p144 = scmp.eq.s32.totalorder %s13, 0
    %p145 = por %p143, %p144
    %p146 = scmp.ne.s32.totalorder %s135, %s138
    %p147 = scmp.eq.s32.totalorder %s18, 1
    %p148 = por %p146, %p147
    %p149 = scmp.ne.s32.totalorder %s138, %s139
    %p150 = scmp.eq.s32.totalorder %s18, 0
    %p151 = por %p149, %p150
    %p152 = scmp.ne.s32.totalorder %s138, %s139
    %p153 = scmp.eq.s32.totalorder %s19, 1
    %p154 = por %p152, %p153
    %p156 = scmp.ne.s32.totalorder %s139, %s155
    %p157 = scmp.eq.s32.totalorder %s19, 0
    %p158 = por %p156, %p157
    %s159 = ssub.s32 %s20, %s32
    %s160 = ssub.s32 %s21, %s28
    %s161 = sor.u32 %s159, %s160
    %p162 = scmp.eq.s32.totalorder %s161, 0
    %s164 = sadd.s32 %s163, 1
    %s165 = scalar_select %p162, %s163, %s164
    %p168 = pneg %p162
    %p169 = scmp.eq.s32.totalorder %s13, 1
    %p170 = por %p168, %p169
    %p171 = scmp.ne.s32.totalorder %s163, %s166
    %p172 = scmp.eq.s32.totalorder %s13, 0
    %p173 = por %p171, %p172
    %p174 = scmp.ne.s32.totalorder %s163, %s166
    %p175 = scmp.eq.s32.totalorder %s18, 1
    %p176 = por %p174, %p175
    %p177 = scmp.ne.s32.totalorder %s166, %s167
    %p178 = scmp.eq.s32.totalorder %s18, 0
    %p179 = por %p177, %p178
    %p180 = scmp.ne.s32.totalorder %s166, %s167
    %p181 = scmp.eq.s32.totalorder %s19, 1
    %p182 = por %p180, %p181
    %p184 = scmp.ne.s32.totalorder %s167, %s183
    %p185 = scmp.eq.s32.totalorder %s19, 0
    %p186 = por %p184, %p185
    %s187 = ssub.s32 %s20, %s32
    %s188 = ssub.s32 %s21, %s28
    %s189 = sor.u32 %s187, %s188
    %p190 = scmp.eq.s32.totalorder %s189, 0
    %s192 = sadd.s32 %s191, 1
    %s193 = scalar_select %p190, %s191, %s192
    %p196 = pneg %p190
    %p197 = scmp.eq.s32.totalorder %s13, 1
    %p198 = por %p196, %p197
    %p199 = scmp.ne.s32.totalorder %s191, %s194
    %p200 = scmp.eq.s32.totalorder %s13, 0
    %p201 = por %p199, %p200
    %p202 = scmp.ne.s32.totalorder %s191, %s194
    %p203 = scmp.eq.s32.totalorder %s18, 1
    %p204 = por %p202, %p203
    %p205 = scmp.ne.s32.totalorder %s194, %s195
    %p206 = scmp.eq.s32.totalorder %s18, 0
    %p207 = por %p205, %p206
    %p208 = scmp.ne.s32.totalorder %s194, %s195
    %p209 = scmp.eq.s32.totalorder %s19, 1
    %p210 = por %p208, %p209
    %p212 = scmp.ne.s32.totalorder %s195, %s211
    %p213 = scmp.eq.s32.totalorder %s19, 0
    %p214 = por %p212, %p213
    %p215 = scmp.le.s32.totalorder 1, %s13
    %p216 = scmp.lt.s32.totalorder %s13, 3
    %p217 = pnand %p215, %p216
    %p218 = pneg %p217
    // Predicated region
    $region9: #{decoder_block_forward.2} parent=5 // pred_check
      _
    $region10: #{decoder_block_forward.2} parent=5 // pred_check_branch
      %220 = sbr.rel (%p217) target = $region12
    $region11: #{decoder_block_forward.2} parent=5 // pred_region
      %s221 = ssub.s32 %s13, 1
      // Predicated region
      $region13: #{decoder_block_forward.2} parent=11 // pred_check
        %p222 = pneg %p74
      $region14: #{decoder_block_forward.2} parent=11 // pred_check_branch
        %224 = sbr.rel (%p222) target = $region16
      $region15: #{decoder_block_forward.2} parent=11 // pred_region
        _
      $region16: #{decoder_block_forward.2} parent=11 // pred_fallthru
        _
      // Predicated region
      $region17: #{decoder_block_forward.2} parent=11 // pred_check
        %p225 = pneg %p95
      $region18: #{decoder_block_forward.2} parent=11 // pred_check_branch
        %227 = sbr.rel (%p225) target = $region20
      $region19: #{decoder_block_forward.2} parent=11 // pred_region
        _
      $region20: #{decoder_block_forward.2} parent=11 // pred_fallthru
        _
    $region12: #{decoder_block_forward.2} parent=5 // pred_fallthru
      _
    %p228 = scmp.lt.s32.totalorder %s13, 2
    // Predicated region
    $region21: #{decoder_block_forward.2} parent=5 // pred_check
      %p229 = pneg %p228
    $region22: #{decoder_block_forward.2} parent=5 // pred_check_branch
      %231 = sbr.rel (%p229) target = $region24
    $region23: #{decoder_block_forward.2} parent=5 // pred_region
      // Predicated region
      $region25: #{decoder_block_forward.2} parent=23 // pred_check
        %p232 = pneg %p47
      $region26: #{decoder_block_forward.2} parent=23 // pred_check_branch
        %234 = sbr.rel (%p232) target = $region28
      $region27: #{decoder_block_forward.2} parent=23 // pred_region
        %p235 = scmp.lt.s32.totalorder %s20, 1
        %s236 = scalar_select %p235, %s20, 1
        %p237 = scmp.lt.s32.totalorder %s21, 0
        %s238 = scalar_select %p237, %s21, 0
        %s239 = smul.addr %s238, 20
        %s240 = smul.addr %s236, 20
        %s241 = sadd.s32 %s239, %s240
        %s242 = smul.addr %s241, 4
        %s243 = scalar_lea.vmem %s0, %s242
      $region28: #{decoder_block_forward.2} parent=23 // pred_fallthru
        _
      // Predicated region
      $region29: #{decoder_block_forward.2} parent=23 // pred_check
        %p244 = pneg %p117
      $region30: #{decoder_block_forward.2} parent=23 // pred_check_branch
        %246 = sbr.rel (%p244) target = $region32
      $region31: #{decoder_block_forward.2} parent=23 // pred_region
        %s247 = smul.u32 8, %s21
        %p248 = scmp.lt.s32.totalorder %s20, 1
        %s249 = scalar_select %p248, %s20, 1
        %p250 = scmp.lt.s32.totalorder %s247, 7
        %s251 = scalar_select %p250, %s247, 7
        %s252 = smul.addr %s251, 4
        %s253 = smul.addr %s249, 32
        %s254 = sadd.s32 %s252, %s253
        %s255 = smul.addr %s254, 4
        %s256 = scalar_lea.vmem %s3, %s255
        %s257 = smul.u32 8, %s21
      $region32: #{decoder_block_forward.2} parent=23 // pred_fallthru
        _
    $region24: #{decoder_block_forward.2} parent=5 // pred_fallthru
      _
    %p258 = scmp.le.s32.totalorder 1, %s13
    %p259 = scmp.lt.s32.totalorder %s13, 3
    %p260 = pnand %p258, %p259
    %p261 = pneg %p260
    // Predicated region
    $region33: #{decoder_block_forward.2} parent=5 // pred_check
      _
    $region34: #{decoder_block_forward.2} parent=5 // pred_check_branch
      %263 = sbr.rel (%p260) target = $region36
    $region35: #{decoder_block_forward.2} parent=5 // pred_region
      %s264 = ssub.s32 %s13, 1
      %p265 = scmp.lt.s32.totalorder %s22, 1
      %s266 = scalar_select %p265, %s22, 1
      %p267 = scmp.lt.s32.totalorder %s23, 0
      %s268 = scalar_select %p267, %s23, 0
      %s269 = smul.addr %s268, 20
      %s270 = smul.addr %s266, 20
      %s271 = sadd.s32 %s269, %s270
      %s272 = smul.addr %s271, 4
      %s273 = scalar_lea.vmem %s0, %s272
      %p274 = pneg %p53
      %p275 = pneg %p50
      %p276 = pneg %p74
      %p277 = pneg %p71
      %p278 = pneg %p95
      %p279 = pneg %p92
      %s280 = smul.u32 8, %s23
      %p281 = scmp.lt.s32.totalorder %s22, 1
      %s282 = scalar_select %p281, %s22, 1
      %p283 = scmp.lt.s32.totalorder %s280, 7
      %s284 = scalar_select %p283, %s280, 7
      %s285 = smul.addr %s284, 4
      %s286 = smul.addr %s282, 32
      %s287 = sadd.s32 %s285, %s286
      %s288 = smul.addr %s287, 4
      %s289 = scalar_lea.vmem %s3, %s288
      %p290 = pneg %p123
      %p291 = pneg %p120
      %p292 = pneg %p151
      %p293 = pneg %p148
      %s294 = smul.u32 8, %s23
      %p295 = scmp.lt.s32.totalorder %s22, 1
      %s296 = scalar_select %p295, %s22, 1
      %p297 = scmp.lt.s32.totalorder %s294, 7
      %s298 = scalar_select %p297, %s294, 7
      %s299 = smul.addr %s298, 4
      %s300 = smul.addr %s296, 32
      %s301 = sadd.s32 %s299, %s300
      %s302 = smul.addr %s301, 4
      %s303 = scalar_lea.vmem %s4, %s302
      %p304 = pneg %p179
      %p305 = pneg %p176
      %p306 = scmp.lt.s32.totalorder %s22, 1
      %s307 = scalar_select %p306, %s22, 1
      %p308 = scmp.lt.s32.totalorder %s23, 0
      %s309 = scalar_select %p308, %s23, 0
      %s310 = sadd.s32 %s309, %s307
      %s311 = smul.addr %s310, 4
      %s312 = scalar_lea.vmem %s5, %s311
      %p313 = pneg %p207
      %p314 = pneg %p204
      %p315 = scmp.lt.s32.totalorder %s22, 1
      %s316 = scalar_select %p315, %s22, 1
      %p317 = scmp.lt.s32.totalorder %s23, 0
      %s318 = scalar_select %p317, %s23, 0
      %s319 = sadd.s32 %s318, %s316
      %s320 = smul.addr %s319, 4
      %s321 = scalar_lea.vmem %s6, %s320
      %p322 = scmp.lt.s32.totalorder %s22, 1
      %s323 = scalar_select %p322, %s22, 1
      %p324 = scmp.lt.s32.totalorder %s23, 0
      %s325 = scalar_select %p324, %s23, 0
      %s326 = smul.addr %s325, 20
      %s327 = smul.addr %s323, 20
      %s328 = sadd.s32 %s326, %s327
      %s329 = smul.addr %s328, 4
      %s330 = scalar_lea.vmem %s0, %s329
      %s331 = smul.u32 8, %s23
      %p332 = scmp.lt.s32.totalorder %s22, 1
      %s333 = scalar_select %p332, %s22, 1
      %p334 = scmp.lt.s32.totalorder %s331, 7
      %s335 = scalar_select %p334, %s331, 7
      %s336 = smul.addr %s335, 4
      %s337 = smul.addr %s333, 32
      %s338 = sadd.s32 %s336, %s337
      %s339 = smul.addr %s338, 4
      %s340 = scalar_lea.vmem %s3, %s339
      %s341 = smul.u32 8, %s23
      %s342 = smul.u32 8, %s23
      %p343 = scmp.lt.s32.totalorder %s22, 1
      %s344 = scalar_select %p343, %s22, 1
      %p345 = scmp.lt.s32.totalorder %s342, 7
      %s346 = scalar_select %p345, %s342, 7
      %s347 = smul.addr %s346, 4
      %s348 = smul.addr %s344, 32
      %s349 = sadd.s32 %s347, %s348
      %s350 = smul.addr %s349, 4
      %s351 = scalar_lea.vmem %s4, %s350
      %s352 = smul.u32 8, %s23
      %p353 = scmp.lt.s32.totalorder %s22, 1
      %s354 = scalar_select %p353, %s22, 1
      %p355 = scmp.lt.s32.totalorder %s23, 0
      %s356 = scalar_select %p355, %s23, 0
      %s357 = sadd.s32 %s356, %s354
      %s358 = smul.addr %s357, 4
      %s359 = scalar_lea.vmem %s5, %s358
      %p360 = scmp.lt.s32.totalorder %s22, 1
      %s361 = scalar_select %p360, %s22, 1
      %p362 = scmp.lt.s32.totalorder %s23, 0
      %s363 = scalar_select %p362, %s23, 0
      %s364 = sadd.s32 %s363, %s361
      %s365 = smul.addr %s364, 4
      %s366 = scalar_lea.vmem %s6, %s365
      %s368 = smul.u32 %s23, 8
      %s369 = ssub.s32 8, %s368
      %p370 = scmp.lt.s32.totalorder %s369, 8
      %s371 = scalar_select %p370, %s369, 8
      %s372 = smul.u32 %s371, 8
      %s373 = scvt.s32.f32 %s372
      %v374 = vstv %s371
      %vm375 = vcmp.gt.s32.totalorder %v374, 0
      %vm376 = vcmp.gt.s32.totalorder %v374, 1
      %vm377 = vcmp.gt.s32.totalorder %v374, 2
      %vm378 = vcmp.gt.s32.totalorder %v374, 3
      %vm379 = vcmp.gt.s32.totalorder %v374, 4
      %vm380 = vcmp.gt.s32.totalorder %v374, 5
      %vm381 = vcmp.gt.s32.totalorder %v374, 6
      %vm382 = vcmp.gt.s32.totalorder %v374, 7
      %v383 = vld [vmem:[%s2] sm:$0x1]
      %v384 = vld [vmem:[%s330] sm:$0xf]
      %v385 = vld [vmem:[%s330 + $0x8] sm:$0xf]
      %v386 = vld [vmem:[%s330 + $0x10] sm:$0xf]
      %v387 = vld [vmem:[%s330 + $0x18] sm:$0xf]
      %v388 = vld [vmem:[%s330 + $0x20] sm:$0xf]
      %v389 = vld [vmem:[%s330 + $0x28] sm:$0xf]
      %v390 = vld [vmem:[%s330 + $0x30] sm:$0xf]
      %v391 = vld [vmem:[%s330 + $0x38] sm:$0xf]
      %v392 = vld [vmem:[%s1] sm:$0xf]
      %v393 = vld [vmem:[%s330 + $0x4] sm:$0x1]
      %v394 = vld [vmem:[%s330 + $0xc] sm:$0x1]
      %v395 = vld [vmem:[%s330 + $0x14] sm:$0x1]
      %v396 = vld [vmem:[%s330 + $0x1c] sm:$0x1]
      %v397 = vld [vmem:[%s330 + $0x24] sm:$0x1]
      %v398 = vld [vmem:[%s330 + $0x2c] sm:$0x1]
      %v399 = vld [vmem:[%s330 + $0x34] sm:$0x1]
      %v400 = vld [vmem:[%s330 + $0x3c] sm:$0x1]
      %vm401 = vsmask.f32 3328
      %vm402 = vsmask.f32 7440
      %vm403 = vmor %vm401, %vm402
      %v405 = vshrl.u32 %v384, 16
      %v407 = vrot.slane %v405, 4
      %v408 = vshll.u32 %v384, 16
      %v410 = vrot.slane %v408, 5
      %v411 = vor.u32 %v407, %v410
      %v412 = vrot.slane %v411, 4
      %v414 = vshll.u32 %v393, 16
      %v416 = vrot.slane %v414, 5
      %v417 = vsel %vm403, %v412, %v416
      %v419 = vshrl.u32 %v385, 16
      %v421 = vrot.slane %v419, 4
      %v422 = vshll.u32 %v385, 16
      %v424 = vrot.slane %v422, 5
      %v425 = vor.u32 %v421, %v424
      %v426 = vrot.slane %v425, 4
      %v428 = vshll.u32 %v394, 16
      %v430 = vrot.slane %v428, 5
      %v431 = vsel %vm403, %v426, %v430
      %v433 = vshrl.u32 %v386, 16
      %v435 = vrot.slane %v433, 4
      %v436 = vshll.u32 %v386, 16
      %v438 = vrot.slane %v436, 5
      %v439 = vor.u32 %v435, %v438
      %v440 = vrot.slane %v439, 4
      %v442 = vshll.u32 %v395, 16
      %v444 = vrot.slane %v442, 5
      %v445 = vsel %vm403, %v440, %v444
      %v447 = vshrl.u32 %v387, 16
      %v449 = vrot.slane %v447, 4
      %v450 = vshll.u32 %v387, 16
      %v452 = vrot.slane %v450, 5
      %v453 = vor.u32 %v449, %v452
      %v454 = vrot.slane %v453, 4
      %v456 = vshll.u32 %v396, 16
      %v458 = vrot.slane %v456, 5
      %v459 = vsel %vm403, %v454, %v458
      %v461 = vshrl.u32 %v388, 16
      %v463 = vrot.slane %v461, 4
      %v464 = vshll.u32 %v388, 16
      %v466 = vrot.slane %v464, 5
      %v467 = vor.u32 %v463, %v466
      %v468 = vrot.slane %v467, 4
      %v470 = vshll.u32 %v397, 16
      %v472 = vrot.slane %v470, 5
      %v473 = vsel %vm403, %v468, %v472
      %v475 = vshrl.u32 %v389, 16
      %v477 = vrot.slane %v475, 4
      %v478 = vshll.u32 %v389, 16
      %v480 = vrot.slane %v478, 5
      %v481 = vor.u32 %v477, %v480
      %v482 = vrot.slane %v481, 4
      %v484 = vshll.u32 %v398, 16
      %v486 = vrot.slane %v484, 5
      %v487 = vsel %vm403, %v482, %v486
      %v489 = vshrl.u32 %v390, 16
      %v491 = vrot.slane %v489, 4
      %v492 = vshll.u32 %v390, 16
      %v494 = vrot.slane %v492, 5
      %v495 = vor.u32 %v491, %v494
      %v496 = vrot.slane %v495, 4
      %v498 = vshll.u32 %v399, 16
      %v500 = vrot.slane %v498, 5
      %v501 = vsel %vm403, %v496, %v500
      %v503 = vshrl.u32 %v391, 16
      %v505 = vrot.slane %v503, 4
      %v506 = vshll.u32 %v391, 16
      %v508 = vrot.slane %v506, 5
      %v509 = vor.u32 %v505, %v508
      %v510 = vrot.slane %v509, 4
      %v512 = vshll.u32 %v400, 16
      %v514 = vrot.slane %v512, 5
      %v515 = vsel %vm403, %v510, %v514
      %s516 = scalar_lea.vmem %s1, 4
      %v517 = vld [vmem:[%s516] sm:$0xf]
      %v518 = vunpack.c.l.b16 %v417
      %v519 = vunpack.c.l.b16 %v431
      %v520 = vunpack.c.l.b16 %v445
      %v521 = vunpack.c.l.b16 %v459
      %v522 = vunpack.c.l.b16 %v473
      %v523 = vunpack.c.l.b16 %v487
      %v524 = vunpack.c.l.b16 %v501
      %v525 = vunpack.c.l.b16 %v515
      %v526 = vpack.c.b16 %v519, %v518
      %v527 = vpack.c.b16 %v521, %v520
      %v528 = vpack.c.b16 %v523, %v522
      %v529 = vpack.c.b16 %v525, %v524
      %vm530 = vcmask 64512
      %v532 = vsel %vm530, %v526, 0
      %v535 = vsel %vm530, %v527, 0
      %v538 = vsel %vm530, %v528, 0
      %v541 = vsel %vm530, %v529, 0
      %vm543 = vcmask 1043456
      %v545 = vsel %vm543, %v517, 0
      %547 = vmatpush.bf16.msra.mxu0 0
      %548 = vmatpush.bf16.msra.mxu0 0
      %549 = vmatpush.bf16.msra.mxu0 0
      %550 = vmatpush.bf16.msra.mxu0 0
      %551 = vmatpush.bf16.msra.mxu0 0
      %552 = vmatpush.bf16.msra.mxu0 0
      %553 = vmatpush.bf16.msra.mxu0 0
      %554 = vmatpush.bf16.msra.mxu0 %v545
      %555 = vmatmul.bf16.gmra.mxu0 %v532
      %v556 = vpop.f32.mrf.mxu0
      %v557 = vadd.f32 0.0, %v556
      %v558 = vpop.f32.mrf.mxu0
      %v559 = vadd.f32 0.0, %v558
      %560 = vmatmul.bf16.gmra.mxu0 %v535
      %v561 = vpop.f32.mrf.mxu0
      %v562 = vadd.f32 0.0, %v561
      %v563 = vpop.f32.mrf.mxu0
      %v564 = vadd.f32 0.0, %v563
      %565 = vmatmul.bf16.gmra.mxu0 %v538
      %v566 = vpop.f32.mrf.mxu0
      %v567 = vadd.f32 0.0, %v566
      %v568 = vpop.f32.mrf.mxu0
      %v569 = vadd.f32 0.0, %v568
      %570 = vmatmul.bf16.gmra.mxu0 %v541
      %v571 = vpop.f32.mrf.mxu0
      %v572 = vadd.f32 0.0, %v571
      %v573 = vpop.f32.mrf.mxu0
      %v574 = vadd.f32 0.0, %v573
      %575 = vdwg.mxu0
      %v584 = vunpack.c.l.b16 %v384
      %v585 = vunpack.c.l.b16 %v385
      %v586 = vunpack.c.l.b16 %v386
      %v587 = vunpack.c.l.b16 %v387
      %v588 = vunpack.c.l.b16 %v388
      %v589 = vunpack.c.l.b16 %v389
      %v590 = vunpack.c.l.b16 %v390
      %v591 = vunpack.c.l.b16 %v391
      %v592 = vpack.c.b16 %v585, %v584
      %v593 = vpack.c.b16 %v587, %v586
      %v594 = vpack.c.b16 %v589, %v588
      %v595 = vpack.c.b16 %v591, %v590
      %v597 = vsel %vm530, %v592, 0
      %v600 = vsel %vm530, %v593, 0
      %v603 = vsel %vm530, %v594, 0
      %v606 = vsel %vm530, %v595, 0
      %v609 = vsel %vm543, %v392, 0
      %611 = vmatpush.bf16.msra.mxu0 0
      %612 = vmatpush.bf16.msra.mxu0 0
      %613 = vmatpush.bf16.msra.mxu0 0
      %614 = vmatpush.bf16.msra.mxu0 0
      %615 = vmatpush.bf16.msra.mxu0 0
      %616 = vmatpush.bf16.msra.mxu0 0
      %617 = vmatpush.bf16.msra.mxu0 0
      %618 = vmatpush.bf16.msra.mxu0 %v609
      %619 = vmatmul.bf16.gmra.mxu0 %v597
      %v620 = vpop.f32.mrf.mxu0
      %v621 = vadd.f32 %v557, %v620
      %v622 = vpop.f32.mrf.mxu0
      %v623 = vadd.f32 %v559, %v622
      %624 = vmatmul.bf16.gmra.mxu0 %v600
      %v625 = vpop.f32.mrf.mxu0
      %v626 = vadd.f32 %v562, %v625
      %v627 = vpop.f32.mrf.mxu0
      %v628 = vadd.f32 %v564, %v627
      %629 = vmatmul.bf16.gmra.mxu0 %v603
      %v630 = vpop.f32.mrf.mxu0
      %v631 = vadd.f32 %v567, %v630
      %v632 = vpop.f32.mrf.mxu0
      %v633 = vadd.f32 %v569, %v632
      %634 = vmatmul.bf16.gmra.mxu0 %v606
      %v635 = vpop.f32.mrf.mxu0
      %v636 = vadd.f32 %v572, %v635
      %v637 = vpop.f32.mrf.mxu0
      %v638 = vadd.f32 %v574, %v637
      %639 = vdwg.mxu0
      %s640 = scalar_lea.vmem %s330, 8
      %v641 = vld [vmem:[%s640] sm:$0xf]
      %v642 = vld [vmem:[%s640 + $0x8] sm:$0xf]
      %v643 = vld [vmem:[%s640 + $0x10] sm:$0xf]
      %v644 = vld [vmem:[%s640 + $0x18] sm:$0xf]
      %v645 = vld [vmem:[%s640 + $0x20] sm:$0xf]
      %v646 = vld [vmem:[%s640 + $0x28] sm:$0xf]
      %v647 = vld [vmem:[%s640 + $0x30] sm:$0xf]
      %v648 = vld [vmem:[%s640 + $0x38] sm:$0xf]
      %s649 = scalar_lea.vmem %s1, 8
      %v650 = vld [vmem:[%s649] sm:$0xf]
      %v659 = vunpack.c.l.b16 %v641
      %v660 = vunpack.c.l.b16 %v642
      %v661 = vunpack.c.l.b16 %v643
      %v662 = vunpack.c.l.b16 %v644
      %v663 = vunpack.c.l.b16 %v645
      %v664 = vunpack.c.l.b16 %v646
      %v665 = vunpack.c.l.b16 %v647
      %v666 = vunpack.c.l.b16 %v648
      %v667 = vpack.c.b16 %v660, %v659
      %v668 = vpack.c.b16 %v662, %v661
      %v669 = vpack.c.b16 %v664, %v663
      %v670 = vpack.c.b16 %v666, %v665
      %v672 = vsel %vm530, %v667, 0
      %v675 = vsel %vm530, %v668, 0
      %v678 = vsel %vm530, %v669, 0
      %v681 = vsel %vm530, %v670, 0
      %v684 = vsel %vm543, %v650, 0
      %686 = vmatpush.bf16.msra.mxu0 0
      %687 = vmatpush.bf16.msra.mxu0 0
      %688 = vmatpush.bf16.msra.mxu0 0
      %689 = vmatpush.bf16.msra.mxu0 0
      %690 = vmatpush.bf16.msra.mxu0 0
      %691 = vmatpush.bf16.msra.mxu0 0
      %692 = vmatpush.bf16.msra.mxu0 0
      %693 = vmatpush.bf16.msra.mxu0 %v684
      %694 = vmatmul.bf16.gmra.mxu0 %v672
      %v695 = vpop.f32.mrf.mxu0
      %v696 = vadd.f32 0.0, %v695
      %v697 = vpop.f32.mrf.mxu0
      %v698 = vadd.f32 0.0, %v697
      %699 = vmatmul.bf16.gmra.mxu0 %v675
      %v700 = vpop.f32.mrf.mxu0
      %v701 = vadd.f32 0.0, %v700
      %v702 = vpop.f32.mrf.mxu0
      %v703 = vadd.f32 0.0, %v702
      %704 = vmatmul.bf16.gmra.mxu0 %v678
      %v705 = vpop.f32.mrf.mxu0
      %v706 = vadd.f32 0.0, %v705
      %v707 = vpop.f32.mrf.mxu0
      %v708 = vadd.f32 0.0, %v707
      %709 = vmatmul.bf16.gmra.mxu0 %v681
      %v710 = vpop.f32.mrf.mxu0
      %v711 = vadd.f32 0.0, %v710
      %v712 = vpop.f32.mrf.mxu0
      %v713 = vadd.f32 0.0, %v712
      %714 = vdwg.mxu0
      %v715 = vadd.f32 %v621, %v696
      %v716 = vadd.f32 %v623, %v698
      %v717 = vadd.f32 %v626, %v701
      %v718 = vadd.f32 %v628, %v703
      %v719 = vadd.f32 %v631, %v706
      %v720 = vadd.f32 %v633, %v708
      %v721 = vadd.f32 %v636, %v711
      %v722 = vadd.f32 %v638, %v713
      %v723 = vld [vmem:[%s640] sm:$0xf]
      %v724 = vld [vmem:[%s640 + $0x4] sm:$0x1]
      %v725 = vld [vmem:[%s640 + $0x8] sm:$0xf]
      %v726 = vld [vmem:[%s640 + $0xc] sm:$0x1]
      %v727 = vld [vmem:[%s640 + $0x10] sm:$0xf]
      %v728 = vld [vmem:[%s640 + $0x14] sm:$0x1]
      %v729 = vld [vmem:[%s640 + $0x18] sm:$0xf]
      %v730 = vld [vmem:[%s640 + $0x1c] sm:$0x1]
      %v731 = vld [vmem:[%s640 + $0x20] sm:$0xf]
      %v732 = vld [vmem:[%s640 + $0x24] sm:$0x1]
      %v733 = vld [vmem:[%s640 + $0x28] sm:$0xf]
      %v734 = vld [vmem:[%s640 + $0x2c] sm:$0x1]
      %v735 = vld [vmem:[%s640 + $0x30] sm:$0xf]
      %v736 = vld [vmem:[%s640 + $0x34] sm:$0x1]
      %v737 = vld [vmem:[%s640 + $0x38] sm:$0xf]
      %v738 = vld [vmem:[%s640 + $0x3c] sm:$0x1]
      %v740 = vshrl.u32 %v723, 16
      %v742 = vrot.slane %v740, 4
      %v743 = vshll.u32 %v723, 16
      %v745 = vrot.slane %v743, 5
      %v746 = vor.u32 %v742, %v745
      %v747 = vrot.slane %v746, 4
      %v749 = vshll.u32 %v724, 16
      %v751 = vrot.slane %v749, 5
      %v752 = vsel %vm403, %v747, %v751
      %v754 = vshrl.u32 %v725, 16
      %v756 = vrot.slane %v754, 4
      %v757 = vshll.u32 %v725, 16
      %v759 = vrot.slane %v757, 5
      %v760 = vor.u32 %v756, %v759
      %v761 = vrot.slane %v760, 4
      %v763 = vshll.u32 %v726, 16
      %v765 = vrot.slane %v763, 5
      %v766 = vsel %vm403, %v761, %v765
      %v768 = vshrl.u32 %v727, 16
      %v770 = vrot.slane %v768, 4
      %v771 = vshll.u32 %v727, 16
      %v773 = vrot.slane %v771, 5
      %v774 = vor.u32 %v770, %v773
      %v775 = vrot.slane %v774, 4
      %v777 = vshll.u32 %v728, 16
      %v779 = vrot.slane %v777, 5
      %v780 = vsel %vm403, %v775, %v779
      %v782 = vshrl.u32 %v729, 16
      %v784 = vrot.slane %v782, 4
      %v785 = vshll.u32 %v729, 16
      %v787 = vrot.slane %v785, 5
      %v788 = vor.u32 %v784, %v787
      %v789 = vrot.slane %v788, 4
      %v791 = vshll.u32 %v730, 16
      %v793 = vrot.slane %v791, 5
      %v794 = vsel %vm403, %v789, %v793
      %v796 = vshrl.u32 %v731, 16
      %v798 = vrot.slane %v796, 4
      %v799 = vshll.u32 %v731, 16
      %v801 = vrot.slane %v799, 5
      %v802 = vor.u32 %v798, %v801
      %v803 = vrot.slane %v802, 4
      %v805 = vshll.u32 %v732, 16
      %v807 = vrot.slane %v805, 5
      %v808 = vsel %vm403, %v803, %v807
      %v810 = vshrl.u32 %v733, 16
      %v812 = vrot.slane %v810, 4
      %v813 = vshll.u32 %v733, 16
      %v815 = vrot.slane %v813, 5
      %v816 = vor.u32 %v812, %v815
      %v817 = vrot.slane %v816, 4
      %v819 = vshll.u32 %v734, 16
      %v821 = vrot.slane %v819, 5
      %v822 = vsel %vm403, %v817, %v821
      %v824 = vshrl.u32 %v735, 16
      %v826 = vrot.slane %v824, 4
      %v827 = vshll.u32 %v735, 16
      %v829 = vrot.slane %v827, 5
      %v830 = vor.u32 %v826, %v829
      %v831 = vrot.slane %v830, 4
      %v833 = vshll.u32 %v736, 16
      %v835 = vrot.slane %v833, 5
      %v836 = vsel %vm403, %v831, %v835
      %v838 = vshrl.u32 %v737, 16
      %v840 = vrot.slane %v838, 4
      %v841 = vshll.u32 %v737, 16
      %v843 = vrot.slane %v841, 5
      %v844 = vor.u32 %v840, %v843
      %v845 = vrot.slane %v844, 4
      %v847 = vshll.u32 %v738, 16
      %v849 = vrot.slane %v847, 5
      %v850 = vsel %vm403, %v845, %v849
      %s851 = scalar_lea.vmem %s1, 12
      %v852 = vld [vmem:[%s851] sm:$0xf]
      %v853 = vunpack.c.l.b16 %v752
      %v854 = vunpack.c.l.b16 %v766
      %v855 = vunpack.c.l.b16 %v780
      %v856 = vunpack.c.l.b16 %v794
      %v857 = vunpack.c.l.b16 %v808
      %v858 = vunpack.c.l.b16 %v822
      %v859 = vunpack.c.l.b16 %v836
      %v860 = vunpack.c.l.b16 %v850
      %v861 = vpack.c.b16 %v854, %v853
      %v862 = vpack.c.b16 %v856, %v855
      %v863 = vpack.c.b16 %v858, %v857
      %v864 = vpack.c.b16 %v860, %v859
      %v866 = vsel %vm530, %v861, 0
      %v869 = vsel %vm530, %v862, 0
      %v872 = vsel %vm530, %v863, 0
      %v875 = vsel %vm530, %v864, 0
      %v878 = vsel %vm543, %v852, 0
      %880 = vmatpush.bf16.msra.mxu0 0
      %881 = vmatpush.bf16.msra.mxu0 0
      %882 = vmatpush.bf16.msra.mxu0 0
      %883 = vmatpush.bf16.msra.mxu0 0
      %884 = vmatpush.bf16.msra.mxu0 0
      %885 = vmatpush.bf16.msra.mxu0 0
      %886 = vmatpush.bf16.msra.mxu0 0
      %887 = vmatpush.bf16.msra.mxu0 %v878
      %888 = vmatmul.bf16.gmra.mxu0 %v866
      %v889 = vpop.f32.mrf.mxu0
      %v890 = vadd.f32 0.0, %v889
      %v891 = vpop.f32.mrf.mxu0
      %v892 = vadd.f32 0.0, %v891
      %893 = vmatmul.bf16.gmra.mxu0 %v869
      %v894 = vpop.f32.mrf.mxu0
      %v895 = vadd.f32 0.0, %v894
      %v896 = vpop.f32.mrf.mxu0
      %v897 = vadd.f32 0.0, %v896
      %898 = vmatmul.bf16.gmra.mxu0 %v872
      %v899 = vpop.f32.mrf.mxu0
      %v900 = vadd.f32 0.0, %v899
      %v901 = vpop.f32.mrf.mxu0
      %v902 = vadd.f32 0.0, %v901
      %903 = vmatmul.bf16.gmra.mxu0 %v875
      %v904 = vpop.f32.mrf.mxu0
      %v905 = vadd.f32 0.0, %v904
      %v906 = vpop.f32.mrf.mxu0
      %v907 = vadd.f32 0.0, %v906
      %908 = vdwg.mxu0
      %v909 = vadd.f32 %v715, %v890
      %v910 = vadd.f32 %v716, %v892
      %v911 = vadd.f32 %v717, %v895
      %v912 = vadd.f32 %v718, %v897
      %v913 = vadd.f32 %v719, %v900
      %v914 = vadd.f32 %v720, %v902
      %v915 = vadd.f32 %v721, %v905
      %v916 = vadd.f32 %v722, %v907
      %v917 = vld [vmem:[%s340] sm:$0xf]
      %v918 = vld [vmem:[%s340 + $0x10] sm:$0xf]
      %v919 = vld [vmem:[%s340 + $0x20] sm:$0xf]
      %v920 = vld [vmem:[%s340 + $0x30] sm:$0xf]
      %v921 = vld [vmem:[%s340 + $0x40] sm:$0xf]
      %v922 = vld [vmem:[%s340 + $0x50] sm:$0xf]
      %v923 = vld [vmem:[%s340 + $0x60] sm:$0xf]
      %v924 = vld [vmem:[%s340 + $0x70] sm:$0xf]
      %v925 = vunpack.c.l.bf16 %v917
      %v926 = vunpack.c.l.bf16 %v918
      %v927 = vunpack.c.l.bf16 %v919
      %v928 = vunpack.c.l.bf16 %v920
      %v929 = vunpack.c.l.bf16 %v921
      %v930 = vunpack.c.l.bf16 %v922
      %v931 = vunpack.c.l.bf16 %v923
      %v932 = vunpack.c.l.bf16 %v924
      %v934 = vperm.slane %v383, 0
      %v936 = vadd.f32 %v909, %v934
      %v937 = vadd.f32 %v910, %v934
      %v938 = vadd.f32 %v911, %v934
      %v939 = vadd.f32 %v912, %v934
      %v940 = vadd.f32 %v913, %v934
      %v941 = vadd.f32 %v914, %v934
      %v942 = vadd.f32 %v915, %v934
      %v943 = vadd.f32 %v916, %v934
      %v944 = vadd.f32 %v936, %v925
      %v945 = vadd.f32 %v937, %v926
      %v946 = vadd.f32 %v938, %v927
      %v947 = vadd.f32 %v939, %v928
      %v948 = vadd.f32 %v940, %v929
      %v949 = vadd.f32 %v941, %v930
      %v950 = vadd.f32 %v942, %v931
      %v951 = vadd.f32 %v943, %v932
      %v952 = vmax.f32 %v944, 0.0
      %v953 = vmax.f32 %v945, 0.0
      %v954 = vmax.f32 %v946, 0.0
      %v955 = vmax.f32 %v947, 0.0
      %v956 = vmax.f32 %v948, 0.0
      %v957 = vmax.f32 %v949, 0.0
      %v958 = vmax.f32 %v950, 0.0
      %v959 = vmax.f32 %v951, 0.0
      %v960 = vpack.c.bf16 %v952, %v952
      %v961 = vpack.c.bf16 %v953, %v953
      %v962 = vpack.c.bf16 %v954, %v954
      %v963 = vpack.c.bf16 %v955, %v955
      %v964 = vpack.c.bf16 %v956, %v956
      %v965 = vpack.c.bf16 %v957, %v957
      %v966 = vpack.c.bf16 %v958, %v958
      %v967 = vpack.c.bf16 %v959, %v959
      %968 = vst [vmem:[%s351] sm:$0xf] %v960
      %969 = vst [vmem:[%s351 + $0x10] sm:$0xf] %v961
      %970 = vst [vmem:[%s351 + $0x20] sm:$0xf] %v962
      %971 = vst [vmem:[%s351 + $0x30] sm:$0xf] %v963
      %972 = vst [vmem:[%s351 + $0x40] sm:$0xf] %v964
      %973 = vst [vmem:[%s351 + $0x50] sm:$0xf] %v965
      %974 = vst [vmem:[%s351 + $0x60] sm:$0xf] %v966
      %975 = vst [vmem:[%s351 + $0x70] sm:$0xf] %v967
      %v976 = vsel %vm375, 1, 0
      %v977 = vsel %vm376, 1, 0
      %v978 = vsel %vm377, 1, 0
      %v979 = vsel %vm378, 1, 0
      %v980 = vsel %vm379, 1, 0
      %v981 = vsel %vm380, 1, 0
      %v982 = vsel %vm381, 1, 0
      %v983 = vsel %vm382, 1, 0
      %vm984 = vcmp.eq.s32.totalorder %v976, 1
      %vm985 = vcmp.eq.s32.totalorder %v977, 1
      %vm986 = vcmp.eq.s32.totalorder %v978, 1
      %vm987 = vcmp.eq.s32.totalorder %v979, 1
      %vm988 = vcmp.eq.s32.totalorder %v980, 1
      %vm989 = vcmp.eq.s32.totalorder %v981, 1
      %vm990 = vcmp.eq.s32.totalorder %v982, 1
      %vm991 = vcmp.eq.s32.totalorder %v983, 1
      %v992 = vsel %vm984, %v952, 0.0
      %v993 = vsel %vm985, %v953, 0.0
      %v994 = vsel %vm986, %v954, 0.0
      %v995 = vsel %vm987, %v955, 0.0
      %v996 = vsel %vm988, %v956, 0.0
      %v997 = vsel %vm989, %v957, 0.0
      %v998 = vsel %vm990, %v958, 0.0
      %v999 = vsel %vm991, %v959, 0.0
      %v1000 = vadd.f32 %v992, %v993
      %v1001 = vadd.f32 %v1000, %v994
      %v1002 = vadd.f32 %v1001, %v995
      %v1003 = vadd.f32 %v1002, %v996
      %v1004 = vadd.f32 %v1003, %v997
      %v1005 = vadd.f32 %v1004, %v998
      %v1006 = vadd.f32 %v1005, %v999
      %v1007 = vrot.slane %v1006, 4
      %v1008 = vadd.f32 %v1006, %v1007
      %v1009 = vrot.slane %v1008, 2
      %v1010 = vadd.f32 %v1008, %v1009
      %v1011 = vrot.slane %v1010, 1
      %v1012 = vadd.f32 %v1010, %v1011
      %v1013 = vstv %s373
      %v1014 = vrcp.pop %v1013
      %v1015 = vmul.f32 %v1013, %v1014
      %v1016 = vsub.f32 1.0, %v1015
      %v1017 = vmul.f32 %v1014, %v1016
      %v1018 = vadd.f32 %v1014, %v1017
      %vm1019 = vweird.f32 %v1013
      %vm1020 = vweird.f32 %v1014
      %vm1021 = vmor %vm1019, %vm1020
      %v1022 = vsel %vm1021, %v1014, %v1018
      %v1023 = vand.u32 2147483647, %v1013
      %vm1024 = vcmp.eq.f32.partialorder %v1023, 8.507059e+37
      %v1025 = vand.u32 %v1013, 2147483648
      %v1026 = vor.u32 1.1754944e-38, %v1025
      %v1027 = vsel %vm1024, %v1026, %v1022
      %v1028 = vmul.f32 %v1012, %v1027
      %v1029 = vsub.f32 %v952, %v1028
      %v1030 = vsub.f32 %v953, %v1028
      %v1031 = vsub.f32 %v954, %v1028
      %v1032 = vsub.f32 %v955, %v1028
      %v1033 = vsub.f32 %v956, %v1028
      %v1034 = vsub.f32 %v957, %v1028
      %v1035 = vsub.f32 %v958, %v1028
      %v1036 = vsub.f32 %v959, %v1028
      %v1037 = vsel %vm984, %v1029, 0.0
      %v1038 = vsel %vm985, %v1030, 0.0
      %v1039 = vsel %vm986, %v1031, 0.0
      %v1040 = vsel %vm987, %v1032, 0.0
      %v1041 = vsel %vm988, %v1033, 0.0
      %v1042 = vsel %vm989, %v1034, 0.0
      %v1043 = vsel %vm990, %v1035, 0.0
      %v1044 = vsel %vm991, %v1036, 0.0
      %v1045 = vmul.f32 %v1037, %v1037
      %v1046 = vmul.f32 %v1038, %v1038
      %v1047 = vmul.f32 %v1039, %v1039
      %v1048 = vmul.f32 %v1040, %v1040
      %v1049 = vmul.f32 %v1041, %v1041
      %v1050 = vmul.f32 %v1042, %v1042
      %v1051 = vmul.f32 %v1043, %v1043
      %v1052 = vmul.f32 %v1044, %v1044
      %v1053 = vadd.f32 %v1045, %v1046
      %v1054 = vadd.f32 %v1053, %v1047
      %v1055 = vadd.f32 %v1054, %v1048
      %v1056 = vadd.f32 %v1055, %v1049
      %v1057 = vadd.f32 %v1056, %v1050
      %v1058 = vadd.f32 %v1057, %v1051
      %v1059 = vadd.f32 %v1058, %v1052
      %v1060 = vrot.slane %v1059, 4
      %v1061 = vadd.f32 %v1059, %v1060
      %v1062 = vrot.slane %v1061, 2
      %v1063 = vadd.f32 %v1061, %v1062
      %v1064 = vrot.slane %v1063, 1
      %v1065 = vadd.f32 %v1063, %v1064
      %v1066 = vld [vmem:[%s330] sm:$0xf]
      %v1067 = vld [vmem:[%s330 + $0x4] sm:$0x1]
      %v1068 = vld [vmem:[%s330 + $0x8] sm:$0xf]
      %v1069 = vld [vmem:[%s330 + $0xc] sm:$0x1]
      %v1070 = vld [vmem:[%s330 + $0x10] sm:$0xf]
      %v1071 = vld [vmem:[%s330 + $0x14] sm:$0x1]
      %v1072 = vld [vmem:[%s330 + $0x18] sm:$0xf]
      %v1073 = vld [vmem:[%s330 + $0x1c] sm:$0x1]
      %v1074 = vld [vmem:[%s330 + $0x20] sm:$0xf]
      %v1075 = vld [vmem:[%s330 + $0x24] sm:$0x1]
      %v1076 = vld [vmem:[%s330 + $0x28] sm:$0xf]
      %v1077 = vld [vmem:[%s330 + $0x2c] sm:$0x1]
      %v1078 = vld [vmem:[%s330 + $0x30] sm:$0xf]
      %v1079 = vld [vmem:[%s330 + $0x34] sm:$0x1]
      %v1080 = vld [vmem:[%s330 + $0x38] sm:$0xf]
      %v1081 = vld [vmem:[%s330 + $0x3c] sm:$0x1]
      %v1083 = vshrl.u32 %v1066, 16
      %v1085 = vrot.slane %v1083, 4
      %v1086 = vshll.u32 %v1066, 16
      %v1088 = vrot.slane %v1086, 5
      %v1089 = vor.u32 %v1085, %v1088
      %v1090 = vrot.slane %v1089, 4
      %v1092 = vshll.u32 %v1067, 16
      %v1094 = vrot.slane %v1092, 5
      %v1095 = vsel %vm403, %v1090, %v1094
      %v1097 = vshrl.u32 %v1068, 16
      %v1099 = vrot.slane %v1097, 4
      %v1100 = vshll.u32 %v1068, 16
      %v1102 = vrot.slane %v1100, 5
      %v1103 = vor.u32 %v1099, %v1102
      %v1104 = vrot.slane %v1103, 4
      %v1106 = vshll.u32 %v1069, 16
      %v1108 = vrot.slane %v1106, 5
      %v1109 = vsel %vm403, %v1104, %v1108
      %v1111 = vshrl.u32 %v1070, 16
      %v1113 = vrot.slane %v1111, 4
      %v1114 = vshll.u32 %v1070, 16
      %v1116 = vrot.slane %v1114, 5
      %v1117 = vor.u32 %v1113, %v1116
      %v1118 = vrot.slane %v1117, 4
      %v1120 = vshll.u32 %v1071, 16
      %v1122 = vrot.slane %v1120, 5
      %v1123 = vsel %vm403, %v1118, %v1122
      %v1125 = vshrl.u32 %v1072, 16
      %v1127 = vrot.slane %v1125, 4
      %v1128 = vshll.u32 %v1072, 16
      %v1130 = vrot.slane %v1128, 5
      %v1131 = vor.u32 %v1127, %v1130
      %v1132 = vrot.slane %v1131, 4
      %v1134 = vshll.u32 %v1073, 16
      %v1136 = vrot.slane %v1134, 5
      %v1137 = vsel %vm403, %v1132, %v1136
      %v1139 = vshrl.u32 %v1074, 16
      %v1141 = vrot.slane %v1139, 4
      %v1142 = vshll.u32 %v1074, 16
      %v1144 = vrot.slane %v1142, 5
      %v1145 = vor.u32 %v1141, %v1144
      %v1146 = vrot.slane %v1145, 4
      %v1148 = vshll.u32 %v1075, 16
      %v1150 = vrot.slane %v1148, 5
      %v1151 = vsel %vm403, %v1146, %v1150
      %v1153 = vshrl.u32 %v1076, 16
      %v1155 = vrot.slane %v1153, 4
      %v1156 = vshll.u32 %v1076, 16
      %v1158 = vrot.slane %v1156, 5
      %v1159 = vor.u32 %v1155, %v1158
      %v1160 = vrot.slane %v1159, 4
      %v1162 = vshll.u32 %v1077, 16
      %v1164 = vrot.slane %v1162, 5
      %v1165 = vsel %vm403, %v1160, %v1164
      %v1167 = vshrl.u32 %v1078, 16
      %v1169 = vrot.slane %v1167, 4
      %v1170 = vshll.u32 %v1078, 16
      %v1172 = vrot.slane %v1170, 5
      %v1173 = vor.u32 %v1169, %v1172
      %v1174 = vrot.slane %v1173, 4
      %v1176 = vshll.u32 %v1079, 16
      %v1178 = vrot.slane %v1176, 5
      %v1179 = vsel %vm403, %v1174, %v1178
      %v1181 = vshrl.u32 %v1080, 16
      %v1183 = vrot.slane %v1181, 4
      %v1184 = vshll.u32 %v1080, 16
      %v1186 = vrot.slane %v1184, 5
      %v1187 = vor.u32 %v1183, %v1186
      %v1188 = vrot.slane %v1187, 4
      %v1190 = vshll.u32 %v1081, 16
      %v1192 = vrot.slane %v1190, 5
      %v1193 = vsel %vm403, %v1188, %v1192
      %s1194 = scalar_lea.vmem %s1, 16
      %v1195 = vld [vmem:[%s1194] sm:$0xf]
      %v1196 = vld [vmem:[%s330] sm:$0xe]
      %v1197 = vld [vmem:[%s330 + $0x8] sm:$0xe]
      %v1198 = vld [vmem:[%s330 + $0x10] sm:$0xe]
      %v1199 = vld [vmem:[%s330 + $0x18] sm:$0xe]
      %v1200 = vld [vmem:[%s330 + $0x20] sm:$0xe]
      %v1201 = vld [vmem:[%s330 + $0x28] sm:$0xe]
      %v1202 = vld [vmem:[%s330 + $0x30] sm:$0xe]
      %v1203 = vld [vmem:[%s330 + $0x38] sm:$0xe]
      %vm1220 = vcmask 1042432
      %vm1221 = vcmask 1046532
      %vm1222 = vmor %vm1220, %vm1221
      %v1223 = vrot.slane %v1196, 5
      %v1224 = vrot.slane %v1223, 4
      %v1225 = vrot.slane %v1067, 5
      %v1226 = vsel %vm1222, %v1224, %v1225
      %v1227 = vrot.slane %v1197, 5
      %v1228 = vrot.slane %v1227, 4
      %v1229 = vrot.slane %v1069, 5
      %v1230 = vsel %vm1222, %v1228, %v1229
      %v1231 = vrot.slane %v1198, 5
      %v1232 = vrot.slane %v1231, 4
      %v1233 = vrot.slane %v1071, 5
      %v1234 = vsel %vm1222, %v1232, %v1233
      %v1235 = vrot.slane %v1199, 5
      %v1236 = vrot.slane %v1235, 4
      %v1237 = vrot.slane %v1073, 5
      %v1238 = vsel %vm1222, %v1236, %v1237
      %v1239 = vrot.slane %v1200, 5
      %v1240 = vrot.slane %v1239, 4
      %v1241 = vrot.slane %v1075, 5
      %v1242 = vsel %vm1222, %v1240, %v1241
      %v1243 = vrot.slane %v1201, 5
      %v1244 = vrot.slane %v1243, 4
      %v1245 = vrot.slane %v1077, 5
      %v1246 = vsel %vm1222, %v1244, %v1245
      %v1247 = vrot.slane %v1202, 5
      %v1248 = vrot.slane %v1247, 4
      %v1249 = vrot.slane %v1079, 5
      %v1250 = vsel %vm1222, %v1248, %v1249
      %v1251 = vrot.slane %v1203, 5
      %v1252 = vrot.slane %v1251, 4
      %v1253 = vrot.slane %v1081, 5
      %v1254 = vsel %vm1222, %v1252, %v1253
      %s1255 = scalar_lea.vmem %s1, 20
      %v1256 = vld [vmem:[%s1255] sm:$0xf]
      %v1257 = vunpack.c.l.b16 %v1226
      %v1258 = vunpack.c.l.b16 %v1230
      %v1259 = vunpack.c.l.b16 %v1234
      %v1260 = vunpack.c.l.b16 %v1238
      %v1261 = vunpack.c.l.b16 %v1242
      %v1262 = vunpack.c.l.b16 %v1246
      %v1263 = vunpack.c.l.b16 %v1250
      %v1264 = vunpack.c.l.b16 %v1254
      %v1265 = vpack.c.b16 %v1258, %v1257
      %v1266 = vpack.c.b16 %v1260, %v1259
      %v1267 = vpack.c.b16 %v1262, %v1261
      %v1268 = vpack.c.b16 %v1264, %v1263
      %v1270 = vsel %vm530, %v1265, 0
      %v1273 = vsel %vm530, %v1266, 0
      %v1276 = vsel %vm530, %v1267, 0
      %v1279 = vsel %vm530, %v1268, 0
      %v1282 = vsel %vm543, %v1256, 0
      %1284 = vmatpush.bf16.msra.mxu0 0
      %1285 = vmatpush.bf16.msra.mxu0 0
      %1286 = vmatpush.bf16.msra.mxu0 0
      %1287 = vmatpush.bf16.msra.mxu0 0
      %1288 = vmatpush.bf16.msra.mxu0 0
      %1289 = vmatpush.bf16.msra.mxu0 0
      %1290 = vmatpush.bf16.msra.mxu0 0
      %1291 = vmatpush.bf16.msra.mxu0 %v1282
      %1292 = vmatmul.bf16.gmra.mxu0 %v1270
      %v1293 = vpop.f32.mrf.mxu0
      %v1294 = vadd.f32 0.0, %v1293
      %v1295 = vpop.f32.mrf.mxu0
      %v1296 = vadd.f32 0.0, %v1295
      %1297 = vmatmul.bf16.gmra.mxu0 %v1273
      %v1298 = vpop.f32.mrf.mxu0
      %v1299 = vadd.f32 0.0, %v1298
      %v1300 = vpop.f32.mrf.mxu0
      %v1301 = vadd.f32 0.0, %v1300
      %1302 = vmatmul.bf16.gmra.mxu0 %v1276
      %v1303 = vpop.f32.mrf.mxu0
      %v1304 = vadd.f32 0.0, %v1303
      %v1305 = vpop.f32.mrf.mxu0
      %v1306 = vadd.f32 0.0, %v1305
      %1307 = vmatmul.bf16.gmra.mxu0 %v1279
      %v1308 = vpop.f32.mrf.mxu0
      %v1309 = vadd.f32 0.0, %v1308
      %v1310 = vpop.f32.mrf.mxu0
      %v1311 = vadd.f32 0.0, %v1310
      %1312 = vdwg.mxu0
      %v1313 = vunpack.c.l.b16 %v1095
      %v1314 = vunpack.c.l.b16 %v1109
      %v1315 = vunpack.c.l.b16 %v1123
      %v1316 = vunpack.c.l.b16 %v1137
      %v1317 = vunpack.c.l.b16 %v1151
      %v1318 = vunpack.c.l.b16 %v1165
      %v1319 = vunpack.c.l.b16 %v1179
      %v1320 = vunpack.c.l.b16 %v1193
      %v1321 = vpack.c.b16 %v1314, %v1313
      %v1322 = vpack.c.b16 %v1316, %v1315
      %v1323 = vpack.c.b16 %v1318, %v1317
      %v1324 = vpack.c.b16 %v1320, %v1319
      %v1326 = vsel %vm530, %v1321, 0
      %v1329 = vsel %vm530, %v1322, 0
      %v1332 = vsel %vm530, %v1323, 0
      %v1335 = vsel %vm530, %v1324, 0
      %v1338 = vsel %vm543, %v1195, 0
      %1340 = vmatpush.bf16.msra.mxu0 0
      %1341 = vmatpush.bf16.msra.mxu0 0
      %1342 = vmatpush.bf16.msra.mxu0 0
      %1343 = vmatpush.bf16.msra.mxu0 0
      %1344 = vmatpush.bf16.msra.mxu0 0
      %1345 = vmatpush.bf16.msra.mxu0 0
      %1346 = vmatpush.bf16.msra.mxu0 0
      %1347 = vmatpush.bf16.msra.mxu0 %v1338
      %1348 = vmatmul.bf16.gmra.mxu0 %v1326
      %v1349 = vpop.f32.mrf.mxu0
      %v1350 = vadd.f32 %v1294, %v1349
      %v1351 = vpop.f32.mrf.mxu0
      %v1352 = vadd.f32 %v1296, %v1351
      %1353 = vmatmul.bf16.gmra.mxu0 %v1329
      %v1354 = vpop.f32.mrf.mxu0
      %v1355 = vadd.f32 %v1299, %v1354
      %v1356 = vpop.f32.mrf.mxu0
      %v1357 = vadd.f32 %v1301, %v1356
      %1358 = vmatmul.bf16.gmra.mxu0 %v1332
      %v1359 = vpop.f32.mrf.mxu0
      %v1360 = vadd.f32 %v1304, %v1359
      %v1361 = vpop.f32.mrf.mxu0
      %v1362 = vadd.f32 %v1306, %v1361
      %1363 = vmatmul.bf16.gmra.mxu0 %v1335
      %v1364 = vpop.f32.mrf.mxu0
      %v1365 = vadd.f32 %v1309, %v1364
      %v1366 = vpop.f32.mrf.mxu0
      %v1367 = vadd.f32 %v1311, %v1366
      %1368 = vdwg.mxu0
      %v1369 = vld [vmem:[%s640] sm:$0xf]
      %v1370 = vld [vmem:[%s640 + $0x4] sm:$0x1]
      %v1371 = vld [vmem:[%s640 + $0x8] sm:$0xf]
      %v1372 = vld [vmem:[%s640 + $0xc] sm:$0x1]
      %v1373 = vld [vmem:[%s640 + $0x10] sm:$0xf]
      %v1374 = vld [vmem:[%s640 + $0x14] sm:$0x1]
      %v1375 = vld [vmem:[%s640 + $0x18] sm:$0xf]
      %v1376 = vld [vmem:[%s640 + $0x1c] sm:$0x1]
      %v1377 = vld [vmem:[%s640 + $0x20] sm:$0xf]
      %v1378 = vld [vmem:[%s640 + $0x24] sm:$0x1]
      %v1379 = vld [vmem:[%s640 + $0x28] sm:$0xf]
      %v1380 = vld [vmem:[%s640 + $0x2c] sm:$0x1]
      %v1381 = vld [vmem:[%s640 + $0x30] sm:$0xf]
      %v1382 = vld [vmem:[%s640 + $0x34] sm:$0x1]
      %v1383 = vld [vmem:[%s640 + $0x38] sm:$0xf]
      %v1384 = vld [vmem:[%s640 + $0x3c] sm:$0x1]
      %v1386 = vshrl.u32 %v1369, 16
      %v1388 = vrot.slane %v1386, 4
      %v1389 = vshll.u32 %v1369, 16
      %v1391 = vrot.slane %v1389, 5
      %v1392 = vor.u32 %v1388, %v1391
      %v1393 = vrot.slane %v1392, 4
      %v1395 = vshll.u32 %v1370, 16
      %v1397 = vrot.slane %v1395, 5
      %v1398 = vsel %vm403, %v1393, %v1397
      %v1400 = vshrl.u32 %v1371, 16
      %v1402 = vrot.slane %v1400, 4
      %v1403 = vshll.u32 %v1371, 16
      %v1405 = vrot.slane %v1403, 5
      %v1406 = vor.u32 %v1402, %v1405
      %v1407 = vrot.slane %v1406, 4
      %v1409 = vshll.u32 %v1372, 16
      %v1411 = vrot.slane %v1409, 5
      %v1412 = vsel %vm403, %v1407, %v1411
      %v1414 = vshrl.u32 %v1373, 16
      %v1416 = vrot.slane %v1414, 4
      %v1417 = vshll.u32 %v1373, 16
      %v1419 = vrot.slane %v1417, 5
      %v1420 = vor.u32 %v1416, %v1419
      %v1421 = vrot.slane %v1420, 4
      %v1423 = vshll.u32 %v1374, 16
      %v1425 = vrot.slane %v1423, 5
      %v1426 = vsel %vm403, %v1421, %v1425
      %v1428 = vshrl.u32 %v1375, 16
      %v1430 = vrot.slane %v1428, 4
      %v1431 = vshll.u32 %v1375, 16
      %v1433 = vrot.slane %v1431, 5
      %v1434 = vor.u32 %v1430, %v1433
      %v1435 = vrot.slane %v1434, 4
      %v1437 = vshll.u32 %v1376, 16
      %v1439 = vrot.slane %v1437, 5
      %v1440 = vsel %vm403, %v1435, %v1439
      %v1442 = vshrl.u32 %v1377, 16
      %v1444 = vrot.slane %v1442, 4
      %v1445 = vshll.u32 %v1377, 16
      %v1447 = vrot.slane %v1445, 5
      %v1448 = vor.u32 %v1444, %v1447
      %v1449 = vrot.slane %v1448, 4
      %v1451 = vshll.u32 %v1378, 16
      %v1453 = vrot.slane %v1451, 5
      %v1454 = vsel %vm403, %v1449, %v1453
      %v1456 = vshrl.u32 %v1379, 16
      %v1458 = vrot.slane %v1456, 4
      %v1459 = vshll.u32 %v1379, 16
      %v1461 = vrot.slane %v1459, 5
      %v1462 = vor.u32 %v1458, %v1461
      %v1463 = vrot.slane %v1462, 4
      %v1465 = vshll.u32 %v1380, 16
      %v1467 = vrot.slane %v1465, 5
      %v1468 = vsel %vm403, %v1463, %v1467
      %v1470 = vshrl.u32 %v1381, 16
      %v1472 = vrot.slane %v1470, 4
      %v1473 = vshll.u32 %v1381, 16
      %v1475 = vrot.slane %v1473, 5
      %v1476 = vor.u32 %v1472, %v1475
      %v1477 = vrot.slane %v1476, 4
      %v1479 = vshll.u32 %v1382, 16
      %v1481 = vrot.slane %v1479, 5
      %v1482 = vsel %vm403, %v1477, %v1481
      %v1484 = vshrl.u32 %v1383, 16
      %v1486 = vrot.slane %v1484, 4
      %v1487 = vshll.u32 %v1383, 16
      %v1489 = vrot.slane %v1487, 5
      %v1490 = vor.u32 %v1486, %v1489
      %v1491 = vrot.slane %v1490, 4
      %v1493 = vshll.u32 %v1384, 16
      %v1495 = vrot.slane %v1493, 5
      %v1496 = vsel %vm403, %v1491, %v1495
      %s1497 = scalar_lea.vmem %s1, 24
      %v1498 = vld [vmem:[%s1497] sm:$0xf]
      %v1499 = vunpack.c.l.b16 %v1398
      %v1500 = vunpack.c.l.b16 %v1412
      %v1501 = vunpack.c.l.b16 %v1426
      %v1502 = vunpack.c.l.b16 %v1440
      %v1503 = vunpack.c.l.b16 %v1454
      %v1504 = vunpack.c.l.b16 %v1468
      %v1505 = vunpack.c.l.b16 %v1482
      %v1506 = vunpack.c.l.b16 %v1496
      %v1507 = vpack.c.b16 %v1500, %v1499
      %v1508 = vpack.c.b16 %v1502, %v1501
      %v1509 = vpack.c.b16 %v1504, %v1503
      %v1510 = vpack.c.b16 %v1506, %v1505
      %v1512 = vsel %vm530, %v1507, 0
      %v1515 = vsel %vm530, %v1508, 0
      %v1518 = vsel %vm530, %v1509, 0
      %v1521 = vsel %vm530, %v1510, 0
      %v1524 = vsel %vm543, %v1498, 0
      %1526 = vmatpush.bf16.msra.mxu0 0
      %1527 = vmatpush.bf16.msra.mxu0 0
      %1528 = vmatpush.bf16.msra.mxu0 0
      %1529 = vmatpush.bf16.msra.mxu0 0
      %1530 = vmatpush.bf16.msra.mxu0 0
      %1531 = vmatpush.bf16.msra.mxu0 0
      %1532 = vmatpush.bf16.msra.mxu0 0
      %1533 = vmatpush.bf16.msra.mxu0 %v1524
      %1534 = vmatmul.bf16.gmra.mxu0 %v1512
      %v1535 = vpop.f32.mrf.mxu0
      %v1536 = vadd.f32 0.0, %v1535
      %v1537 = vpop.f32.mrf.mxu0
      %v1538 = vadd.f32 0.0, %v1537
      %1539 = vmatmul.bf16.gmra.mxu0 %v1515
      %v1540 = vpop.f32.mrf.mxu0
      %v1541 = vadd.f32 0.0, %v1540
      %v1542 = vpop.f32.mrf.mxu0
      %v1543 = vadd.f32 0.0, %v1542
      %1544 = vmatmul.bf16.gmra.mxu0 %v1518
      %v1545 = vpop.f32.mrf.mxu0
      %v1546 = vadd.f32 0.0, %v1545
      %v1547 = vpop.f32.mrf.mxu0
      %v1548 = vadd.f32 0.0, %v1547
      %1549 = vmatmul.bf16.gmra.mxu0 %v1521
      %v1550 = vpop.f32.mrf.mxu0
      %v1551 = vadd.f32 0.0, %v1550
      %v1552 = vpop.f32.mrf.mxu0
      %v1553 = vadd.f32 0.0, %v1552
      %1554 = vdwg.mxu0
      %v1555 = vadd.f32 %v1350, %v1536
      %v1556 = vadd.f32 %v1352, %v1538
      %v1557 = vadd.f32 %v1355, %v1541
      %v1558 = vadd.f32 %v1357, %v1543
      %v1559 = vadd.f32 %v1360, %v1546
      %v1560 = vadd.f32 %v1362, %v1548
      %v1561 = vadd.f32 %v1365, %v1551
      %v1562 = vadd.f32 %v1367, %v1553
      %v1563 = vld [vmem:[%s640] sm:$0xe]
      %v1564 = vld [vmem:[%s640 + $0x8] sm:$0xe]
      %v1565 = vld [vmem:[%s640 + $0x10] sm:$0xe]
      %v1566 = vld [vmem:[%s640 + $0x18] sm:$0xe]
      %v1567 = vld [vmem:[%s640 + $0x20] sm:$0xe]
      %v1568 = vld [vmem:[%s640 + $0x28] sm:$0xe]
      %v1569 = vld [vmem:[%s640 + $0x30] sm:$0xe]
      %v1570 = vld [vmem:[%s640 + $0x38] sm:$0xe]
      %v1587 = vrot.slane %v1563, 5
      %v1588 = vrot.slane %v1587, 4
      %v1589 = vrot.slane %v1370, 5
      %v1590 = vsel %vm1222, %v1588, %v1589
      %v1591 = vrot.slane %v1564, 5
      %v1592 = vrot.slane %v1591, 4
      %v1593 = vrot.slane %v1372, 5
      %v1594 = vsel %vm1222, %v1592, %v1593
      %v1595 = vrot.slane %v1565, 5
      %v1596 = vrot.slane %v1595, 4
      %v1597 = vrot.slane %v1374, 5
      %v1598 = vsel %vm1222, %v1596, %v1597
      %v1599 = vrot.slane %v1566, 5
      %v1600 = vrot.slane %v1599, 4
      %v1601 = vrot.slane %v1376, 5
      %v1602 = vsel %vm1222, %v1600, %v1601
      %v1603 = vrot.slane %v1567, 5
      %v1604 = vrot.slane %v1603, 4
      %v1605 = vrot.slane %v1378, 5
      %v1606 = vsel %vm1222, %v1604, %v1605
      %v1607 = vrot.slane %v1568, 5
      %v1608 = vrot.slane %v1607, 4
      %v1609 = vrot.slane %v1380, 5
      %v1610 = vsel %vm1222, %v1608, %v1609
      %v1611 = vrot.slane %v1569, 5
      %v1612 = vrot.slane %v1611, 4
      %v1613 = vrot.slane %v1382, 5
      %v1614 = vsel %vm1222, %v1612, %v1613
      %v1615 = vrot.slane %v1570, 5
      %v1616 = vrot.slane %v1615, 4
      %v1617 = vrot.slane %v1384, 5
      %v1618 = vsel %vm1222, %v1616, %v1617
      %s1619 = scalar_lea.vmem %s1, 28
      %v1620 = vld [vmem:[%s1619] sm:$0xf]
      %v1621 = vunpack.c.l.b16 %v1590
      %v1622 = vunpack.c.l.b16 %v1594
      %v1623 = vunpack.c.l.b16 %v1598
      %v1624 = vunpack.c.l.b16 %v1602
      %v1625 = vunpack.c.l.b16 %v1606
      %v1626 = vunpack.c.l.b16 %v1610
      %v1627 = vunpack.c.l.b16 %v1614
      %v1628 = vunpack.c.l.b16 %v1618
      %v1629 = vpack.c.b16 %v1622, %v1621
      %v1630 = vpack.c.b16 %v1624, %v1623
      %v1631 = vpack.c.b16 %v1626, %v1625
      %v1632 = vpack.c.b16 %v1628, %v1627
      %v1634 = vsel %vm530, %v1629, 0
      %v1637 = vsel %vm530, %v1630, 0
      %v1640 = vsel %vm530, %v1631, 0
      %v1643 = vsel %vm530, %v1632, 0
      %v1646 = vsel %vm543, %v1620, 0
      %1648 = vmatpush.bf16.msra.mxu0 0
      %1649 = vmatpush.bf16.msra.mxu0 0
      %1650 = vmatpush.bf16.msra.mxu0 0
      %1651 = vmatpush.bf16.msra.mxu0 0
      %1652 = vmatpush.bf16.msra.mxu0 0
      %1653 = vmatpush.bf16.msra.mxu0 0
      %1654 = vmatpush.bf16.msra.mxu0 0
      %1655 = vmatpush.bf16.msra.mxu0 %v1646
      %1656 = vmatmul.bf16.gmra.mxu0 %v1634
      %v1657 = vpop.f32.mrf.mxu0
      %v1658 = vadd.f32 0.0, %v1657
      %v1659 = vpop.f32.mrf.mxu0
      %v1660 = vadd.f32 0.0, %v1659
      %1661 = vmatmul.bf16.gmra.mxu0 %v1637
      %v1662 = vpop.f32.mrf.mxu0
      %v1663 = vadd.f32 0.0, %v1662
      %v1664 = vpop.f32.mrf.mxu0
      %v1665 = vadd.f32 0.0, %v1664
      %1666 = vmatmul.bf16.gmra.mxu0 %v1640
      %v1667 = vpop.f32.mrf.mxu0
      %v1668 = vadd.f32 0.0, %v1667
      %v1669 = vpop.f32.mrf.mxu0
      %v1670 = vadd.f32 0.0, %v1669
      %1671 = vmatmul.bf16.gmra.mxu0 %v1643
      %v1672 = vpop.f32.mrf.mxu0
      %v1673 = vadd.f32 0.0, %v1672
      %v1674 = vpop.f32.mrf.mxu0
      %v1675 = vadd.f32 0.0, %v1674
      %1676 = vdwg.mxu0
      %v1677 = vadd.f32 %v1555, %v1658
      %v1678 = vadd.f32 %v1556, %v1660
      %v1679 = vadd.f32 %v1557, %v1663
      %v1680 = vadd.f32 %v1558, %v1665
      %v1681 = vadd.f32 %v1559, %v1668
      %v1682 = vadd.f32 %v1560, %v1670
      %v1683 = vadd.f32 %v1561, %v1673
      %v1684 = vadd.f32 %v1562, %v1675
      %v1685 = vld [vmem:[%s340 + $0x4] sm:$0xf]
      %v1686 = vld [vmem:[%s340 + $0x14] sm:$0xf]
      %v1687 = vld [vmem:[%s340 + $0x24] sm:$0xf]
      %v1688 = vld [vmem:[%s340 + $0x34] sm:$0xf]
      %v1689 = vld [vmem:[%s340 + $0x44] sm:$0xf]
      %v1690 = vld [vmem:[%s340 + $0x54] sm:$0xf]
      %v1691 = vld [vmem:[%s340 + $0x64] sm:$0xf]
      %v1692 = vld [vmem:[%s340 + $0x74] sm:$0xf]
      %v1693 = vunpack.c.l.bf16 %v1685
      %v1694 = vunpack.c.l.bf16 %v1686
      %v1695 = vunpack.c.l.bf16 %v1687
      %v1696 = vunpack.c.l.bf16 %v1688
      %v1697 = vunpack.c.l.bf16 %v1689
      %v1698 = vunpack.c.l.bf16 %v1690
      %v1699 = vunpack.c.l.bf16 %v1691
      %v1700 = vunpack.c.l.bf16 %v1692
      %v1701 = vadd.f32 %v1677, %v934
      %v1702 = vadd.f32 %v1678, %v934
      %v1703 = vadd.f32 %v1679, %v934
      %v1704 = vadd.f32 %v1680, %v934
      %v1705 = vadd.f32 %v1681, %v934
      %v1706 = vadd.f32 %v1682, %v934
      %v1707 = vadd.f32 %v1683, %v934
      %v1708 = vadd.f32 %v1684, %v934
      %v1709 = vadd.f32 %v1701, %v1693
      %v1710 = vadd.f32 %v1702, %v1694
      %v1711 = vadd.f32 %v1703, %v1695
      %v1712 = vadd.f32 %v1704, %v1696
      %v1713 = vadd.f32 %v1705, %v1697
      %v1714 = vadd.f32 %v1706, %v1698
      %v1715 = vadd.f32 %v1707, %v1699
      %v1716 = vadd.f32 %v1708, %v1700
      %v1717 = vmax.f32 %v1709, 0.0
      %v1718 = vmax.f32 %v1710, 0.0
      %v1719 = vmax.f32 %v1711, 0.0
      %v1720 = vmax.f32 %v1712, 0.0
      %v1721 = vmax.f32 %v1713, 0.0
      %v1722 = vmax.f32 %v1714, 0.0
      %v1723 = vmax.f32 %v1715, 0.0
      %v1724 = vmax.f32 %v1716, 0.0
      %v1725 = vpack.c.bf16 %v1717, %v1717
      %v1726 = vpack.c.bf16 %v1718, %v1718
      %v1727 = vpack.c.bf16 %v1719, %v1719
      %v1728 = vpack.c.bf16 %v1720, %v1720
      %v1729 = vpack.c.bf16 %v1721, %v1721
      %v1730 = vpack.c.bf16 %v1722, %v1722
      %v1731 = vpack.c.bf16 %v1723, %v1723
      %v1732 = vpack.c.bf16 %v1724, %v1724
      %1733 = vst [vmem:[%s351 + $0x4] sm:$0xf] %v1725
      %1734 = vst [vmem:[%s351 + $0x14] sm:$0xf] %v1726
      %1735 = vst [vmem:[%s351 + $0x24] sm:$0xf] %v1727
      %1736 = vst [vmem:[%s351 + $0x34] sm:$0xf] %v1728
      %1737 = vst [vmem:[%s351 + $0x44] sm:$0xf] %v1729
      %1738 = vst [vmem:[%s351 + $0x54] sm:$0xf] %v1730
      %1739 = vst [vmem:[%s351 + $0x64] sm:$0xf] %v1731
      %1740 = vst [vmem:[%s351 + $0x74] sm:$0xf] %v1732
      %v1741 = vsel %vm984, %v1717, 0.0
      %v1742 = vsel %vm985, %v1718, 0.0
      %v1743 = vsel %vm986, %v1719, 0.0
      %v1744 = vsel %vm987, %v1720, 0.0
      %v1745 = vsel %vm988, %v1721, 0.0
      %v1746 = vsel %vm989, %v1722, 0.0
      %v1747 = vsel %vm990, %v1723, 0.0
      %v1748 = vsel %vm991, %v1724, 0.0
      %v1749 = vadd.f32 %v1741, %v1742
      %v1750 = vadd.f32 %v1749, %v1743
      %v1751 = vadd.f32 %v1750, %v1744
      %v1752 = vadd.f32 %v1751, %v1745
      %v1753 = vadd.f32 %v1752, %v1746
      %v1754 = vadd.f32 %v1753, %v1747
      %v1755 = vadd.f32 %v1754, %v1748
      %v1756 = vrot.slane %v1755, 4
      %v1757 = vadd.f32 %v1755, %v1756
      %v1758 = vrot.slane %v1757, 2
      %v1759 = vadd.f32 %v1757, %v1758
      %v1760 = vrot.slane %v1759, 1
      %v1761 = vadd.f32 %v1759, %v1760
      %v1762 = vmul.f32 %v1761, %v1027
      %v1763 = vsub.f32 %v1717, %v1762
      %v1764 = vsub.f32 %v1718, %v1762
      %v1765 = vsub.f32 %v1719, %v1762
      %v1766 = vsub.f32 %v1720, %v1762
      %v1767 = vsub.f32 %v1721, %v1762
      %v1768 = vsub.f32 %v1722, %v1762
      %v1769 = vsub.f32 %v1723, %v1762
      %v1770 = vsub.f32 %v1724, %v1762
      %v1771 = vsel %vm984, %v1763, 0.0
      %v1772 = vsel %vm985, %v1764, 0.0
      %v1773 = vsel %vm986, %v1765, 0.0
      %v1774 = vsel %vm987, %v1766, 0.0
      %v1775 = vsel %vm988, %v1767, 0.0
      %v1776 = vsel %vm989, %v1768, 0.0
      %v1777 = vsel %vm990, %v1769, 0.0
      %v1778 = vsel %vm991, %v1770, 0.0
      %v1779 = vmul.f32 %v1771, %v1771
      %v1780 = vmul.f32 %v1772, %v1772
      %v1781 = vmul.f32 %v1773, %v1773
      %v1782 = vmul.f32 %v1774, %v1774
      %v1783 = vmul.f32 %v1775, %v1775
      %v1784 = vmul.f32 %v1776, %v1776
      %v1785 = vmul.f32 %v1777, %v1777
      %v1786 = vmul.f32 %v1778, %v1778
      %v1787 = vadd.f32 %v1779, %v1780
      %v1788 = vadd.f32 %v1787, %v1781
      %v1789 = vadd.f32 %v1788, %v1782
      %v1790 = vadd.f32 %v1789, %v1783
      %v1791 = vadd.f32 %v1790, %v1784
      %v1792 = vadd.f32 %v1791, %v1785
      %v1793 = vadd.f32 %v1792, %v1786
      %v1794 = vrot.slane %v1793, 4
      %v1795 = vadd.f32 %v1793, %v1794
      %v1796 = vrot.slane %v1795, 2
      %v1797 = vadd.f32 %v1795, %v1796
      %v1798 = vrot.slane %v1797, 1
      %v1799 = vadd.f32 %v1797, %v1798
      %v1800 = vld [vmem:[%s640] sm:$0xf]
      %v1801 = vld [vmem:[%s640 + $0x8] sm:$0xf]
      %v1802 = vld [vmem:[%s640 + $0x10] sm:$0xf]
      %v1803 = vld [vmem:[%s640 + $0x18] sm:$0xf]
      %v1804 = vld [vmem:[%s640 + $0x20] sm:$0xf]
      %v1805 = vld [vmem:[%s640 + $0x28] sm:$0xf]
      %v1806 = vld [vmem:[%s640 + $0x30] sm:$0xf]
      %v1807 = vld [vmem:[%s640 + $0x38] sm:$0xf]
      %s1808 = scalar_lea.vmem %s1, 32
      %v1809 = vld [vmem:[%s1808] sm:$0xf]
      %v1810 = vld [vmem:[%s640 + $0x4] sm:$0x1]
      %v1811 = vld [vmem:[%s640 + $0xc] sm:$0x1]
      %v1812 = vld [vmem:[%s640 + $0x14] sm:$0x1]
      %v1813 = vld [vmem:[%s640 + $0x1c] sm:$0x1]
      %v1814 = vld [vmem:[%s640 + $0x24] sm:$0x1]
      %v1815 = vld [vmem:[%s640 + $0x2c] sm:$0x1]
      %v1816 = vld [vmem:[%s640 + $0x34] sm:$0x1]
      %v1817 = vld [vmem:[%s640 + $0x3c] sm:$0x1]
      %v1819 = vshrl.u32 %v1800, 16
      %v1821 = vrot.slane %v1819, 4
      %v1822 = vshll.u32 %v1800, 16
      %v1824 = vrot.slane %v1822, 5
      %v1825 = vor.u32 %v1821, %v1824
      %v1826 = vrot.slane %v1825, 4
      %v1828 = vshll.u32 %v1810, 16
      %v1830 = vrot.slane %v1828, 5
      %v1831 = vsel %vm403, %v1826, %v1830
      %v1833 = vshrl.u32 %v1801, 16
      %v1835 = vrot.slane %v1833, 4
      %v1836 = vshll.u32 %v1801, 16
      %v1838 = vrot.slane %v1836, 5
      %v1839 = vor.u32 %v1835, %v1838
      %v1840 = vrot.slane %v1839, 4
      %v1842 = vshll.u32 %v1811, 16
      %v1844 = vrot.slane %v1842, 5
      %v1845 = vsel %vm403, %v1840, %v1844
      %v1847 = vshrl.u32 %v1802, 16
      %v1849 = vrot.slane %v1847, 4
      %v1850 = vshll.u32 %v1802, 16
      %v1852 = vrot.slane %v1850, 5
      %v1853 = vor.u32 %v1849, %v1852
      %v1854 = vrot.slane %v1853, 4
      %v1856 = vshll.u32 %v1812, 16
      %v1858 = vrot.slane %v1856, 5
      %v1859 = vsel %vm403, %v1854, %v1858
      %v1861 = vshrl.u32 %v1803, 16
      %v1863 = vrot.slane %v1861, 4
      %v1864 = vshll.u32 %v1803, 16
      %v1866 = vrot.slane %v1864, 5
      %v1867 = vor.u32 %v1863, %v1866
      %v1868 = vrot.slane %v1867, 4
      %v1870 = vshll.u32 %v1813, 16
      %v1872 = vrot.slane %v1870, 5
      %v1873 = vsel %vm403, %v1868, %v1872
      %v1875 = vshrl.u32 %v1804, 16
      %v1877 = vrot.slane %v1875, 4
      %v1878 = vshll.u32 %v1804, 16
      %v1880 = vrot.slane %v1878, 5
      %v1881 = vor.u32 %v1877, %v1880
      %v1882 = vrot.slane %v1881, 4
      %v1884 = vshll.u32 %v1814, 16
      %v1886 = vrot.slane %v1884, 5
      %v1887 = vsel %vm403, %v1882, %v1886
      %v1889 = vshrl.u32 %v1805, 16
      %v1891 = vrot.slane %v1889, 4
      %v1892 = vshll.u32 %v1805, 16
      %v1894 = vrot.slane %v1892, 5
      %v1895 = vor.u32 %v1891, %v1894
      %v1896 = vrot.slane %v1895, 4
      %v1898 = vshll.u32 %v1815, 16
      %v1900 = vrot.slane %v1898, 5
      %v1901 = vsel %vm403, %v1896, %v1900
      %v1903 = vshrl.u32 %v1806, 16
      %v1905 = vrot.slane %v1903, 4
      %v1906 = vshll.u32 %v1806, 16
      %v1908 = vrot.slane %v1906, 5
      %v1909 = vor.u32 %v1905, %v1908
      %v1910 = vrot.slane %v1909, 4
      %v1912 = vshll.u32 %v1816, 16
      %v1914 = vrot.slane %v1912, 5
      %v1915 = vsel %vm403, %v1910, %v1914
      %v1917 = vshrl.u32 %v1807, 16
      %v1919 = vrot.slane %v1917, 4
      %v1920 = vshll.u32 %v1807, 16
      %v1922 = vrot.slane %v1920, 5
      %v1923 = vor.u32 %v1919, %v1922
      %v1924 = vrot.slane %v1923, 4
      %v1926 = vshll.u32 %v1817, 16
      %v1928 = vrot.slane %v1926, 5
      %v1929 = vsel %vm403, %v1924, %v1928
      %s1930 = scalar_lea.vmem %s1, 36
      %v1931 = vld [vmem:[%s1930] sm:$0xf]
      %v1932 = vunpack.c.l.b16 %v1831
      %v1933 = vunpack.c.l.b16 %v1845
      %v1934 = vunpack.c.l.b16 %v1859
      %v1935 = vunpack.c.l.b16 %v1873
      %v1936 = vunpack.c.l.b16 %v1887
      %v1937 = vunpack.c.l.b16 %v1901
      %v1938 = vunpack.c.l.b16 %v1915
      %v1939 = vunpack.c.l.b16 %v1929
      %v1940 = vpack.c.b16 %v1933, %v1932
      %v1941 = vpack.c.b16 %v1935, %v1934
      %v1942 = vpack.c.b16 %v1937, %v1936
      %v1943 = vpack.c.b16 %v1939, %v1938
      %v1945 = vsel %vm530, %v1940, 0
      %v1948 = vsel %vm530, %v1941, 0
      %v1951 = vsel %vm530, %v1942, 0
      %v1954 = vsel %vm530, %v1943, 0
      %v1957 = vsel %vm543, %v1931, 0
      %1959 = vmatpush.bf16.msra.mxu0 0
      %1960 = vmatpush.bf16.msra.mxu0 0
      %1961 = vmatpush.bf16.msra.mxu0 0
      %1962 = vmatpush.bf16.msra.mxu0 0
      %1963 = vmatpush.bf16.msra.mxu0 0
      %1964 = vmatpush.bf16.msra.mxu0 0
      %1965 = vmatpush.bf16.msra.mxu0 0
      %1966 = vmatpush.bf16.msra.mxu0 %v1957
      %1967 = vmatmul.bf16.gmra.mxu0 %v1945
      %v1968 = vpop.f32.mrf.mxu0
      %v1969 = vadd.f32 0.0, %v1968
      %v1970 = vpop.f32.mrf.mxu0
      %v1971 = vadd.f32 0.0, %v1970
      %1972 = vmatmul.bf16.gmra.mxu0 %v1948
      %v1973 = vpop.f32.mrf.mxu0
      %v1974 = vadd.f32 0.0, %v1973
      %v1975 = vpop.f32.mrf.mxu0
      %v1976 = vadd.f32 0.0, %v1975
      %1977 = vmatmul.bf16.gmra.mxu0 %v1951
      %v1978 = vpop.f32.mrf.mxu0
      %v1979 = vadd.f32 0.0, %v1978
      %v1980 = vpop.f32.mrf.mxu0
      %v1981 = vadd.f32 0.0, %v1980
      %1982 = vmatmul.bf16.gmra.mxu0 %v1954
      %v1983 = vpop.f32.mrf.mxu0
      %v1984 = vadd.f32 0.0, %v1983
      %v1985 = vpop.f32.mrf.mxu0
      %v1986 = vadd.f32 0.0, %v1985
      %1987 = vdwg.mxu0
      %v1996 = vunpack.c.l.b16 %v1800
      %v1997 = vunpack.c.l.b16 %v1801
      %v1998 = vunpack.c.l.b16 %v1802
      %v1999 = vunpack.c.l.b16 %v1803
      %v2000 = vunpack.c.l.b16 %v1804
      %v2001 = vunpack.c.l.b16 %v1805
      %v2002 = vunpack.c.l.b16 %v1806
      %v2003 = vunpack.c.l.b16 %v1807
      %v2004 = vpack.c.b16 %v1997, %v1996
      %v2005 = vpack.c.b16 %v1999, %v1998
      %v2006 = vpack.c.b16 %v2001, %v2000
      %v2007 = vpack.c.b16 %v2003, %v2002
      %v2009 = vsel %vm530, %v2004, 0
      %v2012 = vsel %vm530, %v2005, 0
      %v2015 = vsel %vm530, %v2006, 0
      %v2018 = vsel %vm530, %v2007, 0
      %v2021 = vsel %vm543, %v1809, 0
      %2023 = vmatpush.bf16.msra.mxu0 0
      %2024 = vmatpush.bf16.msra.mxu0 0
      %2025 = vmatpush.bf16.msra.mxu0 0
      %2026 = vmatpush.bf16.msra.mxu0 0
      %2027 = vmatpush.bf16.msra.mxu0 0
      %2028 = vmatpush.bf16.msra.mxu0 0
      %2029 = vmatpush.bf16.msra.mxu0 0
      %2030 = vmatpush.bf16.msra.mxu0 %v2021
      %2031 = vmatmul.bf16.gmra.mxu0 %v2009
      %v2032 = vpop.f32.mrf.mxu0
      %v2033 = vadd.f32 %v1969, %v2032
      %v2034 = vpop.f32.mrf.mxu0
      %v2035 = vadd.f32 %v1971, %v2034
      %2036 = vmatmul.bf16.gmra.mxu0 %v2012
      %v2037 = vpop.f32.mrf.mxu0
      %v2038 = vadd.f32 %v1974, %v2037
      %v2039 = vpop.f32.mrf.mxu0
      %v2040 = vadd.f32 %v1976, %v2039
      %2041 = vmatmul.bf16.gmra.mxu0 %v2015
      %v2042 = vpop.f32.mrf.mxu0
      %v2043 = vadd.f32 %v1979, %v2042
      %v2044 = vpop.f32.mrf.mxu0
      %v2045 = vadd.f32 %v1981, %v2044
      %2046 = vmatmul.bf16.gmra.mxu0 %v2018
      %v2047 = vpop.f32.mrf.mxu0
      %v2048 = vadd.f32 %v1984, %v2047
      %v2049 = vpop.f32.mrf.mxu0
      %v2050 = vadd.f32 %v1986, %v2049
      %2051 = vdwg.mxu0
      %s2052 = scalar_lea.vmem %s330, 16
      %v2053 = vld [vmem:[%s2052] sm:$0xf]
      %v2054 = vld [vmem:[%s2052 + $0x8] sm:$0xf]
      %v2055 = vld [vmem:[%s2052 + $0x10] sm:$0xf]
      %v2056 = vld [vmem:[%s2052 + $0x18] sm:$0xf]
      %v2057 = vld [vmem:[%s2052 + $0x20] sm:$0xf]
      %v2058 = vld [vmem:[%s2052 + $0x28] sm:$0xf]
      %v2059 = vld [vmem:[%s2052 + $0x30] sm:$0xf]
      %v2060 = vld [vmem:[%s2052 + $0x38] sm:$0xf]
      %s2061 = scalar_lea.vmem %s1, 40
      %v2062 = vld [vmem:[%s2061] sm:$0xf]
      %v2071 = vunpack.c.l.b16 %v2053
      %v2072 = vunpack.c.l.b16 %v2054
      %v2073 = vunpack.c.l.b16 %v2055
      %v2074 = vunpack.c.l.b16 %v2056
      %v2075 = vunpack.c.l.b16 %v2057
      %v2076 = vunpack.c.l.b16 %v2058
      %v2077 = vunpack.c.l.b16 %v2059
      %v2078 = vunpack.c.l.b16 %v2060
      %v2079 = vpack.c.b16 %v2072, %v2071
      %v2080 = vpack.c.b16 %v2074, %v2073
      %v2081 = vpack.c.b16 %v2076, %v2075
      %v2082 = vpack.c.b16 %v2078, %v2077
      %v2084 = vsel %vm530, %v2079, 0
      %v2087 = vsel %vm530, %v2080, 0
      %v2090 = vsel %vm530, %v2081, 0
      %v2093 = vsel %vm530, %v2082, 0
      %v2096 = vsel %vm543, %v2062, 0
      %2098 = vmatpush.bf16.msra.mxu0 0
      %2099 = vmatpush.bf16.msra.mxu0 0
      %2100 = vmatpush.bf16.msra.mxu0 0
      %2101 = vmatpush.bf16.msra.mxu0 0
      %2102 = vmatpush.bf16.msra.mxu0 0
      %2103 = vmatpush.bf16.msra.mxu0 0
      %2104 = vmatpush.bf16.msra.mxu0 0
      %2105 = vmatpush.bf16.msra.mxu0 %v2096
      %2106 = vmatmul.bf16.gmra.mxu0 %v2084
      %v2107 = vpop.f32.mrf.mxu0
      %v2108 = vadd.f32 0.0, %v2107
      %v2109 = vpop.f32.mrf.mxu0
      %v2110 = vadd.f32 0.0, %v2109
      %2111 = vmatmul.bf16.gmra.mxu0 %v2087
      %v2112 = vpop.f32.mrf.mxu0
      %v2113 = vadd.f32 0.0, %v2112
      %v2114 = vpop.f32.mrf.mxu0
      %v2115 = vadd.f32 0.0, %v2114
      %2116 = vmatmul.bf16.gmra.mxu0 %v2090
      %v2117 = vpop.f32.mrf.mxu0
      %v2118 = vadd.f32 0.0, %v2117
      %v2119 = vpop.f32.mrf.mxu0
      %v2120 = vadd.f32 0.0, %v2119
      %2121 = vmatmul.bf16.gmra.mxu0 %v2093
      %v2122 = vpop.f32.mrf.mxu0
      %v2123 = vadd.f32 0.0, %v2122
      %v2124 = vpop.f32.mrf.mxu0
      %v2125 = vadd.f32 0.0, %v2124
      %2126 = vdwg.mxu0
      %v2127 = vadd.f32 %v2033, %v2108
      %v2128 = vadd.f32 %v2035, %v2110
      %v2129 = vadd.f32 %v2038, %v2113
      %v2130 = vadd.f32 %v2040, %v2115
      %v2131 = vadd.f32 %v2043, %v2118
      %v2132 = vadd.f32 %v2045, %v2120
      %v2133 = vadd.f32 %v2048, %v2123
      %v2134 = vadd.f32 %v2050, %v2125
      %v2135 = vld [vmem:[%s2052] sm:$0xf]
      %v2136 = vld [vmem:[%s2052 + $0x4] sm:$0x1]
      %v2137 = vld [vmem:[%s2052 + $0x8] sm:$0xf]
      %v2138 = vld [vmem:[%s2052 + $0xc] sm:$0x1]
      %v2139 = vld [vmem:[%s2052 + $0x10] sm:$0xf]
      %v2140 = vld [vmem:[%s2052 + $0x14] sm:$0x1]
      %v2141 = vld [vmem:[%s2052 + $0x18] sm:$0xf]
      %v2142 = vld [vmem:[%s2052 + $0x1c] sm:$0x1]
      %v2143 = vld [vmem:[%s2052 + $0x20] sm:$0xf]
      %v2144 = vld [vmem:[%s2052 + $0x24] sm:$0x1]
      %v2145 = vld [vmem:[%s2052 + $0x28] sm:$0xf]
      %v2146 = vld [vmem:[%s2052 + $0x2c] sm:$0x1]
      %v2147 = vld [vmem:[%s2052 + $0x30] sm:$0xf]
      %v2148 = vld [vmem:[%s2052 + $0x34] sm:$0x1]
      %v2149 = vld [vmem:[%s2052 + $0x38] sm:$0xf]
      %v2150 = vld [vmem:[%s2052 + $0x3c] sm:$0x1]
      %v2152 = vshrl.u32 %v2135, 16
      %v2154 = vrot.slane %v2152, 4
      %v2155 = vshll.u32 %v2135, 16
      %v2157 = vrot.slane %v2155, 5
      %v2158 = vor.u32 %v2154, %v2157
      %v2159 = vrot.slane %v2158, 4
      %v2161 = vshll.u32 %v2136, 16
      %v2163 = vrot.slane %v2161, 5
      %v2164 = vsel %vm403, %v2159, %v2163
      %v2166 = vshrl.u32 %v2137, 16
      %v2168 = vrot.slane %v2166, 4
      %v2169 = vshll.u32 %v2137, 16
      %v2171 = vrot.slane %v2169, 5
      %v2172 = vor.u32 %v2168, %v2171
      %v2173 = vrot.slane %v2172, 4
      %v2175 = vshll.u32 %v2138, 16
      %v2177 = vrot.slane %v2175, 5
      %v2178 = vsel %vm403, %v2173, %v2177
      %v2180 = vshrl.u32 %v2139, 16
      %v2182 = vrot.slane %v2180, 4
      %v2183 = vshll.u32 %v2139, 16
      %v2185 = vrot.slane %v2183, 5
      %v2186 = vor.u32 %v2182, %v2185
      %v2187 = vrot.slane %v2186, 4
      %v2189 = vshll.u32 %v2140, 16
      %v2191 = vrot.slane %v2189, 5
      %v2192 = vsel %vm403, %v2187, %v2191
      %v2194 = vshrl.u32 %v2141, 16
      %v2196 = vrot.slane %v2194, 4
      %v2197 = vshll.u32 %v2141, 16
      %v2199 = vrot.slane %v2197, 5
      %v2200 = vor.u32 %v2196, %v2199
      %v2201 = vrot.slane %v2200, 4
      %v2203 = vshll.u32 %v2142, 16
      %v2205 = vrot.slane %v2203, 5
      %v2206 = vsel %vm403, %v2201, %v2205
      %v2208 = vshrl.u32 %v2143, 16
      %v2210 = vrot.slane %v2208, 4
      %v2211 = vshll.u32 %v2143, 16
      %v2213 = vrot.slane %v2211, 5
      %v2214 = vor.u32 %v2210, %v2213
      %v2215 = vrot.slane %v2214, 4
      %v2217 = vshll.u32 %v2144, 16
      %v2219 = vrot.slane %v2217, 5
      %v2220 = vsel %vm403, %v2215, %v2219
      %v2222 = vshrl.u32 %v2145, 16
      %v2224 = vrot.slane %v2222, 4
      %v2225 = vshll.u32 %v2145, 16
      %v2227 = vrot.slane %v2225, 5
      %v2228 = vor.u32 %v2224, %v2227
      %v2229 = vrot.slane %v2228, 4
      %v2231 = vshll.u32 %v2146, 16
      %v2233 = vrot.slane %v2231, 5
      %v2234 = vsel %vm403, %v2229, %v2233
      %v2236 = vshrl.u32 %v2147, 16
      %v2238 = vrot.slane %v2236, 4
      %v2239 = vshll.u32 %v2147, 16
      %v2241 = vrot.slane %v2239, 5
      %v2242 = vor.u32 %v2238, %v2241
      %v2243 = vrot.slane %v2242, 4
      %v2245 = vshll.u32 %v2148, 16
      %v2247 = vrot.slane %v2245, 5
      %v2248 = vsel %vm403, %v2243, %v2247
      %v2250 = vshrl.u32 %v2149, 16
      %v2252 = vrot.slane %v2250, 4
      %v2253 = vshll.u32 %v2149, 16
      %v2255 = vrot.slane %v2253, 5
      %v2256 = vor.u32 %v2252, %v2255
      %v2257 = vrot.slane %v2256, 4
      %v2259 = vshll.u32 %v2150, 16
      %v2261 = vrot.slane %v2259, 5
      %v2262 = vsel %vm403, %v2257, %v2261
      %s2263 = scalar_lea.vmem %s1, 44
      %v2264 = vld [vmem:[%s2263] sm:$0xf]
      %v2265 = vunpack.c.l.b16 %v2164
      %v2266 = vunpack.c.l.b16 %v2178
      %v2267 = vunpack.c.l.b16 %v2192
      %v2268 = vunpack.c.l.b16 %v2206
      %v2269 = vunpack.c.l.b16 %v2220
      %v2270 = vunpack.c.l.b16 %v2234
      %v2271 = vunpack.c.l.b16 %v2248
      %v2272 = vunpack.c.l.b16 %v2262
      %v2273 = vpack.c.b16 %v2266, %v2265
      %v2274 = vpack.c.b16 %v2268, %v2267
      %v2275 = vpack.c.b16 %v2270, %v2269
      %v2276 = vpack.c.b16 %v2272, %v2271
      %v2278 = vsel %vm530, %v2273, 0
      %v2281 = vsel %vm530, %v2274, 0
      %v2284 = vsel %vm530, %v2275, 0
      %v2287 = vsel %vm530, %v2276, 0
      %v2290 = vsel %vm543, %v2264, 0
      %2292 = vmatpush.bf16.msra.mxu0 0
      %2293 = vmatpush.bf16.msra.mxu0 0
      %2294 = vmatpush.bf16.msra.mxu0 0
      %2295 = vmatpush.bf16.msra.mxu0 0
      %2296 = vmatpush.bf16.msra.mxu0 0
      %2297 = vmatpush.bf16.msra.mxu0 0
      %2298 = vmatpush.bf16.msra.mxu0 0
      %2299 = vmatpush.bf16.msra.mxu0 %v2290
      %2300 = vmatmul.bf16.gmra.mxu0 %v2278
      %v2301 = vpop.f32.mrf.mxu0
      %v2302 = vadd.f32 0.0, %v2301
      %v2303 = vpop.f32.mrf.mxu0
      %v2304 = vadd.f32 0.0, %v2303
      %2305 = vmatmul.bf16.gmra.mxu0 %v2281
      %v2306 = vpop.f32.mrf.mxu0
      %v2307 = vadd.f32 0.0, %v2306
      %v2308 = vpop.f32.mrf.mxu0
      %v2309 = vadd.f32 0.0, %v2308
      %2310 = vmatmul.bf16.gmra.mxu0 %v2284
      %v2311 = vpop.f32.mrf.mxu0
      %v2312 = vadd.f32 0.0, %v2311
      %v2313 = vpop.f32.mrf.mxu0
      %v2314 = vadd.f32 0.0, %v2313
      %2315 = vmatmul.bf16.gmra.mxu0 %v2287
      %v2316 = vpop.f32.mrf.mxu0
      %v2317 = vadd.f32 0.0, %v2316
      %v2318 = vpop.f32.mrf.mxu0
      %v2319 = vadd.f32 0.0, %v2318
      %2320 = vdwg.mxu0
      %v2321 = vadd.f32 %v2127, %v2302
      %v2322 = vadd.f32 %v2128, %v2304
      %v2323 = vadd.f32 %v2129, %v2307
      %v2324 = vadd.f32 %v2130, %v2309
      %v2325 = vadd.f32 %v2131, %v2312
      %v2326 = vadd.f32 %v2132, %v2314
      %v2327 = vadd.f32 %v2133, %v2317
      %v2328 = vadd.f32 %v2134, %v2319
      %s2329 = scalar_lea.vmem %s340, 8
      %v2330 = vld [vmem:[%s2329] sm:$0xf]
      %v2331 = vld [vmem:[%s2329 + $0x10] sm:$0xf]
      %v2332 = vld [vmem:[%s2329 + $0x20] sm:$0xf]
      %v2333 = vld [vmem:[%s2329 + $0x30] sm:$0xf]
      %v2334 = vld [vmem:[%s2329 + $0x40] sm:$0xf]
      %v2335 = vld [vmem:[%s2329 + $0x50] sm:$0xf]
      %v2336 = vld [vmem:[%s2329 + $0x60] sm:$0xf]
      %v2337 = vld [vmem:[%s2329 + $0x70] sm:$0xf]
      %v2338 = vunpack.c.l.bf16 %v2330
      %v2339 = vunpack.c.l.bf16 %v2331
      %v2340 = vunpack.c.l.bf16 %v2332
      %v2341 = vunpack.c.l.bf16 %v2333
      %v2342 = vunpack.c.l.bf16 %v2334
      %v2343 = vunpack.c.l.bf16 %v2335
      %v2344 = vunpack.c.l.bf16 %v2336
      %v2345 = vunpack.c.l.bf16 %v2337
      %v2346 = vadd.f32 %v2321, %v934
      %v2347 = vadd.f32 %v2322, %v934
      %v2348 = vadd.f32 %v2323, %v934
      %v2349 = vadd.f32 %v2324, %v934
      %v2350 = vadd.f32 %v2325, %v934
      %v2351 = vadd.f32 %v2326, %v934
      %v2352 = vadd.f32 %v2327, %v934
      %v2353 = vadd.f32 %v2328, %v934
      %v2354 = vadd.f32 %v2346, %v2338
      %v2355 = vadd.f32 %v2347, %v2339
      %v2356 = vadd.f32 %v2348, %v2340
      %v2357 = vadd.f32 %v2349, %v2341
      %v2358 = vadd.f32 %v2350, %v2342
      %v2359 = vadd.f32 %v2351, %v2343
      %v2360 = vadd.f32 %v2352, %v2344
      %v2361 = vadd.f32 %v2353, %v2345
      %v2362 = vmax.f32 %v2354, 0.0
      %v2363 = vmax.f32 %v2355, 0.0
      %v2364 = vmax.f32 %v2356, 0.0
      %v2365 = vmax.f32 %v2357, 0.0
      %v2366 = vmax.f32 %v2358, 0.0
      %v2367 = vmax.f32 %v2359, 0.0
      %v2368 = vmax.f32 %v2360, 0.0
      %v2369 = vmax.f32 %v2361, 0.0
      %v2370 = vpack.c.bf16 %v2362, %v2362
      %v2371 = vpack.c.bf16 %v2363, %v2363
      %v2372 = vpack.c.bf16 %v2364, %v2364
      %v2373 = vpack.c.bf16 %v2365, %v2365
      %v2374 = vpack.c.bf16 %v2366, %v2366
      %v2375 = vpack.c.bf16 %v2367, %v2367
      %v2376 = vpack.c.bf16 %v2368, %v2368
      %v2377 = vpack.c.bf16 %v2369, %v2369
      %s2378 = scalar_lea.vmem %s351, 8
      %2379 = vst [vmem:[%s2378] sm:$0xf] %v2370
      %2380 = vst [vmem:[%s2378 + $0x10] sm:$0xf] %v2371
      %2381 = vst [vmem:[%s2378 + $0x20] sm:$0xf] %v2372
      %2382 = vst [vmem:[%s2378 + $0x30] sm:$0xf] %v2373
      %2383 = vst [vmem:[%s2378 + $0x40] sm:$0xf] %v2374
      %2384 = vst [vmem:[%s2378 + $0x50] sm:$0xf] %v2375
      %2385 = vst [vmem:[%s2378 + $0x60] sm:$0xf] %v2376
      %2386 = vst [vmem:[%s2378 + $0x70] sm:$0xf] %v2377
      %v2387 = vsel %vm984, %v2362, 0.0
      %v2388 = vsel %vm985, %v2363, 0.0
      %v2389 = vsel %vm986, %v2364, 0.0
      %v2390 = vsel %vm987, %v2365, 0.0
      %v2391 = vsel %vm988, %v2366, 0.0
      %v2392 = vsel %vm989, %v2367, 0.0
      %v2393 = vsel %vm990, %v2368, 0.0
      %v2394 = vsel %vm991, %v2369, 0.0
      %v2395 = vadd.f32 %v2387, %v2388
      %v2396 = vadd.f32 %v2395, %v2389
      %v2397 = vadd.f32 %v2396, %v2390
      %v2398 = vadd.f32 %v2397, %v2391
      %v2399 = vadd.f32 %v2398, %v2392
      %v2400 = vadd.f32 %v2399, %v2393
      %v2401 = vadd.f32 %v2400, %v2394
      %v2402 = vrot.slane %v2401, 4
      %v2403 = vadd.f32 %v2401, %v2402
      %v2404 = vrot.slane %v2403, 2
      %v2405 = vadd.f32 %v2403, %v2404
      %v2406 = vrot.slane %v2405, 1
      %v2407 = vadd.f32 %v2405, %v2406
      %v2408 = vmul.f32 %v2407, %v1027
      %v2409 = vsub.f32 %v2362, %v2408
      %v2410 = vsub.f32 %v2363, %v2408
      %v2411 = vsub.f32 %v2364, %v2408
      %v2412 = vsub.f32 %v2365, %v2408
      %v2413 = vsub.f32 %v2366, %v2408
      %v2414 = vsub.f32 %v2367, %v2408
      %v2415 = vsub.f32 %v2368, %v2408
      %v2416 = vsub.f32 %v2369, %v2408
      %v2417 = vsel %vm984, %v2409, 0.0
      %v2418 = vsel %vm985, %v2410, 0.0
      %v2419 = vsel %vm986, %v2411, 0.0
      %v2420 = vsel %vm987, %v2412, 0.0
      %v2421 = vsel %vm988, %v2413, 0.0
      %v2422 = vsel %vm989, %v2414, 0.0
      %v2423 = vsel %vm990, %v2415, 0.0
      %v2424 = vsel %vm991, %v2416, 0.0
      %v2425 = vmul.f32 %v2417, %v2417
      %v2426 = vmul.f32 %v2418, %v2418
      %v2427 = vmul.f32 %v2419, %v2419
      %v2428 = vmul.f32 %v2420, %v2420
      %v2429 = vmul.f32 %v2421, %v2421
      %v2430 = vmul.f32 %v2422, %v2422
      %v2431 = vmul.f32 %v2423, %v2423
      %v2432 = vmul.f32 %v2424, %v2424
      %v2433 = vadd.f32 %v2425, %v2426
      %v2434 = vadd.f32 %v2433, %v2427
      %v2435 = vadd.f32 %v2434, %v2428
      %v2436 = vadd.f32 %v2435, %v2429
      %v2437 = vadd.f32 %v2436, %v2430
      %v2438 = vadd.f32 %v2437, %v2431
      %v2439 = vadd.f32 %v2438, %v2432
      %v2440 = vrot.slane %v2439, 4
      %v2441 = vadd.f32 %v2439, %v2440
      %v2442 = vrot.slane %v2441, 2
      %v2443 = vadd.f32 %v2441, %v2442
      %v2444 = vrot.slane %v2443, 1
      %v2445 = vadd.f32 %v2443, %v2444
      %v2446 = vld [vmem:[%s640] sm:$0xf]
      %v2447 = vld [vmem:[%s640 + $0x4] sm:$0x1]
      %v2448 = vld [vmem:[%s640 + $0x8] sm:$0xf]
      %v2449 = vld [vmem:[%s640 + $0xc] sm:$0x1]
      %v2450 = vld [vmem:[%s640 + $0x10] sm:$0xf]
      %v2451 = vld [vmem:[%s640 + $0x14] sm:$0x1]
      %v2452 = vld [vmem:[%s640 + $0x18] sm:$0xf]
      %v2453 = vld [vmem:[%s640 + $0x1c] sm:$0x1]
      %v2454 = vld [vmem:[%s640 + $0x20] sm:$0xf]
      %v2455 = vld [vmem:[%s640 + $0x24] sm:$0x1]
      %v2456 = vld [vmem:[%s640 + $0x28] sm:$0xf]
      %v2457 = vld [vmem:[%s640 + $0x2c] sm:$0x1]
      %v2458 = vld [vmem:[%s640 + $0x30] sm:$0xf]
      %v2459 = vld [vmem:[%s640 + $0x34] sm:$0x1]
      %v2460 = vld [vmem:[%s640 + $0x38] sm:$0xf]
      %v2461 = vld [vmem:[%s640 + $0x3c] sm:$0x1]
      %v2463 = vshrl.u32 %v2446, 16
      %v2465 = vrot.slane %v2463, 4
      %v2466 = vshll.u32 %v2446, 16
      %v2468 = vrot.slane %v2466, 5
      %v2469 = vor.u32 %v2465, %v2468
      %v2470 = vrot.slane %v2469, 4
      %v2472 = vshll.u32 %v2447, 16
      %v2474 = vrot.slane %v2472, 5
      %v2475 = vsel %vm403, %v2470, %v2474
      %v2477 = vshrl.u32 %v2448, 16
      %v2479 = vrot.slane %v2477, 4
      %v2480 = vshll.u32 %v2448, 16
      %v2482 = vrot.slane %v2480, 5
      %v2483 = vor.u32 %v2479, %v2482
      %v2484 = vrot.slane %v2483, 4
      %v2486 = vshll.u32 %v2449, 16
      %v2488 = vrot.slane %v2486, 5
      %v2489 = vsel %vm403, %v2484, %v2488
      %v2491 = vshrl.u32 %v2450, 16
      %v2493 = vrot.slane %v2491, 4
      %v2494 = vshll.u32 %v2450, 16
      %v2496 = vrot.slane %v2494, 5
      %v2497 = vor.u32 %v2493, %v2496
      %v2498 = vrot.slane %v2497, 4
      %v2500 = vshll.u32 %v2451, 16
      %v2502 = vrot.slane %v2500, 5
      %v2503 = vsel %vm403, %v2498, %v2502
      %v2505 = vshrl.u32 %v2452, 16
      %v2507 = vrot.slane %v2505, 4
      %v2508 = vshll.u32 %v2452, 16
      %v2510 = vrot.slane %v2508, 5
      %v2511 = vor.u32 %v2507, %v2510
      %v2512 = vrot.slane %v2511, 4
      %v2514 = vshll.u32 %v2453, 16
      %v2516 = vrot.slane %v2514, 5
      %v2517 = vsel %vm403, %v2512, %v2516
      %v2519 = vshrl.u32 %v2454, 16
      %v2521 = vrot.slane %v2519, 4
      %v2522 = vshll.u32 %v2454, 16
      %v2524 = vrot.slane %v2522, 5
      %v2525 = vor.u32 %v2521, %v2524
      %v2526 = vrot.slane %v2525, 4
      %v2528 = vshll.u32 %v2455, 16
      %v2530 = vrot.slane %v2528, 5
      %v2531 = vsel %vm403, %v2526, %v2530
      %v2533 = vshrl.u32 %v2456, 16
      %v2535 = vrot.slane %v2533, 4
      %v2536 = vshll.u32 %v2456, 16
      %v2538 = vrot.slane %v2536, 5
      %v2539 = vor.u32 %v2535, %v2538
      %v2540 = vrot.slane %v2539, 4
      %v2542 = vshll.u32 %v2457, 16
      %v2544 = vrot.slane %v2542, 5
      %v2545 = vsel %vm403, %v2540, %v2544
      %v2547 = vshrl.u32 %v2458, 16
      %v2549 = vrot.slane %v2547, 4
      %v2550 = vshll.u32 %v2458, 16
      %v2552 = vrot.slane %v2550, 5
      %v2553 = vor.u32 %v2549, %v2552
      %v2554 = vrot.slane %v2553, 4
      %v2556 = vshll.u32 %v2459, 16
      %v2558 = vrot.slane %v2556, 5
      %v2559 = vsel %vm403, %v2554, %v2558
      %v2561 = vshrl.u32 %v2460, 16
      %v2563 = vrot.slane %v2561, 4
      %v2564 = vshll.u32 %v2460, 16
      %v2566 = vrot.slane %v2564, 5
      %v2567 = vor.u32 %v2563, %v2566
      %v2568 = vrot.slane %v2567, 4
      %v2570 = vshll.u32 %v2461, 16
      %v2572 = vrot.slane %v2570, 5
      %v2573 = vsel %vm403, %v2568, %v2572
      %s2574 = scalar_lea.vmem %s1, 48
      %v2575 = vld [vmem:[%s2574] sm:$0xf]
      %v2576 = vld [vmem:[%s640] sm:$0xe]
      %v2577 = vld [vmem:[%s640 + $0x8] sm:$0xe]
      %v2578 = vld [vmem:[%s640 + $0x10] sm:$0xe]
      %v2579 = vld [vmem:[%s640 + $0x18] sm:$0xe]
      %v2580 = vld [vmem:[%s640 + $0x20] sm:$0xe]
      %v2581 = vld [vmem:[%s640 + $0x28] sm:$0xe]
      %v2582 = vld [vmem:[%s640 + $0x30] sm:$0xe]
      %v2583 = vld [vmem:[%s640 + $0x38] sm:$0xe]
      %v2600 = vrot.slane %v2576, 5
      %v2601 = vrot.slane %v2600, 4
      %v2602 = vrot.slane %v2447, 5
      %v2603 = vsel %vm1222, %v2601, %v2602
      %v2604 = vrot.slane %v2577, 5
      %v2605 = vrot.slane %v2604, 4
      %v2606 = vrot.slane %v2449, 5
      %v2607 = vsel %vm1222, %v2605, %v2606
      %v2608 = vrot.slane %v2578, 5
      %v2609 = vrot.slane %v2608, 4
      %v2610 = vrot.slane %v2451, 5
      %v2611 = vsel %vm1222, %v2609, %v2610
      %v2612 = vrot.slane %v2579, 5
      %v2613 = vrot.slane %v2612, 4
      %v2614 = vrot.slane %v2453, 5
      %v2615 = vsel %vm1222, %v2613, %v2614
      %v2616 = vrot.slane %v2580, 5
      %v2617 = vrot.slane %v2616, 4
      %v2618 = vrot.slane %v2455, 5
      %v2619 = vsel %vm1222, %v2617, %v2618
      %v2620 = vrot.slane %v2581, 5
      %v2621 = vrot.slane %v2620, 4
      %v2622 = vrot.slane %v2457, 5
      %v2623 = vsel %vm1222, %v2621, %v2622
      %v2624 = vrot.slane %v2582, 5
      %v2625 = vrot.slane %v2624, 4
      %v2626 = vrot.slane %v2459, 5
      %v2627 = vsel %vm1222, %v2625, %v2626
      %v2628 = vrot.slane %v2583, 5
      %v2629 = vrot.slane %v2628, 4
      %v2630 = vrot.slane %v2461, 5
      %v2631 = vsel %vm1222, %v2629, %v2630
      %s2632 = scalar_lea.vmem %s1, 52
      %v2633 = vld [vmem:[%s2632] sm:$0xf]
      %v2634 = vunpack.c.l.b16 %v2603
      %v2635 = vunpack.c.l.b16 %v2607
      %v2636 = vunpack.c.l.b16 %v2611
      %v2637 = vunpack.c.l.b16 %v2615
      %v2638 = vunpack.c.l.b16 %v2619
      %v2639 = vunpack.c.l.b16 %v2623
      %v2640 = vunpack.c.l.b16 %v2627
      %v2641 = vunpack.c.l.b16 %v2631
      %v2642 = vpack.c.b16 %v2635, %v2634
      %v2643 = vpack.c.b16 %v2637, %v2636
      %v2644 = vpack.c.b16 %v2639, %v2638
      %v2645 = vpack.c.b16 %v2641, %v2640
      %v2647 = vsel %vm530, %v2642, 0
      %v2650 = vsel %vm530, %v2643, 0
      %v2653 = vsel %vm530, %v2644, 0
      %v2656 = vsel %vm530, %v2645, 0
      %v2659 = vsel %vm543, %v2633, 0
      %2661 = vmatpush.bf16.msra.mxu0 0
      %2662 = vmatpush.bf16.msra.mxu0 0
      %2663 = vmatpush.bf16.msra.mxu0 0
      %2664 = vmatpush.bf16.msra.mxu0 0
      %2665 = vmatpush.bf16.msra.mxu0 0
      %2666 = vmatpush.bf16.msra.mxu0 0
      %2667 = vmatpush.bf16.msra.mxu0 0
      %2668 = vmatpush.bf16.msra.mxu0 %v2659
      %2669 = vmatmul.bf16.gmra.mxu0 %v2647
      %v2670 = vpop.f32.mrf.mxu0
      %v2671 = vadd.f32 0.0, %v2670
      %v2672 = vpop.f32.mrf.mxu0
      %v2673 = vadd.f32 0.0, %v2672
      %2674 = vmatmul.bf16.gmra.mxu0 %v2650
      %v2675 = vpop.f32.mrf.mxu0
      %v2676 = vadd.f32 0.0, %v2675
      %v2677 = vpop.f32.mrf.mxu0
      %v2678 = vadd.f32 0.0, %v2677
      %2679 = vmatmul.bf16.gmra.mxu0 %v2653
      %v2680 = vpop.f32.mrf.mxu0
      %v2681 = vadd.f32 0.0, %v2680
      %v2682 = vpop.f32.mrf.mxu0
      %v2683 = vadd.f32 0.0, %v2682
      %2684 = vmatmul.bf16.gmra.mxu0 %v2656
      %v2685 = vpop.f32.mrf.mxu0
      %v2686 = vadd.f32 0.0, %v2685
      %v2687 = vpop.f32.mrf.mxu0
      %v2688 = vadd.f32 0.0, %v2687
      %2689 = vdwg.mxu0
      %v2690 = vunpack.c.l.b16 %v2475
      %v2691 = vunpack.c.l.b16 %v2489
      %v2692 = vunpack.c.l.b16 %v2503
      %v2693 = vunpack.c.l.b16 %v2517
      %v2694 = vunpack.c.l.b16 %v2531
      %v2695 = vunpack.c.l.b16 %v2545
      %v2696 = vunpack.c.l.b16 %v2559
      %v2697 = vunpack.c.l.b16 %v2573
      %v2698 = vpack.c.b16 %v2691, %v2690
      %v2699 = vpack.c.b16 %v2693, %v2692
      %v2700 = vpack.c.b16 %v2695, %v2694
      %v2701 = vpack.c.b16 %v2697, %v2696
      %v2703 = vsel %vm530, %v2698, 0
      %v2706 = vsel %vm530, %v2699, 0
      %v2709 = vsel %vm530, %v2700, 0
      %v2712 = vsel %vm530, %v2701, 0
      %v2715 = vsel %vm543, %v2575, 0
      %2717 = vmatpush.bf16.msra.mxu0 0
      %2718 = vmatpush.bf16.msra.mxu0 0
      %2719 = vmatpush.bf16.msra.mxu0 0
      %2720 = vmatpush.bf16.msra.mxu0 0
      %2721 = vmatpush.bf16.msra.mxu0 0
      %2722 = vmatpush.bf16.msra.mxu0 0
      %2723 = vmatpush.bf16.msra.mxu0 0
      %2724 = vmatpush.bf16.msra.mxu0 %v2715
      %2725 = vmatmul.bf16.gmra.mxu0 %v2703
      %v2726 = vpop.f32.mrf.mxu0
      %v2727 = vadd.f32 %v2671, %v2726
      %v2728 = vpop.f32.mrf.mxu0
      %v2729 = vadd.f32 %v2673, %v2728
      %2730 = vmatmul.bf16.gmra.mxu0 %v2706
      %v2731 = vpop.f32.mrf.mxu0
      %v2732 = vadd.f32 %v2676, %v2731
      %v2733 = vpop.f32.mrf.mxu0
      %v2734 = vadd.f32 %v2678, %v2733
      %2735 = vmatmul.bf16.gmra.mxu0 %v2709
      %v2736 = vpop.f32.mrf.mxu0
      %v2737 = vadd.f32 %v2681, %v2736
      %v2738 = vpop.f32.mrf.mxu0
      %v2739 = vadd.f32 %v2683, %v2738
      %2740 = vmatmul.bf16.gmra.mxu0 %v2712
      %v2741 = vpop.f32.mrf.mxu0
      %v2742 = vadd.f32 %v2686, %v2741
      %v2743 = vpop.f32.mrf.mxu0
      %v2744 = vadd.f32 %v2688, %v2743
      %2745 = vdwg.mxu0
      %v2746 = vld [vmem:[%s2052] sm:$0xf]
      %v2747 = vld [vmem:[%s2052 + $0x4] sm:$0x1]
      %v2748 = vld [vmem:[%s2052 + $0x8] sm:$0xf]
      %v2749 = vld [vmem:[%s2052 + $0xc] sm:$0x1]
      %v2750 = vld [vmem:[%s2052 + $0x10] sm:$0xf]
      %v2751 = vld [vmem:[%s2052 + $0x14] sm:$0x1]
      %v2752 = vld [vmem:[%s2052 + $0x18] sm:$0xf]
      %v2753 = vld [vmem:[%s2052 + $0x1c] sm:$0x1]
      %v2754 = vld [vmem:[%s2052 + $0x20] sm:$0xf]
      %v2755 = vld [vmem:[%s2052 + $0x24] sm:$0x1]
      %v2756 = vld [vmem:[%s2052 + $0x28] sm:$0xf]
      %v2757 = vld [vmem:[%s2052 + $0x2c] sm:$0x1]
      %v2758 = vld [vmem:[%s2052 + $0x30] sm:$0xf]
      %v2759 = vld [vmem:[%s2052 + $0x34] sm:$0x1]
      %v2760 = vld [vmem:[%s2052 + $0x38] sm:$0xf]
      %v2761 = vld [vmem:[%s2052 + $0x3c] sm:$0x1]
      %v2763 = vshrl.u32 %v2746, 16
      %v2765 = vrot.slane %v2763, 4
      %v2766 = vshll.u32 %v2746, 16
      %v2768 = vrot.slane %v2766, 5
      %v2769 = vor.u32 %v2765, %v2768
      %v2770 = vrot.slane %v2769, 4
      %v2772 = vshll.u32 %v2747, 16
      %v2774 = vrot.slane %v2772, 5
      %v2775 = vsel %vm403, %v2770, %v2774
      %v2777 = vshrl.u32 %v2748, 16
      %v2779 = vrot.slane %v2777, 4
      %v2780 = vshll.u32 %v2748, 16
      %v2782 = vrot.slane %v2780, 5
      %v2783 = vor.u32 %v2779, %v2782
      %v2784 = vrot.slane %v2783, 4
      %v2786 = vshll.u32 %v2749, 16
      %v2788 = vrot.slane %v2786, 5
      %v2789 = vsel %vm403, %v2784, %v2788
      %v2791 = vshrl.u32 %v2750, 16
      %v2793 = vrot.slane %v2791, 4
      %v2794 = vshll.u32 %v2750, 16
      %v2796 = vrot.slane %v2794, 5
      %v2797 = vor.u32 %v2793, %v2796
      %v2798 = vrot.slane %v2797, 4
      %v2800 = vshll.u32 %v2751, 16
      %v2802 = vrot.slane %v2800, 5
      %v2803 = vsel %vm403, %v2798, %v2802
      %v2805 = vshrl.u32 %v2752, 16
      %v2807 = vrot.slane %v2805, 4
      %v2808 = vshll.u32 %v2752, 16
      %v2810 = vrot.slane %v2808, 5
      %v2811 = vor.u32 %v2807, %v2810
      %v2812 = vrot.slane %v2811, 4
      %v2814 = vshll.u32 %v2753, 16
      %v2816 = vrot.slane %v2814, 5
      %v2817 = vsel %vm403, %v2812, %v2816
      %v2819 = vshrl.u32 %v2754, 16
      %v2821 = vrot.slane %v2819, 4
      %v2822 = vshll.u32 %v2754, 16
      %v2824 = vrot.slane %v2822, 5
      %v2825 = vor.u32 %v2821, %v2824
      %v2826 = vrot.slane %v2825, 4
      %v2828 = vshll.u32 %v2755, 16
      %v2830 = vrot.slane %v2828, 5
      %v2831 = vsel %vm403, %v2826, %v2830
      %v2833 = vshrl.u32 %v2756, 16
      %v2835 = vrot.slane %v2833, 4
      %v2836 = vshll.u32 %v2756, 16
      %v2838 = vrot.slane %v2836, 5
      %v2839 = vor.u32 %v2835, %v2838
      %v2840 = vrot.slane %v2839, 4
      %v2842 = vshll.u32 %v2757, 16
      %v2844 = vrot.slane %v2842, 5
      %v2845 = vsel %vm403, %v2840, %v2844
      %v2847 = vshrl.u32 %v2758, 16
      %v2849 = vrot.slane %v2847, 4
      %v2850 = vshll.u32 %v2758, 16
      %v2852 = vrot.slane %v2850, 5
      %v2853 = vor.u32 %v2849, %v2852
      %v2854 = vrot.slane %v2853, 4
      %v2856 = vshll.u32 %v2759, 16
      %v2858 = vrot.slane %v2856, 5
      %v2859 = vsel %vm403, %v2854, %v2858
      %v2861 = vshrl.u32 %v2760, 16
      %v2863 = vrot.slane %v2861, 4
      %v2864 = vshll.u32 %v2760, 16
      %v2866 = vrot.slane %v2864, 5
      %v2867 = vor.u32 %v2863, %v2866
      %v2868 = vrot.slane %v2867, 4
      %v2870 = vshll.u32 %v2761, 16
      %v2872 = vrot.slane %v2870, 5
      %v2873 = vsel %vm403, %v2868, %v2872
      %s2874 = scalar_lea.vmem %s1, 56
      %v2875 = vld [vmem:[%s2874] sm:$0xf]
      %v2876 = vunpack.c.l.b16 %v2775
      %v2877 = vunpack.c.l.b16 %v2789
      %v2878 = vunpack.c.l.b16 %v2803
      %v2879 = vunpack.c.l.b16 %v2817
      %v2880 = vunpack.c.l.b16 %v2831
      %v2881 = vunpack.c.l.b16 %v2845
      %v2882 = vunpack.c.l.b16 %v2859
      %v2883 = vunpack.c.l.b16 %v2873
      %v2884 = vpack.c.b16 %v2877, %v2876
      %v2885 = vpack.c.b16 %v2879, %v2878
      %v2886 = vpack.c.b16 %v2881, %v2880
      %v2887 = vpack.c.b16 %v2883, %v2882
      %v2889 = vsel %vm530, %v2884, 0
      %v2892 = vsel %vm530, %v2885, 0
      %v2895 = vsel %vm530, %v2886, 0
      %v2898 = vsel %vm530, %v2887, 0
      %v2901 = vsel %vm543, %v2875, 0
      %2903 = vmatpush.bf16.msra.mxu0 0
      %2904 = vmatpush.bf16.msra.mxu0 0
      %2905 = vmatpush.bf16.msra.mxu0 0
      %2906 = vmatpush.bf16.msra.mxu0 0
      %2907 = vmatpush.bf16.msra.mxu0 0
      %2908 = vmatpush.bf16.msra.mxu0 0
      %2909 = vmatpush.bf16.msra.mxu0 0
      %2910 = vmatpush.bf16.msra.mxu0 %v2901
      %2911 = vmatmul.bf16.gmra.mxu0 %v2889
      %v2912 = vpop.f32.mrf.mxu0
      %v2913 = vadd.f32 0.0, %v2912
      %v2914 = vpop.f32.mrf.mxu0
      %v2915 = vadd.f32 0.0, %v2914
      %2916 = vmatmul.bf16.gmra.mxu0 %v2892
      %v2917 = vpop.f32.mrf.mxu0
      %v2918 = vadd.f32 0.0, %v2917
      %v2919 = vpop.f32.mrf.mxu0
      %v2920 = vadd.f32 0.0, %v2919
      %2921 = vmatmul.bf16.gmra.mxu0 %v2895
      %v2922 = vpop.f32.mrf.mxu0
      %v2923 = vadd.f32 0.0, %v2922
      %v2924 = vpop.f32.mrf.mxu0
      %v2925 = vadd.f32 0.0, %v2924
      %2926 = vmatmul.bf16.gmra.mxu0 %v2898
      %v2927 = vpop.f32.mrf.mxu0
      %v2928 = vadd.f32 0.0, %v2927
      %v2929 = vpop.f32.mrf.mxu0
      %v2930 = vadd.f32 0.0, %v2929
      %2931 = vdwg.mxu0
      %v2932 = vadd.f32 %v2727, %v2913
      %v2933 = vadd.f32 %v2729, %v2915
      %v2934 = vadd.f32 %v2732, %v2918
      %v2935 = vadd.f32 %v2734, %v2920
      %v2936 = vadd.f32 %v2737, %v2923
      %v2937 = vadd.f32 %v2739, %v2925
      %v2938 = vadd.f32 %v2742, %v2928
      %v2939 = vadd.f32 %v2744, %v2930
      %v2940 = vld [vmem:[%s2052] sm:$0xe]
      %v2941 = vld [vmem:[%s2052 + $0x8] sm:$0xe]
      %v2942 = vld [vmem:[%s2052 + $0x10] sm:$0xe]
      %v2943 = vld [vmem:[%s2052 + $0x18] sm:$0xe]
      %v2944 = vld [vmem:[%s2052 + $0x20] sm:$0xe]
      %v2945 = vld [vmem:[%s2052 + $0x28] sm:$0xe]
      %v2946 = vld [vmem:[%s2052 + $0x30] sm:$0xe]
      %v2947 = vld [vmem:[%s2052 + $0x38] sm:$0xe]
      %v2964 = vrot.slane %v2940, 5
      %v2965 = vrot.slane %v2964, 4
      %v2966 = vrot.slane %v2747, 5
      %v2967 = vsel %vm1222, %v2965, %v2966
      %v2968 = vrot.slane %v2941, 5
      %v2969 = vrot.slane %v2968, 4
      %v2970 = vrot.slane %v2749, 5
      %v2971 = vsel %vm1222, %v2969, %v2970
      %v2972 = vrot.slane %v2942, 5
      %v2973 = vrot.slane %v2972, 4
      %v2974 = vrot.slane %v2751, 5
      %v2975 = vsel %vm1222, %v2973, %v2974
      %v2976 = vrot.slane %v2943, 5
      %v2977 = vrot.slane %v2976, 4
      %v2978 = vrot.slane %v2753, 5
      %v2979 = vsel %vm1222, %v2977, %v2978
      %v2980 = vrot.slane %v2944, 5
      %v2981 = vrot.slane %v2980, 4
      %v2982 = vrot.slane %v2755, 5
      %v2983 = vsel %vm1222, %v2981, %v2982
      %v2984 = vrot.slane %v2945, 5
      %v2985 = vrot.slane %v2984, 4
      %v2986 = vrot.slane %v2757, 5
      %v2987 = vsel %vm1222, %v2985, %v2986
      %v2988 = vrot.slane %v2946, 5
      %v2989 = vrot.slane %v2988, 4
      %v2990 = vrot.slane %v2759, 5
      %v2991 = vsel %vm1222, %v2989, %v2990
      %v2992 = vrot.slane %v2947, 5
      %v2993 = vrot.slane %v2992, 4
      %v2994 = vrot.slane %v2761, 5
      %v2995 = vsel %vm1222, %v2993, %v2994
      %s2996 = scalar_lea.vmem %s1, 60
      %v2997 = vld [vmem:[%s2996] sm:$0xf]
      %v2998 = vunpack.c.l.b16 %v2967
      %v2999 = vunpack.c.l.b16 %v2971
      %v3000 = vunpack.c.l.b16 %v2975
      %v3001 = vunpack.c.l.b16 %v2979
      %v3002 = vunpack.c.l.b16 %v2983
      %v3003 = vunpack.c.l.b16 %v2987
      %v3004 = vunpack.c.l.b16 %v2991
      %v3005 = vunpack.c.l.b16 %v2995
      %v3006 = vpack.c.b16 %v2999, %v2998
      %v3007 = vpack.c.b16 %v3001, %v3000
      %v3008 = vpack.c.b16 %v3003, %v3002
      %v3009 = vpack.c.b16 %v3005, %v3004
      %v3011 = vsel %vm530, %v3006, 0
      %v3014 = vsel %vm530, %v3007, 0
      %v3017 = vsel %vm530, %v3008, 0
      %v3020 = vsel %vm530, %v3009, 0
      %v3023 = vsel %vm543, %v2997, 0
      %3025 = vmatpush.bf16.msra.mxu0 0
      %3026 = vmatpush.bf16.msra.mxu0 0
      %3027 = vmatpush.bf16.msra.mxu0 0
      %3028 = vmatpush.bf16.msra.mxu0 0
      %3029 = vmatpush.bf16.msra.mxu0 0
      %3030 = vmatpush.bf16.msra.mxu0 0
      %3031 = vmatpush.bf16.msra.mxu0 0
      %3032 = vmatpush.bf16.msra.mxu0 %v3023
      %3033 = vmatmul.bf16.gmra.mxu0 %v3011
      %v3034 = vpop.f32.mrf.mxu0
      %v3035 = vadd.f32 0.0, %v3034
      %v3036 = vpop.f32.mrf.mxu0
      %v3037 = vadd.f32 0.0, %v3036
      %3038 = vmatmul.bf16.gmra.mxu0 %v3014
      %v3039 = vpop.f32.mrf.mxu0
      %v3040 = vadd.f32 0.0, %v3039
      %v3041 = vpop.f32.mrf.mxu0
      %v3042 = vadd.f32 0.0, %v3041
      %3043 = vmatmul.bf16.gmra.mxu0 %v3017
      %v3044 = vpop.f32.mrf.mxu0
      %v3045 = vadd.f32 0.0, %v3044
      %v3046 = vpop.f32.mrf.mxu0
      %v3047 = vadd.f32 0.0, %v3046
      %3048 = vmatmul.bf16.gmra.mxu0 %v3020
      %v3049 = vpop.f32.mrf.mxu0
      %v3050 = vadd.f32 0.0, %v3049
      %v3051 = vpop.f32.mrf.mxu0
      %v3052 = vadd.f32 0.0, %v3051
      %3053 = vdwg.mxu0
      %v3054 = vadd.f32 %v2932, %v3035
      %v3055 = vadd.f32 %v2933, %v3037
      %v3056 = vadd.f32 %v2934, %v3040
      %v3057 = vadd.f32 %v2935, %v3042
      %v3058 = vadd.f32 %v2936, %v3045
      %v3059 = vadd.f32 %v2937, %v3047
      %v3060 = vadd.f32 %v2938, %v3050
      %v3061 = vadd.f32 %v2939, %v3052
      %v3062 = vld [vmem:[%s2329 + $0x4] sm:$0xf]
      %v3063 = vld [vmem:[%s2329 + $0x14] sm:$0xf]
      %v3064 = vld [vmem:[%s2329 + $0x24] sm:$0xf]
      %v3065 = vld [vmem:[%s2329 + $0x34] sm:$0xf]
      %v3066 = vld [vmem:[%s2329 + $0x44] sm:$0xf]
      %v3067 = vld [vmem:[%s2329 + $0x54] sm:$0xf]
      %v3068 = vld [vmem:[%s2329 + $0x64] sm:$0xf]
      %v3069 = vld [vmem:[%s2329 + $0x74] sm:$0xf]
      %v3070 = vunpack.c.l.bf16 %v3062
      %v3071 = vunpack.c.l.bf16 %v3063
      %v3072 = vunpack.c.l.bf16 %v3064
      %v3073 = vunpack.c.l.bf16 %v3065
      %v3074 = vunpack.c.l.bf16 %v3066
      %v3075 = vunpack.c.l.bf16 %v3067
      %v3076 = vunpack.c.l.bf16 %v3068
      %v3077 = vunpack.c.l.bf16 %v3069
      %v3078 = vadd.f32 %v3054, %v934
      %v3079 = vadd.f32 %v3055, %v934
      %v3080 = vadd.f32 %v3056, %v934
      %v3081 = vadd.f32 %v3057, %v934
      %v3082 = vadd.f32 %v3058, %v934
      %v3083 = vadd.f32 %v3059, %v934
      %v3084 = vadd.f32 %v3060, %v934
      %v3085 = vadd.f32 %v3061, %v934
      %v3086 = vadd.f32 %v3078, %v3070
      %v3087 = vadd.f32 %v3079, %v3071
      %v3088 = vadd.f32 %v3080, %v3072
      %v3089 = vadd.f32 %v3081, %v3073
      %v3090 = vadd.f32 %v3082, %v3074
      %v3091 = vadd.f32 %v3083, %v3075
      %v3092 = vadd.f32 %v3084, %v3076
      %v3093 = vadd.f32 %v3085, %v3077
      %v3094 = vmax.f32 %v3086, 0.0
      %v3095 = vmax.f32 %v3087, 0.0
      %v3096 = vmax.f32 %v3088, 0.0
      %v3097 = vmax.f32 %v3089, 0.0
      %v3098 = vmax.f32 %v3090, 0.0
      %v3099 = vmax.f32 %v3091, 0.0
      %v3100 = vmax.f32 %v3092, 0.0
      %v3101 = vmax.f32 %v3093, 0.0
      %v3102 = vpack.c.bf16 %v3094, %v3094
      %v3103 = vpack.c.bf16 %v3095, %v3095
      %v3104 = vpack.c.bf16 %v3096, %v3096
      %v3105 = vpack.c.bf16 %v3097, %v3097
      %v3106 = vpack.c.bf16 %v3098, %v3098
      %v3107 = vpack.c.bf16 %v3099, %v3099
      %v3108 = vpack.c.bf16 %v3100, %v3100
      %v3109 = vpack.c.bf16 %v3101, %v3101
      %3110 = vst [vmem:[%s2378 + $0x4] sm:$0xf] %v3102
      %3111 = vst [vmem:[%s2378 + $0x14] sm:$0xf] %v3103
      %3112 = vst [vmem:[%s2378 + $0x24] sm:$0xf] %v3104
      %3113 = vst [vmem:[%s2378 + $0x34] sm:$0xf] %v3105
      %3114 = vst [vmem:[%s2378 + $0x44] sm:$0xf] %v3106
      %3115 = vst [vmem:[%s2378 + $0x54] sm:$0xf] %v3107
      %3116 = vst [vmem:[%s2378 + $0x64] sm:$0xf] %v3108
      %3117 = vst [vmem:[%s2378 + $0x74] sm:$0xf] %v3109
      %v3118 = vsel %vm984, %v3094, 0.0
      %v3119 = vsel %vm985, %v3095, 0.0
      %v3120 = vsel %vm986, %v3096, 0.0
      %v3121 = vsel %vm987, %v3097, 0.0
      %v3122 = vsel %vm988, %v3098, 0.0
      %v3123 = vsel %vm989, %v3099, 0.0
      %v3124 = vsel %vm990, %v3100, 0.0
      %v3125 = vsel %vm991, %v3101, 0.0
      %v3126 = vadd.f32 %v3118, %v3119
      %v3127 = vadd.f32 %v3126, %v3120
      %v3128 = vadd.f32 %v3127, %v3121
      %v3129 = vadd.f32 %v3128, %v3122
      %v3130 = vadd.f32 %v3129, %v3123
      %v3131 = vadd.f32 %v3130, %v3124
      %v3132 = vadd.f32 %v3131, %v3125
      %v3133 = vrot.slane %v3132, 4
      %v3134 = vadd.f32 %v3132, %v3133
      %v3135 = vrot.slane %v3134, 2
      %v3136 = vadd.f32 %v3134, %v3135
      %v3137 = vrot.slane %v3136, 1
      %v3138 = vadd.f32 %v3136, %v3137
      %v3139 = vmul.f32 %v3138, %v1027
      %v3140 = vsub.f32 %v3094, %v3139
      %v3141 = vsub.f32 %v3095, %v3139
      %v3142 = vsub.f32 %v3096, %v3139
      %v3143 = vsub.f32 %v3097, %v3139
      %v3144 = vsub.f32 %v3098, %v3139
      %v3145 = vsub.f32 %v3099, %v3139
      %v3146 = vsub.f32 %v3100, %v3139
      %v3147 = vsub.f32 %v3101, %v3139
      %v3148 = vsel %vm984, %v3140, 0.0
      %v3149 = vsel %vm985, %v3141, 0.0
      %v3150 = vsel %vm986, %v3142, 0.0
      %v3151 = vsel %vm987, %v3143, 0.0
      %v3152 = vsel %vm988, %v3144, 0.0
      %v3153 = vsel %vm989, %v3145, 0.0
      %v3154 = vsel %vm990, %v3146, 0.0
      %v3155 = vsel %vm991, %v3147, 0.0
      %v3156 = vmul.f32 %v3148, %v3148
      %v3157 = vmul.f32 %v3149, %v3149
      %v3158 = vmul.f32 %v3150, %v3150
      %v3159 = vmul.f32 %v3151, %v3151
      %v3160 = vmul.f32 %v3152, %v3152
      %v3161 = vmul.f32 %v3153, %v3153
      %v3162 = vmul.f32 %v3154, %v3154
      %v3163 = vmul.f32 %v3155, %v3155
      %v3164 = vadd.f32 %v3156, %v3157
      %v3165 = vadd.f32 %v3164, %v3158
      %v3166 = vadd.f32 %v3165, %v3159
      %v3167 = vadd.f32 %v3166, %v3160
      %v3168 = vadd.f32 %v3167, %v3161
      %v3169 = vadd.f32 %v3168, %v3162
      %v3170 = vadd.f32 %v3169, %v3163
      %v3171 = vrot.slane %v3170, 4
      %v3172 = vadd.f32 %v3170, %v3171
      %v3173 = vrot.slane %v3172, 2
      %v3174 = vadd.f32 %v3172, %v3173
      %v3175 = vrot.slane %v3174, 1
      %v3176 = vadd.f32 %v3174, %v3175
      %vm3177 = vcmask 1040384
      %v3178 = vsel %vm3177, %v1012, %v1761
      %vm3179 = vcmask 1041408
      %v3180 = vsel %vm3179, %v3178, %v2407
      %vm3181 = vcmask 1042432
      %v3182 = vsel %vm3181, %v3180, %v3138
      %3183 = vst [vmem:[%s359] sm:$0xf] %v3182
      %v3184 = vsel %vm3177, %v1065, %v1799
      %v3185 = vsel %vm3179, %v3184, %v2445
      %v3186 = vsel %vm3181, %v3185, %v3176
      %3187 = vst [vmem:[%s366] sm:$0xf] %v3186
      %s3188 = smul.u32 8, %s23
      %p3189 = scmp.lt.s32.totalorder %s22, 1
      %s3190 = scalar_select %p3189, %s22, 1
      %p3191 = scmp.lt.s32.totalorder %s3188, 7
      %s3192 = scalar_select %p3191, %s3188, 7
      %s3193 = smul.addr %s3192, 4
      %s3194 = smul.addr %s3190, 32
      %s3195 = sadd.s32 %s3193, %s3194
      %s3196 = smul.addr %s3195, 4
      %s3197 = scalar_lea.vmem %s4, %s3196
      %p3198 = scmp.lt.s32.totalorder %s22, 1
      %s3199 = scalar_select %p3198, %s22, 1
      %p3200 = scmp.lt.s32.totalorder %s23, 0
      %s3201 = scalar_select %p3200, %s23, 0
      %s3202 = sadd.s32 %s3201, %s3199
      %s3203 = smul.addr %s3202, 4
      %s3204 = scalar_lea.vmem %s5, %s3203
      %p3205 = scmp.lt.s32.totalorder %s22, 1
      %s3206 = scalar_select %p3205, %s22, 1
      %p3207 = scmp.lt.s32.totalorder %s23, 0
      %s3208 = scalar_select %p3207, %s23, 0
      %s3209 = sadd.s32 %s3208, %s3206
      %s3210 = smul.addr %s3209, 4
      %s3211 = scalar_lea.vmem %s6, %s3210
      // Predicated region
      $region37: #{decoder_block_forward.2} parent=35 // pred_check
        %p3212 = pneg %p148
      $region38: #{decoder_block_forward.2} parent=35 // pred_check_branch
        %3214 = sbr.rel (%p3212) target = $region40
      $region39: #{decoder_block_forward.2} parent=35 // pred_region
        %s3215 = smul.u32 8, %s23
      $region40: #{decoder_block_forward.2} parent=35 // pred_fallthru
        _
      // Predicated region
      $region41: #{decoder_block_forward.2} parent=35 // pred_check
        %p3216 = pneg %p176
      $region42: #{decoder_block_forward.2} parent=35 // pred_check_branch
        %3218 = sbr.rel (%p3216) target = $region44
      $region43: #{decoder_block_forward.2} parent=35 // pred_region
        _
      $region44: #{decoder_block_forward.2} parent=35 // pred_fallthru
        _
      // Predicated region
      $region45: #{decoder_block_forward.2} parent=35 // pred_check
        %p3219 = pneg %p204
      $region46: #{decoder_block_forward.2} parent=35 // pred_check_branch
        %3221 = sbr.rel (%p3219) target = $region48
      $region47: #{decoder_block_forward.2} parent=35 // pred_region
        _
      $region48: #{decoder_block_forward.2} parent=35 // pred_fallthru
        _
    $region36: #{decoder_block_forward.2} parent=5 // pred_fallthru
      _
    %p3222 = scmp.le.s32.totalorder 2, %s13
    // Predicated region
    $region49: #{decoder_block_forward.2} parent=5 // pred_check
      %p3223 = pneg %p3222
    $region50: #{decoder_block_forward.2} parent=5 // pred_check_branch
      %3225 = sbr.rel (%p3223) target = $region52
    $region51: #{decoder_block_forward.2} parent=5 // pred_region
      %s3226 = ssub.s32 %s13, 2
      // Predicated region
      $region53: #{decoder_block_forward.2} parent=51 // pred_check
        %p3227 = pneg %p154
      $region54: #{decoder_block_forward.2} parent=51 // pred_check_branch
        %3229 = sbr.rel (%p3227) target = $region56
      $region55: #{decoder_block_forward.2} parent=51 // pred_region
        %s3230 = smul.u32 8, %s25
        %p3231 = scmp.lt.s32.totalorder %s24, 1
        %s3232 = scalar_select %p3231, %s24, 1
        %p3233 = scmp.lt.s32.totalorder %s3230, 7
        %s3234 = scalar_select %p3233, %s3230, 7
        %s3235 = smul.addr %s3234, 4
        %s3236 = smul.addr %s3232, 32
        %s3237 = sadd.s32 %s3235, %s3236
        %s3238 = smul.addr %s3237, 4
        %s3239 = scalar_lea.vmem %s4, %s3238
      $region56: #{decoder_block_forward.2} parent=51 // pred_fallthru
        _
      // Predicated region
      $region57: #{decoder_block_forward.2} parent=51 // pred_check
        %p3240 = pneg %p182
      $region58: #{decoder_block_forward.2} parent=51 // pred_check_branch
        %3242 = sbr.rel (%p3240) target = $region60
      $region59: #{decoder_block_forward.2} parent=51 // pred_region
        %p3243 = scmp.lt.s32.totalorder %s24, 1
        %s3244 = scalar_select %p3243, %s24, 1
        %p3245 = scmp.lt.s32.totalorder %s25, 0
        %s3246 = scalar_select %p3245, %s25, 0
        %s3247 = sadd.s32 %s3246, %s3244
        %s3248 = smul.addr %s3247, 4
        %s3249 = scalar_lea.vmem %s5, %s3248
      $region60: #{decoder_block_forward.2} parent=51 // pred_fallthru
        _
      // Predicated region
      $region61: #{decoder_block_forward.2} parent=51 // pred_check
        %p3250 = pneg %p210
      $region62: #{decoder_block_forward.2} parent=51 // pred_check_branch
        %3252 = sbr.rel (%p3250) target = $region64
      $region63: #{decoder_block_forward.2} parent=51 // pred_region
        %p3253 = scmp.lt.s32.totalorder %s24, 1
        %s3254 = scalar_select %p3253, %s24, 1
        %p3255 = scmp.lt.s32.totalorder %s25, 0
        %s3256 = scalar_select %p3255, %s25, 0
        %s3257 = sadd.s32 %s3256, %s3254
        %s3258 = smul.addr %s3257, 4
        %s3259 = scalar_lea.vmem %s6, %s3258
      $region64: #{decoder_block_forward.2} parent=51 // pred_fallthru
        _
    $region52: #{decoder_block_forward.2} parent=5 // pred_fallthru
      _
  $region6: #{decoder_block_forward.2} parent=0 // loop_footer
    %s17 = sadd.s32 1, %s13
  $region7: #{decoder_block_forward.2} parent=0 // loop_footer_branch
    %12 = sbr.rel target = $region3
  $region8: #{decoder_block_forward.2} parent=0 // loop_exit
    _

</llo_original>
